<compile_context>
chip_gen: v5e
topology: v5e:2x2
jax: 0.10.0
libtpu: 0.0.40
codegen_flags: <defaults>
</compile_context>

<pallas_src>
import math

import jax
import jax.numpy as jnp
from jax.experimental import pallas as pl
from jax.experimental.pallas import tpu as pltpu

# ----------------------- scaled-down "roberta" config -----------------------
VOCAB = 64       # vocab size (synthetic)
B = 2            # batch
S = 8            # sequence length
BS = B * S       # flattened rows
H = 128          # hidden size
NH = 4           # attention heads
DH = H // NH     # head dim
FF = 256         # intermediate (FFN) size
LAYERS = 2       # encoder layers
LN_EPS = 1e-5
NEG_INF = -1e9


# ------------------------------ in-kernel helpers ----------------------------
def _layer_norm(x, gamma, beta):
    # x: (BS, H), gamma/beta: (1, H)
    mu = jnp.mean(x, axis=-1, keepdims=True)
    var = jnp.mean((x - mu) * (x - mu), axis=-1, keepdims=True)
    return (x - mu) * jax.lax.rsqrt(var + LN_EPS) * gamma + beta


def _gelu(x):
    # tanh-approx GELU (HF RoBERTa uses exact erf GELU; tiny numeric drift).
    c = math.sqrt(2.0 / math.pi)
    return 0.5 * x * (1.0 + jnp.tanh(c * (x + 0.044715 * x * x * x)))


# ------------------------------ fused Pallas kernel ---------------------------
def fused_bert_kernel(
    x_ref, bias_ref, eg_ref, eb_ref,
    wq_ref, bq_ref, wk_ref, bk_ref, wv_ref, bv_ref,
    wo_ref, bo_ref, g1_ref, be1_ref,
    w1_ref, b1_ref, w2_ref, b2_ref, g2_ref, be2_ref,
    rw_ref, rb_ref,
    o_ref,
    qh_s, kh_s, vh_s,
):
    scale = 1.0 / math.sqrt(DH)
    bias = bias_ref[...]                                   # (NH, BS, BS), hoisted once

    # embedding LayerNorm
    x = _layer_norm(x_ref[...], eg_ref[...], eb_ref[...])  # (BS, H)

    for l in range(LAYERS):    # static unroll: 2 tiny layers, all VMEM-resident
        q = jnp.dot(x, wq_ref[l], preferred_element_type=jnp.float32) + bq_ref[l]
        k = jnp.dot(x, wk_ref[l], preferred_element_type=jnp.float32) + bk_ref[l]
        v = jnp.dot(x, wv_ref[l], preferred_element_type=jnp.float32) + bv_ref[l]

        # pack heads into (NH, BS, DH) VMEM scratch -> one batched attention
        for h in range(NH):
            qh_s[h] = q[:, h * DH:(h + 1) * DH]
            kh_s[h] = k[:, h * DH:(h + 1) * DH]
            vh_s[h] = v[:, h * DH:(h + 1) * DH]
        qh, kh, vh = qh_s[...], kh_s[...], vh_s[...]

        # head-batched scores over flattened rows; the additive bias removes
        # cross-example pairs and padded keys (block-diagonal mask).
        s = jnp.einsum('hqd,hkd->hqk', qh, kh,
                       preferred_element_type=jnp.float32) * scale + bias
        s = s - jnp.max(s, axis=-1, keepdims=True)
        p = jnp.exp(s)
        p = p * pl.reciprocal(jnp.sum(p, axis=-1, keepdims=True), approx=True)

        ctx_h = jnp.einsum('hqk,hkd->hqd', p, vh,
                           preferred_element_type=jnp.float32)       # (NH, BS, DH)
        ctx = jnp.concatenate([ctx_h[hh] for hh in range(NH)], axis=-1)  # (BS, H)

        attn = jnp.dot(ctx, wo_ref[l], preferred_element_type=jnp.float32) + bo_ref[l]
        x = _layer_norm(x + attn, g1_ref[l], be1_ref[l])

        hmid = _gelu(jnp.dot(x, w1_ref[l], preferred_element_type=jnp.float32) + b1_ref[l])
        ffn = jnp.dot(hmid, w2_ref[l], preferred_element_type=jnp.float32) + b2_ref[l]
        x = _layer_norm(x + ffn, g2_ref[l], be2_ref[l])

    # regressor applied to every row with lane-padded (H,128) weights so the
    # output store is lane-dense; wrapper keeps CLS rows / column 0.
    o_ref[...] = jnp.dot(x, rw_ref[...], preferred_element_type=jnp.float32) + rb_ref[...]


# -------------------------------- wrapper -------------------------------------
def _full_spec(shape):
    nd = len(shape)
    return pl.BlockSpec(shape, lambda i, _nd=nd: (0,) * _nd)


@jax.jit
def bert_regressor_forward(input_ids, attention_mask, params):
    # embedding gather + sum (plain-JAX glue; table gather has no clean Pallas path here)
    word = jnp.take(params["word_emb"], input_ids, axis=0)            # (B, S, H)
    x0 = (word + params["pos_emb"][None] + params["type_emb"][None]).reshape(BS, H)

    # combined additive attention bias: block-diagonal over examples + key padding,
    # pre-broadcast over heads so the kernel just adds it elementwise.
    ex = jnp.arange(BS, dtype=jnp.int32) // S
    same = ex[:, None] == ex[None, :]
    key_ok = attention_mask.reshape(BS).astype(bool)
    bias2d = jnp.where(same & key_ok[None, :], 0.0, NEG_INF).astype(jnp.float32)
    attn_bias = jnp.broadcast_to(bias2d, (NH, BS, BS))

    # lane-pad the 1-wide regressor so the kernel output store is lane-dense
    rw_pad = jnp.concatenate([params["reg_w"], jnp.zeros((H, 127), jnp.float32)], axis=1)
    rb_pad = jnp.concatenate([params["reg_b"], jnp.zeros((1, 127), jnp.float32)], axis=1)

    inputs = [
        x0, attn_bias, params["emb_ln_g"], params["emb_ln_b"],
        params["wq"], params["bq"], params["wk"], params["bk"],
        params["wv"], params["bv"], params["wo"], params["bo"],
        params["ln1_g"], params["ln1_b"],
        params["w1"], params["b1"], params["w2"], params["b2"],
        params["ln2_g"], params["ln2_b"],
        rw_pad, rb_pad,
    ]

    out_full = pl.pallas_call(
        fused_bert_kernel,
        out_shape=jax.ShapeDtypeStruct((BS, 128), jnp.float32),
        grid=(1,),
        in_specs=[_full_spec(a.shape) for a in inputs],
        out_specs=_full_spec((BS, 128)),
        scratch_shapes=[pltpu.VMEM((NH, BS, DH), jnp.float32)] * 3,
        compiler_params=pltpu.CompilerParams(dimension_semantics=("arbitrary",)),
    )(*inputs)

    # per-token regressor values; keep CLS token (row 0 of each example), column 0
    return out_full.reshape(B, S, 128)[:, 0, :1]                      # (B, 1)


# ------------------------- deterministic parameter init ----------------------
def init_params(key):
    scale = 0.02

    def nrm(k, shape):
        return jax.random.normal(k, shape, dtype=jnp.float32) * scale

    keys = jax.random.split(key, 10)
    # per-layer weights are stacked along a leading LAYERS axis so the fused
    # kernel indexes them with a static layer index.
    return {
        "word_emb": nrm(keys[0], (VOCAB, H)),
        "pos_emb": nrm(keys[1], (S, H)),
        "type_emb": nrm(keys[2], (1, H)),
        "emb_ln_g": jnp.ones((1, H), jnp.float32),
        "emb_ln_b": jnp.zeros((1, H), jnp.float32),
        "reg_w": nrm(keys[3], (H, 1)),
        "reg_b": jnp.zeros((1, 1), jnp.float32),
        "wq": nrm(keys[4], (LAYERS, H, H)), "bq": jnp.zeros((LAYERS, 1, H), jnp.float32),
        "wk": nrm(keys[5], (LAYERS, H, H)), "bk": jnp.zeros((LAYERS, 1, H), jnp.float32),
        "wv": nrm(keys[6], (LAYERS, H, H)), "bv": jnp.zeros((LAYERS, 1, H), jnp.float32),
        "wo": nrm(keys[7], (LAYERS, H, H)), "bo": jnp.zeros((LAYERS, 1, H), jnp.float32),
        "ln1_g": jnp.ones((LAYERS, 1, H), jnp.float32),
        "ln1_b": jnp.zeros((LAYERS, 1, H), jnp.float32),
        "w1": nrm(keys[8], (LAYERS, H, FF)), "b1": jnp.zeros((LAYERS, 1, FF), jnp.float32),
        "w2": nrm(keys[9], (LAYERS, FF, H)), "b2": jnp.zeros((LAYERS, 1, H), jnp.float32),
        "ln2_g": jnp.ones((LAYERS, 1, H), jnp.float32),
        "ln2_b": jnp.zeros((LAYERS, 1, H), jnp.float32),
    }


# ----------------------------------- main -------------------------------------
if __name__ == "__main__":
    key = jax.random.PRNGKey(0)
    k_ids, k_params = jax.random.split(key)

    input_ids = jax.random.randint(k_ids, (B, S), 0, VOCAB, dtype=jnp.int32)
    attention_mask = jnp.array(
        [[1] * S, [1] * (S - 2) + [0, 0]], dtype=jnp.int32)   # second seq padded

    # TODO(synk): pretrained-checkpoint loading (RobertaModel.from_pretrained)
    # has no Pallas equivalent; weights are synthetic/deterministic here.
    params = init_params(k_params)

    out = bert_regressor_forward(input_ids, attention_mask, params)
    out = jax.block_until_ready(out)
    assert out.shape == (B, 1) and out.dtype == jnp.float32
    print("KERNEL_OK")
</pallas_src>

<mosaic_0001>
module attributes {stable_mosaic.version = 11 : i64} {
  func.func @fused_bert_kernel(%arg0: i32, %arg1: memref<16x128xf32, #tpu.memory_space<vmem>>, %arg2: memref<4x16x16xf32, #tpu.memory_space<vmem>>, %arg3: memref<1x128xf32, #tpu.memory_space<vmem>>, %arg4: memref<1x128xf32, #tpu.memory_space<vmem>>, %arg5: memref<2x128x128xf32, #tpu.memory_space<vmem>>, %arg6: memref<2x1x128xf32, #tpu.memory_space<vmem>>, %arg7: memref<2x128x128xf32, #tpu.memory_space<vmem>>, %arg8: memref<2x1x128xf32, #tpu.memory_space<vmem>>, %arg9: memref<2x128x128xf32, #tpu.memory_space<vmem>>, %arg10: memref<2x1x128xf32, #tpu.memory_space<vmem>>, %arg11: memref<2x128x128xf32, #tpu.memory_space<vmem>>, %arg12: memref<2x1x128xf32, #tpu.memory_space<vmem>>, %arg13: memref<2x1x128xf32, #tpu.memory_space<vmem>>, %arg14: memref<2x1x128xf32, #tpu.memory_space<vmem>>, %arg15: memref<2x128x256xf32, #tpu.memory_space<vmem>>, %arg16: memref<2x1x256xf32, #tpu.memory_space<vmem>>, %arg17: memref<2x256x128xf32, #tpu.memory_space<vmem>>, %arg18: memref<2x1x128xf32, #tpu.memory_space<vmem>>, %arg19: memref<2x1x128xf32, #tpu.memory_space<vmem>>, %arg20: memref<2x1x128xf32, #tpu.memory_space<vmem>>, %arg21: memref<128x128xf32, #tpu.memory_space<vmem>>, %arg22: memref<1x128xf32, #tpu.memory_space<vmem>>, %arg23: memref<16x128xf32, #tpu.memory_space<vmem>>, %arg24: memref<4x16x32xf32, #tpu.memory_space<vmem>>, %arg25: memref<4x16x32xf32, #tpu.memory_space<vmem>>, %arg26: memref<4x16x32xf32, #tpu.memory_space<vmem>>) attributes {dimension_semantics = [#tpu.dimension_semantics<arbitrary>], iteration_bounds = array<i64: 1>, scalar_prefetch = 0 : i64, scratch_operands = 3 : i64, tpu.core_type = #tpu.core_type<tc>, window_params = [{pipeline_mode = #tpu.pipeline_mode<synchronous>, transform_indices = @transform_0, window_bounds = array<i64: 16, 128>}, {pipeline_mode = #tpu.pipeline_mode<synchronous>, transform_indices = @transform_1, window_bounds = array<i64: 4, 16, 16>}, {pipeline_mode = #tpu.pipeline_mode<synchronous>, transform_indices = @transform_2, window_bounds = array<i64: 1, 128>}, {pipeline_mode = #tpu.pipeline_mode<synchronous>, transform_indices = @transform_3, window_bounds = array<i64: 1, 128>}, {pipeline_mode = #tpu.pipeline_mode<synchronous>, transform_indices = @transform_4, window_bounds = array<i64: 2, 128, 128>}, {pipeline_mode = #tpu.pipeline_mode<synchronous>, transform_indices = @transform_5, window_bounds = array<i64: 2, 1, 128>}, {pipeline_mode = #tpu.pipeline_mode<synchronous>, transform_indices = @transform_6, window_bounds = array<i64: 2, 128, 128>}, {pipeline_mode = #tpu.pipeline_mode<synchronous>, transform_indices = @transform_7, window_bounds = array<i64: 2, 1, 128>}, {pipeline_mode = #tpu.pipeline_mode<synchronous>, transform_indices = @transform_8, window_bounds = array<i64: 2, 128, 128>}, {pipeline_mode = #tpu.pipeline_mode<synchronous>, transform_indices = @transform_9, window_bounds = array<i64: 2, 1, 128>}, {pipeline_mode = #tpu.pipeline_mode<synchronous>, transform_indices = @transform_10, window_bounds = array<i64: 2, 128, 128>}, {pipeline_mode = #tpu.pipeline_mode<synchronous>, transform_indices = @transform_11, window_bounds = array<i64: 2, 1, 128>}, {pipeline_mode = #tpu.pipeline_mode<synchronous>, transform_indices = @transform_12, window_bounds = array<i64: 2, 1, 128>}, {pipeline_mode = #tpu.pipeline_mode<synchronous>, transform_indices = @transform_13, window_bounds = array<i64: 2, 1, 128>}, {pipeline_mode = #tpu.pipeline_mode<synchronous>, transform_indices = @transform_14, window_bounds = array<i64: 2, 128, 256>}, {pipeline_mode = #tpu.pipeline_mode<synchronous>, transform_indices = @transform_15, window_bounds = array<i64: 2, 1, 256>}, {pipeline_mode = #tpu.pipeline_mode<synchronous>, transform_indices = @transform_16, window_bounds = array<i64: 2, 256, 128>}, {pipeline_mode = #tpu.pipeline_mode<synchronous>, transform_indices = @transform_17, window_bounds = array<i64: 2, 1, 128>}, {pipeline_mode = #tpu.pipeline_mode<synchronous>, transform_indices = @transform_18, window_bounds = array<i64: 2, 1, 128>}, {pipeline_mode = #tpu.pipeline_mode<synchronous>, transform_indices = @transform_19, window_bounds = array<i64: 2, 1, 128>}, {pipeline_mode = #tpu.pipeline_mode<synchronous>, transform_indices = @transform_20, window_bounds = array<i64: 128, 128>}, {pipeline_mode = #tpu.pipeline_mode<synchronous>, transform_indices = @transform_21, window_bounds = array<i64: 1, 128>}, {pipeline_mode = #tpu.pipeline_mode<synchronous>, transform_indices = @transform_22, window_bounds = array<i64: 16, 128>}]} {
    %c0 = arith.constant 0 : index
    %c0_0 = arith.constant 0 : index
    %c0_1 = arith.constant 0 : index
    %0 = vector.load %arg2[%c0, %c0_0, %c0_1] : memref<4x16x16xf32, #tpu.memory_space<vmem>>, vector<4x16x16xf32>
    %c0_2 = arith.constant 0 : index
    %c0_3 = arith.constant 0 : index
    %1 = vector.load %arg1[%c0_2, %c0_3] : memref<16x128xf32, #tpu.memory_space<vmem>>, vector<16x128xf32>
    %c0_4 = arith.constant 0 : index
    %c0_5 = arith.constant 0 : index
    %2 = vector.load %arg3[%c0_4, %c0_5] : memref<1x128xf32, #tpu.memory_space<vmem>>, vector<1x128xf32>
    %c0_6 = arith.constant 0 : index
    %c0_7 = arith.constant 0 : index
    %3 = vector.load %arg4[%c0_6, %c0_7] : memref<1x128xf32, #tpu.memory_space<vmem>>, vector<1x128xf32>
    %cst = arith.constant dense<0.000000e+00> : vector<16xf32>
    %4 = vector.multi_reduction <add>, %1, %cst [1] : vector<16x128xf32> to vector<16xf32>
    %5 = vector.shape_cast %4 : vector<16xf32> to vector<16x1xf32>
    %cst_8 = arith.constant 1.280000e+02 : f32
    %6 = vector.broadcast %cst_8 : f32 to vector<16x1xf32>
    %7 = arith.divf %5, %6 : vector<16x1xf32>
    %8 = vector.broadcast %7 : vector<16x1xf32> to vector<16x128xf32>
    %9 = arith.subf %1, %8 : vector<16x128xf32>
    %10 = vector.broadcast %7 : vector<16x1xf32> to vector<16x128xf32>
    %11 = arith.subf %1, %10 : vector<16x128xf32>
    %12 = arith.mulf %9, %11 : vector<16x128xf32>
    %cst_9 = arith.constant dense<0.000000e+00> : vector<16xf32>
    %13 = vector.multi_reduction <add>, %12, %cst_9 [1] : vector<16x128xf32> to vector<16xf32>
    %14 = vector.shape_cast %13 : vector<16xf32> to vector<16x1xf32>
    %cst_10 = arith.constant 1.280000e+02 : f32
    %15 = vector.broadcast %cst_10 : f32 to vector<16x1xf32>
    %16 = arith.divf %14, %15 : vector<16x1xf32>
    %17 = vector.broadcast %7 : vector<16x1xf32> to vector<16x128xf32>
    %18 = arith.subf %1, %17 : vector<16x128xf32>
    %cst_11 = arith.constant 9.99999974E-6 : f32
    %19 = vector.broadcast %cst_11 : f32 to vector<16x1xf32>
    %20 = arith.addf %16, %19 : vector<16x1xf32>
    %21 = math.rsqrt %20 : vector<16x1xf32>
    %22 = vector.broadcast %21 : vector<16x1xf32> to vector<16x128xf32>
    %23 = arith.mulf %18, %22 : vector<16x128xf32>
    %24 = vector.broadcast %2 : vector<1x128xf32> to vector<16x128xf32>
    %25 = arith.mulf %23, %24 : vector<16x128xf32>
    %26 = vector.broadcast %3 : vector<1x128xf32> to vector<16x128xf32>
    %27 = arith.addf %25, %26 : vector<16x128xf32>
    %c0_12 = arith.constant 0 : index
    %c0_13 = arith.constant 0 : index
    %c0_14 = arith.constant 0 : index
    %28 = vector.load %arg5[%c0_12, %c0_13, %c0_14] : memref<2x128x128xf32, #tpu.memory_space<vmem>>, vector<1x128x128xf32>
    %29 = vector.shape_cast %28 : vector<1x128x128xf32> to vector<128x128xf32>
    %cst_15 = arith.constant dense<0.000000e+00> : vector<16x128xf32>
    %30 = tpu.matmul %27, %29, %cst_15 {dimension_numbers = #tpu.dot_dimension_numbers<[1], [0], [0], [1], [0, 0, 1, 1], [], []>} : vector<16x128xf32>, vector<128x128xf32>, vector<16x128xf32> -> vector<16x128xf32>
    %c0_16 = arith.constant 0 : index
    %c0_17 = arith.constant 0 : index
    %c0_18 = arith.constant 0 : index
    %31 = vector.load %arg6[%c0_16, %c0_17, %c0_18] : memref<2x1x128xf32, #tpu.memory_space<vmem>>, vector<1x1x128xf32>
    %32 = vector.shape_cast %31 : vector<1x1x128xf32> to vector<1x128xf32>
    %33 = vector.broadcast %32 : vector<1x128xf32> to vector<16x128xf32>
    %34 = arith.addf %30, %33 : vector<16x128xf32>
    %c0_19 = arith.constant 0 : index
    %c0_20 = arith.constant 0 : index
    %c0_21 = arith.constant 0 : index
    %35 = vector.load %arg7[%c0_19, %c0_20, %c0_21] : memref<2x128x128xf32, #tpu.memory_space<vmem>>, vector<1x128x128xf32>
    %36 = vector.shape_cast %35 : vector<1x128x128xf32> to vector<128x128xf32>
    %cst_22 = arith.constant dense<0.000000e+00> : vector<16x128xf32>
    %37 = tpu.matmul %27, %36, %cst_22 {dimension_numbers = #tpu.dot_dimension_numbers<[1], [0], [0], [1], [0, 0, 1, 1], [], []>} : vector<16x128xf32>, vector<128x128xf32>, vector<16x128xf32> -> vector<16x128xf32>
    %c0_23 = arith.constant 0 : index
    %c0_24 = arith.constant 0 : index
    %c0_25 = arith.constant 0 : index
    %38 = vector.load %arg8[%c0_23, %c0_24, %c0_25] : memref<2x1x128xf32, #tpu.memory_space<vmem>>, vector<1x1x128xf32>
    %39 = vector.shape_cast %38 : vector<1x1x128xf32> to vector<1x128xf32>
    %40 = vector.broadcast %39 : vector<1x128xf32> to vector<16x128xf32>
    %41 = arith.addf %37, %40 : vector<16x128xf32>
    %c0_26 = arith.constant 0 : index
    %c0_27 = arith.constant 0 : index
    %c0_28 = arith.constant 0 : index
    %42 = vector.load %arg9[%c0_26, %c0_27, %c0_28] : memref<2x128x128xf32, #tpu.memory_space<vmem>>, vector<1x128x128xf32>
    %43 = vector.shape_cast %42 : vector<1x128x128xf32> to vector<128x128xf32>
    %cst_29 = arith.constant dense<0.000000e+00> : vector<16x128xf32>
    %44 = tpu.matmul %27, %43, %cst_29 {dimension_numbers = #tpu.dot_dimension_numbers<[1], [0], [0], [1], [0, 0, 1, 1], [], []>} : vector<16x128xf32>, vector<128x128xf32>, vector<16x128xf32> -> vector<16x128xf32>
    %c0_30 = arith.constant 0 : index
    %c0_31 = arith.constant 0 : index
    %c0_32 = arith.constant 0 : index
    %45 = vector.load %arg10[%c0_30, %c0_31, %c0_32] : memref<2x1x128xf32, #tpu.memory_space<vmem>>, vector<1x1x128xf32>
    %46 = vector.shape_cast %45 : vector<1x1x128xf32> to vector<1x128xf32>
    %47 = vector.broadcast %46 : vector<1x128xf32> to vector<16x128xf32>
    %48 = arith.addf %44, %47 : vector<16x128xf32>
    %49 = vector.extract_strided_slice %34 {offsets = [0, 0], sizes = [16, 32], strides = [1, 1]} : vector<16x128xf32> to vector<16x32xf32>
    %c0_33 = arith.constant 0 : index
    %c0_34 = arith.constant 0 : index
    %c0_35 = arith.constant 0 : index
    %50 = vector.load %arg24[%c0_33, %c0_34, %c0_35] : memref<4x16x32xf32, #tpu.memory_space<vmem>>, vector<1x16x32xf32>
    %51 = vector.shape_cast %50 : vector<1x16x32xf32> to vector<16x32xf32>
    %52 = vector.shape_cast %49 : vector<16x32xf32> to vector<1x16x32xf32>
    tpu.vector_store %arg24[%c0_33, %c0_34, %c0_35], %52 {strides = array<i32>} : memref<4x16x32xf32, #tpu.memory_space<vmem>>, vector<1x16x32xf32>,
    %53 = vector.extract_strided_slice %41 {offsets = [0, 0], sizes = [16, 32], strides = [1, 1]} : vector<16x128xf32> to vector<16x32xf32>
    %c0_36 = arith.constant 0 : index
    %c0_37 = arith.constant 0 : index
    %c0_38 = arith.constant 0 : index
    %54 = vector.load %arg25[%c0_36, %c0_37, %c0_38] : memref<4x16x32xf32, #tpu.memory_space<vmem>>, vector<1x16x32xf32>
    %55 = vector.shape_cast %54 : vector<1x16x32xf32> to vector<16x32xf32>
    %56 = vector.shape_cast %53 : vector<16x32xf32> to vector<1x16x32xf32>
    tpu.vector_store %arg25[%c0_36, %c0_37, %c0_38], %56 {strides = array<i32>} : memref<4x16x32xf32, #tpu.memory_space<vmem>>, vector<1x16x32xf32>,
    %57 = vector.extract_strided_slice %48 {offsets = [0, 0], sizes = [16, 32], strides = [1, 1]} : vector<16x128xf32> to vector<16x32xf32>
    %c0_39 = arith.constant 0 : index
    %c0_40 = arith.constant 0 : index
    %c0_41 = arith.constant 0 : index
    %58 = vector.load %arg26[%c0_39, %c0_40, %c0_41] : memref<4x16x32xf32, #tpu.memory_space<vmem>>, vector<1x16x32xf32>
    %59 = vector.shape_cast %58 : vector<1x16x32xf32> to vector<16x32xf32>
    %60 = vector.shape_cast %57 : vector<16x32xf32> to vector<1x16x32xf32>
    tpu.vector_store %arg26[%c0_39, %c0_40, %c0_41], %60 {strides = array<i32>} : memref<4x16x32xf32, #tpu.memory_space<vmem>>, vector<1x16x32xf32>,
    %61 = vector.extract_strided_slice %34 {offsets = [0, 32], sizes = [16, 32], strides = [1, 1]} : vector<16x128xf32> to vector<16x32xf32>
    %c1 = arith.constant 1 : index
    %c0_42 = arith.constant 0 : index
    %c0_43 = arith.constant 0 : index
    %62 = vector.load %arg24[%c1, %c0_42, %c0_43] : memref<4x16x32xf32, #tpu.memory_space<vmem>>, vector<1x16x32xf32>
    %63 = vector.shape_cast %62 : vector<1x16x32xf32> to vector<16x32xf32>
    %64 = vector.shape_cast %61 : vector<16x32xf32> to vector<1x16x32xf32>
    tpu.vector_store %arg24[%c1, %c0_42, %c0_43], %64 {strides = array<i32>} : memref<4x16x32xf32, #tpu.memory_space<vmem>>, vector<1x16x32xf32>,
    %65 = vector.extract_strided_slice %41 {offsets = [0, 32], sizes = [16, 32], strides = [1, 1]} : vector<16x128xf32> to vector<16x32xf32>
    %c1_44 = arith.constant 1 : index
    %c0_45 = arith.constant 0 : index
    %c0_46 = arith.constant 0 : index
    %66 = vector.load %arg25[%c1_44, %c0_45, %c0_46] : memref<4x16x32xf32, #tpu.memory_space<vmem>>, vector<1x16x32xf32>
    %67 = vector.shape_cast %66 : vector<1x16x32xf32> to vector<16x32xf32>
    %68 = vector.shape_cast %65 : vector<16x32xf32> to vector<1x16x32xf32>
    tpu.vector_store %arg25[%c1_44, %c0_45, %c0_46], %68 {strides = array<i32>} : memref<4x16x32xf32, #tpu.memory_space<vmem>>, vector<1x16x32xf32>,
    %69 = vector.extract_strided_slice %48 {offsets = [0, 32], sizes = [16, 32], strides = [1, 1]} : vector<16x128xf32> to vector<16x32xf32>
    %c1_47 = arith.constant 1 : index
    %c0_48 = arith.constant 0 : index
    %c0_49 = arith.constant 0 : index
    %70 = vector.load %arg26[%c1_47, %c0_48, %c0_49] : memref<4x16x32xf32, #tpu.memory_space<vmem>>, vector<1x16x32xf32>
    %71 = vector.shape_cast %70 : vector<1x16x32xf32> to vector<16x32xf32>
    %72 = vector.shape_cast %69 : vector<16x32xf32> to vector<1x16x32xf32>
    tpu.vector_store %arg26[%c1_47, %c0_48, %c0_49], %72 {strides = array<i32>} : memref<4x16x32xf32, #tpu.memory_space<vmem>>, vector<1x16x32xf32>,
    %73 = vector.extract_strided_slice %34 {offsets = [0, 64], sizes = [16, 32], strides = [1, 1]} : vector<16x128xf32> to vector<16x32xf32>
    %c2 = arith.constant 2 : index
    %c0_50 = arith.constant 0 : index
    %c0_51 = arith.constant 0 : index
    %74 = vector.load %arg24[%c2, %c0_50, %c0_51] : memref<4x16x32xf32, #tpu.memory_space<vmem>>, vector<1x16x32xf32>
    %75 = vector.shape_cast %74 : vector<1x16x32xf32> to vector<16x32xf32>
    %76 = vector.shape_cast %73 : vector<16x32xf32> to vector<1x16x32xf32>
    tpu.vector_store %arg24[%c2, %c0_50, %c0_51], %76 {strides = array<i32>} : memref<4x16x32xf32, #tpu.memory_space<vmem>>, vector<1x16x32xf32>,
    %77 = vector.extract_strided_slice %41 {offsets = [0, 64], sizes = [16, 32], strides = [1, 1]} : vector<16x128xf32> to vector<16x32xf32>
    %c2_52 = arith.constant 2 : index
    %c0_53 = arith.constant 0 : index
    %c0_54 = arith.constant 0 : index
    %78 = vector.load %arg25[%c2_52, %c0_53, %c0_54] : memref<4x16x32xf32, #tpu.memory_space<vmem>>, vector<1x16x32xf32>
    %79 = vector.shape_cast %78 : vector<1x16x32xf32> to vector<16x32xf32>
    %80 = vector.shape_cast %77 : vector<16x32xf32> to vector<1x16x32xf32>
    tpu.vector_store %arg25[%c2_52, %c0_53, %c0_54], %80 {strides = array<i32>} : memref<4x16x32xf32, #tpu.memory_space<vmem>>, vector<1x16x32xf32>,
    %81 = vector.extract_strided_slice %48 {offsets = [0, 64], sizes = [16, 32], strides = [1, 1]} : vector<16x128xf32> to vector<16x32xf32>
    %c2_55 = arith.constant 2 : index
    %c0_56 = arith.constant 0 : index
    %c0_57 = arith.constant 0 : index
    %82 = vector.load %arg26[%c2_55, %c0_56, %c0_57] : memref<4x16x32xf32, #tpu.memory_space<vmem>>, vector<1x16x32xf32>
    %83 = vector.shape_cast %82 : vector<1x16x32xf32> to vector<16x32xf32>
    %84 = vector.shape_cast %81 : vector<16x32xf32> to vector<1x16x32xf32>
    tpu.vector_store %arg26[%c2_55, %c0_56, %c0_57], %84 {strides = array<i32>} : memref<4x16x32xf32, #tpu.memory_space<vmem>>, vector<1x16x32xf32>,
    %85 = vector.extract_strided_slice %34 {offsets = [0, 96], sizes = [16, 32], strides = [1, 1]} : vector<16x128xf32> to vector<16x32xf32>
    %c3 = arith.constant 3 : index
    %c0_58 = arith.constant 0 : index
    %c0_59 = arith.constant 0 : index
    %86 = vector.load %arg24[%c3, %c0_58, %c0_59] : memref<4x16x32xf32, #tpu.memory_space<vmem>>, vector<1x16x32xf32>
    %87 = vector.shape_cast %86 : vector<1x16x32xf32> to vector<16x32xf32>
    %88 = vector.shape_cast %85 : vector<16x32xf32> to vector<1x16x32xf32>
    tpu.vector_store %arg24[%c3, %c0_58, %c0_59], %88 {strides = array<i32>} : memref<4x16x32xf32, #tpu.memory_space<vmem>>, vector<1x16x32xf32>,
    %89 = vector.extract_strided_slice %41 {offsets = [0, 96], sizes = [16, 32], strides = [1, 1]} : vector<16x128xf32> to vector<16x32xf32>
    %c3_60 = arith.constant 3 : index
    %c0_61 = arith.constant 0 : index
    %c0_62 = arith.constant 0 : index
    %90 = vector.load %arg25[%c3_60, %c0_61, %c0_62] : memref<4x16x32xf32, #tpu.memory_space<vmem>>, vector<1x16x32xf32>
    %91 = vector.shape_cast %90 : vector<1x16x32xf32> to vector<16x32xf32>
    %92 = vector.shape_cast %89 : vector<16x32xf32> to vector<1x16x32xf32>
    tpu.vector_store %arg25[%c3_60, %c0_61, %c0_62], %92 {strides = array<i32>} : memref<4x16x32xf32, #tpu.memory_space<vmem>>, vector<1x16x32xf32>,
    %93 = vector.extract_strided_slice %48 {offsets = [0, 96], sizes = [16, 32], strides = [1, 1]} : vector<16x128xf32> to vector<16x32xf32>
    %c3_63 = arith.constant 3 : index
    %c0_64 = arith.constant 0 : index
    %c0_65 = arith.constant 0 : index
    %94 = vector.load %arg26[%c3_63, %c0_64, %c0_65] : memref<4x16x32xf32, #tpu.memory_space<vmem>>, vector<1x16x32xf32>
    %95 = vector.shape_cast %94 : vector<1x16x32xf32> to vector<16x32xf32>
    %96 = vector.shape_cast %93 : vector<16x32xf32> to vector<1x16x32xf32>
    tpu.vector_store %arg26[%c3_63, %c0_64, %c0_65], %96 {strides = array<i32>} : memref<4x16x32xf32, #tpu.memory_space<vmem>>, vector<1x16x32xf32>,
    %c0_66 = arith.constant 0 : index
    %c0_67 = arith.constant 0 : index
    %c0_68 = arith.constant 0 : index
    %97 = vector.load %arg24[%c0_66, %c0_67, %c0_68] : memref<4x16x32xf32, #tpu.memory_space<vmem>>, vector<4x16x32xf32>
    %c0_69 = arith.constant 0 : index
    %c0_70 = arith.constant 0 : index
    %c0_71 = arith.constant 0 : index
    %98 = vector.load %arg25[%c0_69, %c0_70, %c0_71] : memref<4x16x32xf32, #tpu.memory_space<vmem>>, vector<4x16x32xf32>
    %c0_72 = arith.constant 0 : index
    %c0_73 = arith.constant 0 : index
    %c0_74 = arith.constant 0 : index
    %99 = vector.load %arg26[%c0_72, %c0_73, %c0_74] : memref<4x16x32xf32, #tpu.memory_space<vmem>>, vector<4x16x32xf32>
    "tpu.trace_start"() <{level = 10 : i32, message = "hqd,hkd->hqk"}> : () -> ()
    %cst_75 = arith.constant dense<0.000000e+00> : vector<4x16x16xf32>
    %100 = tpu.matmul %97, %98, %cst_75 {dimension_numbers = #tpu.dot_dimension_numbers<[2], [2], [1], [1], [0, 0, 0, 1, 1, 1], [0], [0]>} : vector<4x16x32xf32>, vector<4x16x32xf32>, vector<4x16x16xf32> -> vector<4x16x16xf32>
    "tpu.trace_stop"() : () -> ()
    %cst_76 = arith.constant 0.176776692 : f32
    %101 = vector.broadcast %cst_76 : f32 to vector<4x16x16xf32>
    %102 = arith.mulf %100, %101 : vector<4x16x16xf32>
    %103 = arith.addf %102, %0 : vector<4x16x16xf32>
    %cst_77 = arith.constant dense<0xFF800000> : vector<4x16xf32>
    %104 = vector.multi_reduction <maximumf>, %103, %cst_77 [2] : vector<4x16x16xf32> to vector<4x16xf32>
    %105 = vector.shape_cast %104 : vector<4x16xf32> to vector<4x16x1xf32>
    %106 = vector.broadcast %105 : vector<4x16x1xf32> to vector<4x16x16xf32>
    %107 = arith.subf %103, %106 : vector<4x16x16xf32>
    %108 = math.exp %107 : vector<4x16x16xf32>
    %cst_78 = arith.constant dense<0.000000e+00> : vector<4x16xf32>
    %109 = vector.multi_reduction <add>, %108, %cst_78 [2] : vector<4x16x16xf32> to vector<4x16xf32>
    %110 = vector.shape_cast %109 : vector<4x16xf32> to vector<4x16x1xf32>
    %111 = tpu.reciprocal %110 {approx = true} : vector<4x16x1xf32> -> vector<4x16x1xf32>
    %112 = vector.broadcast %111 : vector<4x16x1xf32> to vector<4x16x16xf32>
    %113 = arith.mulf %108, %112 : vector<4x16x16xf32>
    "tpu.trace_start"() <{level = 10 : i32, message = "hqk,hkd->hqd"}> : () -> ()
    %cst_79 = arith.constant dense<0.000000e+00> : vector<4x16x32xf32>
    %114 = tpu.matmul %113, %99, %cst_79 {dimension_numbers = #tpu.dot_dimension_numbers<[2], [1], [1], [2], [0, 0, 0, 1, 1, 2], [0], [0]>} : vector<4x16x16xf32>, vector<4x16x32xf32>, vector<4x16x32xf32> -> vector<4x16x32xf32>
    "tpu.trace_stop"() : () -> ()
    %115 = vector.extract_strided_slice %114 {offsets = [0, 0, 0], sizes = [1, 16, 32], strides = [1, 1, 1]} : vector<4x16x32xf32> to vector<1x16x32xf32>
    %116 = vector.shape_cast %115 : vector<1x16x32xf32> to vector<16x32xf32>
    %117 = vector.extract_strided_slice %114 {offsets = [1, 0, 0], sizes = [1, 16, 32], strides = [1, 1, 1]} : vector<4x16x32xf32> to vector<1x16x32xf32>
    %118 = vector.shape_cast %117 : vector<1x16x32xf32> to vector<16x32xf32>
    %119 = vector.extract_strided_slice %114 {offsets = [2, 0, 0], sizes = [1, 16, 32], strides = [1, 1, 1]} : vector<4x16x32xf32> to vector<1x16x32xf32>
    %120 = vector.shape_cast %119 : vector<1x16x32xf32> to vector<16x32xf32>
    %121 = vector.extract_strided_slice %114 {offsets = [3, 0, 0], sizes = [1, 16, 32], strides = [1, 1, 1]} : vector<4x16x32xf32> to vector<1x16x32xf32>
    %122 = vector.shape_cast %121 : vector<1x16x32xf32> to vector<16x32xf32>
    %123 = tpu.concatenate %116, %118, %120, %122 in 1 : vector<16x32xf32>, vector<16x32xf32>, vector<16x32xf32>, vector<16x32xf32> -> vector<16x128xf32>
    %c0_80 = arith.constant 0 : index
    %c0_81 = arith.constant 0 : index
    %c0_82 = arith.constant 0 : index
    %124 = vector.load %arg11[%c0_80, %c0_81, %c0_82] : memref<2x128x128xf32, #tpu.memory_space<vmem>>, vector<1x128x128xf32>
    %125 = vector.shape_cast %124 : vector<1x128x128xf32> to vector<128x128xf32>
    %cst_83 = arith.constant dense<0.000000e+00> : vector<16x128xf32>
    %126 = tpu.matmul %123, %125, %cst_83 {dimension_numbers = #tpu.dot_dimension_numbers<[1], [0], [0], [1], [0, 0, 1, 1], [], []>} : vector<16x128xf32>, vector<128x128xf32>, vector<16x128xf32> -> vector<16x128xf32>
    %c0_84 = arith.constant 0 : index
    %c0_85 = arith.constant 0 : index
    %c0_86 = arith.constant 0 : index
    %127 = vector.load %arg12[%c0_84, %c0_85, %c0_86] : memref<2x1x128xf32, #tpu.memory_space<vmem>>, vector<1x1x128xf32>
    %128 = vector.shape_cast %127 : vector<1x1x128xf32> to vector<1x128xf32>
    %129 = vector.broadcast %128 : vector<1x128xf32> to vector<16x128xf32>
    %130 = arith.addf %126, %129 : vector<16x128xf32>
    %131 = arith.addf %27, %130 : vector<16x128xf32>
    %c0_87 = arith.constant 0 : index
    %c0_88 = arith.constant 0 : index
    %c0_89 = arith.constant 0 : index
    %132 = vector.load %arg13[%c0_87, %c0_88, %c0_89] : memref<2x1x128xf32, #tpu.memory_space<vmem>>, vector<1x1x128xf32>
    %133 = vector.shape_cast %132 : vector<1x1x128xf32> to vector<1x128xf32>
    %c0_90 = arith.constant 0 : index
    %c0_91 = arith.constant 0 : index
    %c0_92 = arith.constant 0 : index
    %134 = vector.load %arg14[%c0_90, %c0_91, %c0_92] : memref<2x1x128xf32, #tpu.memory_space<vmem>>, vector<1x1x128xf32>
    %135 = vector.shape_cast %134 : vector<1x1x128xf32> to vector<1x128xf32>
    %cst_93 = arith.constant dense<0.000000e+00> : vector<16xf32>
    %136 = vector.multi_reduction <add>, %131, %cst_93 [1] : vector<16x128xf32> to vector<16xf32>
    %137 = vector.shape_cast %136 : vector<16xf32> to vector<16x1xf32>
    %cst_94 = arith.constant 1.280000e+02 : f32
    %138 = vector.broadcast %cst_94 : f32 to vector<16x1xf32>
    %139 = arith.divf %137, %138 : vector<16x1xf32>
    %140 = vector.broadcast %139 : vector<16x1xf32> to vector<16x128xf32>
    %141 = arith.subf %131, %140 : vector<16x128xf32>
    %142 = vector.broadcast %139 : vector<16x1xf32> to vector<16x128xf32>
    %143 = arith.subf %131, %142 : vector<16x128xf32>
    %144 = arith.mulf %141, %143 : vector<16x128xf32>
    %cst_95 = arith.constant dense<0.000000e+00> : vector<16xf32>
    %145 = vector.multi_reduction <add>, %144, %cst_95 [1] : vector<16x128xf32> to vector<16xf32>
    %146 = vector.shape_cast %145 : vector<16xf32> to vector<16x1xf32>
    %cst_96 = arith.constant 1.280000e+02 : f32
    %147 = vector.broadcast %cst_96 : f32 to vector<16x1xf32>
    %148 = arith.divf %146, %147 : vector<16x1xf32>
    %149 = vector.broadcast %139 : vector<16x1xf32> to vector<16x128xf32>
    %150 = arith.subf %131, %149 : vector<16x128xf32>
    %cst_97 = arith.constant 9.99999974E-6 : f32
    %151 = vector.broadcast %cst_97 : f32 to vector<16x1xf32>
    %152 = arith.addf %148, %151 : vector<16x1xf32>
    %153 = math.rsqrt %152 : vector<16x1xf32>
    %154 = vector.broadcast %153 : vector<16x1xf32> to vector<16x128xf32>
    %155 = arith.mulf %150, %154 : vector<16x128xf32>
    %156 = vector.broadcast %133 : vector<1x128xf32> to vector<16x128xf32>
    %157 = arith.mulf %155, %156 : vector<16x128xf32>
    %158 = vector.broadcast %135 : vector<1x128xf32> to vector<16x128xf32>
    %159 = arith.addf %157, %158 : vector<16x128xf32>
    %c0_98 = arith.constant 0 : index
    %c0_99 = arith.constant 0 : index
    %c0_100 = arith.constant 0 : index
    %160 = vector.load %arg15[%c0_98, %c0_99, %c0_100] : memref<2x128x256xf32, #tpu.memory_space<vmem>>, vector<1x128x256xf32>
    %161 = vector.shape_cast %160 : vector<1x128x256xf32> to vector<128x256xf32>
    %cst_101 = arith.constant dense<0.000000e+00> : vector<16x256xf32>
    %162 = tpu.matmul %159, %161, %cst_101 {dimension_numbers = #tpu.dot_dimension_numbers<[1], [0], [0], [1], [0, 0, 1, 1], [], []>} : vector<16x128xf32>, vector<128x256xf32>, vector<16x256xf32> -> vector<16x256xf32>
    %c0_102 = arith.constant 0 : index
    %c0_103 = arith.constant 0 : index
    %c0_104 = arith.constant 0 : index
    %163 = vector.load %arg16[%c0_102, %c0_103, %c0_104] : memref<2x1x256xf32, #tpu.memory_space<vmem>>, vector<1x1x256xf32>
    %164 = vector.shape_cast %163 : vector<1x1x256xf32> to vector<1x256xf32>
    %165 = vector.broadcast %164 : vector<1x256xf32> to vector<16x256xf32>
    %166 = arith.addf %162, %165 : vector<16x256xf32>
    %cst_105 = arith.constant 5.000000e-01 : f32
    %167 = vector.broadcast %cst_105 : f32 to vector<16x256xf32>
    %168 = arith.mulf %167, %166 : vector<16x256xf32>
    %cst_106 = arith.constant 4.471500e-02 : f32
    %169 = vector.broadcast %cst_106 : f32 to vector<16x256xf32>
    %170 = arith.mulf %169, %166 : vector<16x256xf32>
    %171 = arith.mulf %170, %166 : vector<16x256xf32>
    %172 = arith.mulf %171, %166 : vector<16x256xf32>
    %173 = arith.addf %166, %172 : vector<16x256xf32>
    %cst_107 = arith.constant 0.797884583 : f32
    %174 = vector.broadcast %cst_107 : f32 to vector<16x256xf32>
    %175 = arith.mulf %174, %173 : vector<16x256xf32>
    %176 = math.tanh %175 : vector<16x256xf32>
    %cst_108 = arith.constant 1.000000e+00 : f32
    %177 = vector.broadcast %cst_108 : f32 to vector<16x256xf32>
    %178 = arith.addf %177, %176 : vector<16x256xf32>
    %179 = arith.mulf %168, %178 : vector<16x256xf32>
    %c0_109 = arith.constant 0 : index
    %c0_110 = arith.constant 0 : index
    %c0_111 = arith.constant 0 : index
    %180 = vector.load %arg17[%c0_109, %c0_110, %c0_111] : memref<2x256x128xf32, #tpu.memory_space<vmem>>, vector<1x256x128xf32>
    %181 = vector.shape_cast %180 : vector<1x256x128xf32> to vector<256x128xf32>
    %cst_112 = arith.constant dense<0.000000e+00> : vector<16x128xf32>
    %182 = tpu.matmul %179, %181, %cst_112 {dimension_numbers = #tpu.dot_dimension_numbers<[1], [0], [0], [1], [0, 0, 1, 1], [], []>} : vector<16x256xf32>, vector<256x128xf32>, vector<16x128xf32> -> vector<16x128xf32>
    %c0_113 = arith.constant 0 : index
    %c0_114 = arith.constant 0 : index
    %c0_115 = arith.constant 0 : index
    %183 = vector.load %arg18[%c0_113, %c0_114, %c0_115] : memref<2x1x128xf32, #tpu.memory_space<vmem>>, vector<1x1x128xf32>
    %184 = vector.shape_cast %183 : vector<1x1x128xf32> to vector<1x128xf32>
    %185 = vector.broadcast %184 : vector<1x128xf32> to vector<16x128xf32>
    %186 = arith.addf %182, %185 : vector<16x128xf32>
    %187 = arith.addf %159, %186 : vector<16x128xf32>
    %c0_116 = arith.constant 0 : index
    %c0_117 = arith.constant 0 : index
    %c0_118 = arith.constant 0 : index
    %188 = vector.load %arg19[%c0_116, %c0_117, %c0_118] : memref<2x1x128xf32, #tpu.memory_space<vmem>>, vector<1x1x128xf32>
    %189 = vector.shape_cast %188 : vector<1x1x128xf32> to vector<1x128xf32>
    %c0_119 = arith.constant 0 : index
    %c0_120 = arith.constant 0 : index
    %c0_121 = arith.constant 0 : index
    %190 = vector.load %arg20[%c0_119, %c0_120, %c0_121] : memref<2x1x128xf32, #tpu.memory_space<vmem>>, vector<1x1x128xf32>
    %191 = vector.shape_cast %190 : vector<1x1x128xf32> to vector<1x128xf32>
    %cst_122 = arith.constant dense<0.000000e+00> : vector<16xf32>
    %192 = vector.multi_reduction <add>, %187, %cst_122 [1] : vector<16x128xf32> to vector<16xf32>
    %193 = vector.shape_cast %192 : vector<16xf32> to vector<16x1xf32>
    %cst_123 = arith.constant 1.280000e+02 : f32
    %194 = vector.broadcast %cst_123 : f32 to vector<16x1xf32>
    %195 = arith.divf %193, %194 : vector<16x1xf32>
    %196 = vector.broadcast %195 : vector<16x1xf32> to vector<16x128xf32>
    %197 = arith.subf %187, %196 : vector<16x128xf32>
    %198 = vector.broadcast %195 : vector<16x1xf32> to vector<16x128xf32>
    %199 = arith.subf %187, %198 : vector<16x128xf32>
    %200 = arith.mulf %197, %199 : vector<16x128xf32>
    %cst_124 = arith.constant dense<0.000000e+00> : vector<16xf32>
    %201 = vector.multi_reduction <add>, %200, %cst_124 [1] : vector<16x128xf32> to vector<16xf32>
    %202 = vector.shape_cast %201 : vector<16xf32> to vector<16x1xf32>
    %cst_125 = arith.constant 1.280000e+02 : f32
    %203 = vector.broadcast %cst_125 : f32 to vector<16x1xf32>
    %204 = arith.divf %202, %203 : vector<16x1xf32>
    %205 = vector.broadcast %195 : vector<16x1xf32> to vector<16x128xf32>
    %206 = arith.subf %187, %205 : vector<16x128xf32>
    %cst_126 = arith.constant 9.99999974E-6 : f32
    %207 = vector.broadcast %cst_126 : f32 to vector<16x1xf32>
    %208 = arith.addf %204, %207 : vector<16x1xf32>
    %209 = math.rsqrt %208 : vector<16x1xf32>
    %210 = vector.broadcast %209 : vector<16x1xf32> to vector<16x128xf32>
    %211 = arith.mulf %206, %210 : vector<16x128xf32>
    %212 = vector.broadcast %189 : vector<1x128xf32> to vector<16x128xf32>
    %213 = arith.mulf %211, %212 : vector<16x128xf32>
    %214 = vector.broadcast %191 : vector<1x128xf32> to vector<16x128xf32>
    %215 = arith.addf %213, %214 : vector<16x128xf32>
    %c1_127 = arith.constant 1 : index
    %c0_128 = arith.constant 0 : index
    %c0_129 = arith.constant 0 : index
    %216 = vector.load %arg5[%c1_127, %c0_128, %c0_129] : memref<2x128x128xf32, #tpu.memory_space<vmem>>, vector<1x128x128xf32>
    %217 = vector.shape_cast %216 : vector<1x128x128xf32> to vector<128x128xf32>
    %cst_130 = arith.constant dense<0.000000e+00> : vector<16x128xf32>
    %218 = tpu.matmul %215, %217, %cst_130 {dimension_numbers = #tpu.dot_dimension_numbers<[1], [0], [0], [1], [0, 0, 1, 1], [], []>} : vector<16x128xf32>, vector<128x128xf32>, vector<16x128xf32> -> vector<16x128xf32>
    %c1_131 = arith.constant 1 : index
    %c0_132 = arith.constant 0 : index
    %c0_133 = arith.constant 0 : index
    %219 = vector.load %arg6[%c1_131, %c0_132, %c0_133] : memref<2x1x128xf32, #tpu.memory_space<vmem>>, vector<1x1x128xf32>
    %220 = vector.shape_cast %219 : vector<1x1x128xf32> to vector<1x128xf32>
    %221 = vector.broadcast %220 : vector<1x128xf32> to vector<16x128xf32>
    %222 = arith.addf %218, %221 : vector<16x128xf32>
    %c1_134 = arith.constant 1 : index
    %c0_135 = arith.constant 0 : index
    %c0_136 = arith.constant 0 : index
    %223 = vector.load %arg7[%c1_134, %c0_135, %c0_136] : memref<2x128x128xf32, #tpu.memory_space<vmem>>, vector<1x128x128xf32>
    %224 = vector.shape_cast %223 : vector<1x128x128xf32> to vector<128x128xf32>
    %cst_137 = arith.constant dense<0.000000e+00> : vector<16x128xf32>
    %225 = tpu.matmul %215, %224, %cst_137 {dimension_numbers = #tpu.dot_dimension_numbers<[1], [0], [0], [1], [0, 0, 1, 1], [], []>} : vector<16x128xf32>, vector<128x128xf32>, vector<16x128xf32> -> vector<16x128xf32>
    %c1_138 = arith.constant 1 : index
    %c0_139 = arith.constant 0 : index
    %c0_140 = arith.constant 0 : index
    %226 = vector.load %arg8[%c1_138, %c0_139, %c0_140] : memref<2x1x128xf32, #tpu.memory_space<vmem>>, vector<1x1x128xf32>
    %227 = vector.shape_cast %226 : vector<1x1x128xf32> to vector<1x128xf32>
    %228 = vector.broadcast %227 : vector<1x128xf32> to vector<16x128xf32>
    %229 = arith.addf %225, %228 : vector<16x128xf32>
    %c1_141 = arith.constant 1 : index
    %c0_142 = arith.constant 0 : index
    %c0_143 = arith.constant 0 : index
    %230 = vector.load %arg9[%c1_141, %c0_142, %c0_143] : memref<2x128x128xf32, #tpu.memory_space<vmem>>, vector<1x128x128xf32>
    %231 = vector.shape_cast %230 : vector<1x128x128xf32> to vector<128x128xf32>
    %cst_144 = arith.constant dense<0.000000e+00> : vector<16x128xf32>
    %232 = tpu.matmul %215, %231, %cst_144 {dimension_numbers = #tpu.dot_dimension_numbers<[1], [0], [0], [1], [0, 0, 1, 1], [], []>} : vector<16x128xf32>, vector<128x128xf32>, vector<16x128xf32> -> vector<16x128xf32>
    %c1_145 = arith.constant 1 : index
    %c0_146 = arith.constant 0 : index
    %c0_147 = arith.constant 0 : index
    %233 = vector.load %arg10[%c1_145, %c0_146, %c0_147] : memref<2x1x128xf32, #tpu.memory_space<vmem>>, vector<1x1x128xf32>
    %234 = vector.shape_cast %233 : vector<1x1x128xf32> to vector<1x128xf32>
    %235 = vector.broadcast %234 : vector<1x128xf32> to vector<16x128xf32>
    %236 = arith.addf %232, %235 : vector<16x128xf32>
    %237 = vector.extract_strided_slice %222 {offsets = [0, 0], sizes = [16, 32], strides = [1, 1]} : vector<16x128xf32> to vector<16x32xf32>
    %c0_148 = arith.constant 0 : index
    %c0_149 = arith.constant 0 : index
    %c0_150 = arith.constant 0 : index
    %238 = vector.load %arg24[%c0_148, %c0_149, %c0_150] : memref<4x16x32xf32, #tpu.memory_space<vmem>>, vector<1x16x32xf32>
    %239 = vector.shape_cast %238 : vector<1x16x32xf32> to vector<16x32xf32>
    %240 = vector.shape_cast %237 : vector<16x32xf32> to vector<1x16x32xf32>
    tpu.vector_store %arg24[%c0_148, %c0_149, %c0_150], %240 {strides = array<i32>} : memref<4x16x32xf32, #tpu.memory_space<vmem>>, vector<1x16x32xf32>,
    %241 = vector.extract_strided_slice %229 {offsets = [0, 0], sizes = [16, 32], strides = [1, 1]} : vector<16x128xf32> to vector<16x32xf32>
    %c0_151 = arith.constant 0 : index
    %c0_152 = arith.constant 0 : index
    %c0_153 = arith.constant 0 : index
    %242 = vector.load %arg25[%c0_151, %c0_152, %c0_153] : memref<4x16x32xf32, #tpu.memory_space<vmem>>, vector<1x16x32xf32>
    %243 = vector.shape_cast %242 : vector<1x16x32xf32> to vector<16x32xf32>
    %244 = vector.shape_cast %241 : vector<16x32xf32> to vector<1x16x32xf32>
    tpu.vector_store %arg25[%c0_151, %c0_152, %c0_153], %244 {strides = array<i32>} : memref<4x16x32xf32, #tpu.memory_space<vmem>>, vector<1x16x32xf32>,
    %245 = vector.extract_strided_slice %236 {offsets = [0, 0], sizes = [16, 32], strides = [1, 1]} : vector<16x128xf32> to vector<16x32xf32>
    %c0_154 = arith.constant 0 : index
    %c0_155 = arith.constant 0 : index
    %c0_156 = arith.constant 0 : index
    %246 = vector.load %arg26[%c0_154, %c0_155, %c0_156] : memref<4x16x32xf32, #tpu.memory_space<vmem>>, vector<1x16x32xf32>
    %247 = vector.shape_cast %246 : vector<1x16x32xf32> to vector<16x32xf32>
    %248 = vector.shape_cast %245 : vector<16x32xf32> to vector<1x16x32xf32>
    tpu.vector_store %arg26[%c0_154, %c0_155, %c0_156], %248 {strides = array<i32>} : memref<4x16x32xf32, #tpu.memory_space<vmem>>, vector<1x16x32xf32>,
    %249 = vector.extract_strided_slice %222 {offsets = [0, 32], sizes = [16, 32], strides = [1, 1]} : vector<16x128xf32> to vector<16x32xf32>
    %c1_157 = arith.constant 1 : index
    %c0_158 = arith.constant 0 : index
    %c0_159 = arith.constant 0 : index
    %250 = vector.load %arg24[%c1_157, %c0_158, %c0_159] : memref<4x16x32xf32, #tpu.memory_space<vmem>>, vector<1x16x32xf32>
    %251 = vector.shape_cast %250 : vector<1x16x32xf32> to vector<16x32xf32>
    %252 = vector.shape_cast %249 : vector<16x32xf32> to vector<1x16x32xf32>
    tpu.vector_store %arg24[%c1_157, %c0_158, %c0_159], %252 {strides = array<i32>} : memref<4x16x32xf32, #tpu.memory_space<vmem>>, vector<1x16x32xf32>,
    %253 = vector.extract_strided_slice %229 {offsets = [0, 32], sizes = [16, 32], strides = [1, 1]} : vector<16x128xf32> to vector<16x32xf32>
    %c1_160 = arith.constant 1 : index
    %c0_161 = arith.constant 0 : index
    %c0_162 = arith.constant 0 : index
    %254 = vector.load %arg25[%c1_160, %c0_161, %c0_162] : memref<4x16x32xf32, #tpu.memory_space<vmem>>, vector<1x16x32xf32>
    %255 = vector.shape_cast %254 : vector<1x16x32xf32> to vector<16x32xf32>
    %256 = vector.shape_cast %253 : vector<16x32xf32> to vector<1x16x32xf32>
    tpu.vector_store %arg25[%c1_160, %c0_161, %c0_162], %256 {strides = array<i32>} : memref<4x16x32xf32, #tpu.memory_space<vmem>>, vector<1x16x32xf32>,
    %257 = vector.extract_strided_slice %236 {offsets = [0, 32], sizes = [16, 32], strides = [1, 1]} : vector<16x128xf32> to vector<16x32xf32>
    %c1_163 = arith.constant 1 : index
    %c0_164 = arith.constant 0 : index
    %c0_165 = arith.constant 0 : index
    %258 = vector.load %arg26[%c1_163, %c0_164, %c0_165] : memref<4x16x32xf32, #tpu.memory_space<vmem>>, vector<1x16x32xf32>
    %259 = vector.shape_cast %258 : vector<1x16x32xf32> to vector<16x32xf32>
    %260 = vector.shape_cast %257 : vector<16x32xf32> to vector<1x16x32xf32>
    tpu.vector_store %arg26[%c1_163, %c0_164, %c0_165], %260 {strides = array<i32>} : memref<4x16x32xf32, #tpu.memory_space<vmem>>, vector<1x16x32xf32>,
    %261 = vector.extract_strided_slice %222 {offsets = [0, 64], sizes = [16, 32], strides = [1, 1]} : vector<16x128xf32> to vector<16x32xf32>
    %c2_166 = arith.constant 2 : index
    %c0_167 = arith.constant 0 : index
    %c0_168 = arith.constant 0 : index
    %262 = vector.load %arg24[%c2_166, %c0_167, %c0_168] : memref<4x16x32xf32, #tpu.memory_space<vmem>>, vector<1x16x32xf32>
    %263 = vector.shape_cast %262 : vector<1x16x32xf32> to vector<16x32xf32>
    %264 = vector.shape_cast %261 : vector<16x32xf32> to vector<1x16x32xf32>
    tpu.vector_store %arg24[%c2_166, %c0_167, %c0_168], %264 {strides = array<i32>} : memref<4x16x32xf32, #tpu.memory_space<vmem>>, vector<1x16x32xf32>,
    %265 = vector.extract_strided_slice %229 {offsets = [0, 64], sizes = [16, 32], strides = [1, 1]} : vector<16x128xf32> to vector<16x32xf32>
    %c2_169 = arith.constant 2 : index
    %c0_170 = arith.constant 0 : index
    %c0_171 = arith.constant 0 : index
    %266 = vector.load %arg25[%c2_169, %c0_170, %c0_171] : memref<4x16x32xf32, #tpu.memory_space<vmem>>, vector<1x16x32xf32>
    %267 = vector.shape_cast %266 : vector<1x16x32xf32> to vector<16x32xf32>
    %268 = vector.shape_cast %265 : vector<16x32xf32> to vector<1x16x32xf32>
    tpu.vector_store %arg25[%c2_169, %c0_170, %c0_171], %268 {strides = array<i32>} : memref<4x16x32xf32, #tpu.memory_space<vmem>>, vector<1x16x32xf32>,
    %269 = vector.extract_strided_slice %236 {offsets = [0, 64], sizes = [16, 32], strides = [1, 1]} : vector<16x128xf32> to vector<16x32xf32>
    %c2_172 = arith.constant 2 : index
    %c0_173 = arith.constant 0 : index
    %c0_174 = arith.constant 0 : index
    %270 = vector.load %arg26[%c2_172, %c0_173, %c0_174] : memref<4x16x32xf32, #tpu.memory_space<vmem>>, vector<1x16x32xf32>
    %271 = vector.shape_cast %270 : vector<1x16x32xf32> to vector<16x32xf32>
    %272 = vector.shape_cast %269 : vector<16x32xf32> to vector<1x16x32xf32>
    tpu.vector_store %arg26[%c2_172, %c0_173, %c0_174], %272 {strides = array<i32>} : memref<4x16x32xf32, #tpu.memory_space<vmem>>, vector<1x16x32xf32>,
    %273 = vector.extract_strided_slice %222 {offsets = [0, 96], sizes = [16, 32], strides = [1, 1]} : vector<16x128xf32> to vector<16x32xf32>
    %c3_175 = arith.constant 3 : index
    %c0_176 = arith.constant 0 : index
    %c0_177 = arith.constant 0 : index
    %274 = vector.load %arg24[%c3_175, %c0_176, %c0_177] : memref<4x16x32xf32, #tpu.memory_space<vmem>>, vector<1x16x32xf32>
    %275 = vector.shape_cast %274 : vector<1x16x32xf32> to vector<16x32xf32>
    %276 = vector.shape_cast %273 : vector<16x32xf32> to vector<1x16x32xf32>
    tpu.vector_store %arg24[%c3_175, %c0_176, %c0_177], %276 {strides = array<i32>} : memref<4x16x32xf32, #tpu.memory_space<vmem>>, vector<1x16x32xf32>,
    %277 = vector.extract_strided_slice %229 {offsets = [0, 96], sizes = [16, 32], strides = [1, 1]} : vector<16x128xf32> to vector<16x32xf32>
    %c3_178 = arith.constant 3 : index
    %c0_179 = arith.constant 0 : index
    %c0_180 = arith.constant 0 : index
    %278 = vector.load %arg25[%c3_178, %c0_179, %c0_180] : memref<4x16x32xf32, #tpu.memory_space<vmem>>, vector<1x16x32xf32>
    %279 = vector.shape_cast %278 : vector<1x16x32xf32> to vector<16x32xf32>
    %280 = vector.shape_cast %277 : vector<16x32xf32> to vector<1x16x32xf32>
    tpu.vector_store %arg25[%c3_178, %c0_179, %c0_180], %280 {strides = array<i32>} : memref<4x16x32xf32, #tpu.memory_space<vmem>>, vector<1x16x32xf32>,
    %281 = vector.extract_strided_slice %236 {offsets = [0, 96], sizes = [16, 32], strides = [1, 1]} : vector<16x128xf32> to vector<16x32xf32>
    %c3_181 = arith.constant 3 : index
    %c0_182 = arith.constant 0 : index
    %c0_183 = arith.constant 0 : index
    %282 = vector.load %arg26[%c3_181, %c0_182, %c0_183] : memref<4x16x32xf32, #tpu.memory_space<vmem>>, vector<1x16x32xf32>
    %283 = vector.shape_cast %282 : vector<1x16x32xf32> to vector<16x32xf32>
    %284 = vector.shape_cast %281 : vector<16x32xf32> to vector<1x16x32xf32>
    tpu.vector_store %arg26[%c3_181, %c0_182, %c0_183], %284 {strides = array<i32>} : memref<4x16x32xf32, #tpu.memory_space<vmem>>, vector<1x16x32xf32>,
    %c0_184 = arith.constant 0 : index
    %c0_185 = arith.constant 0 : index
    %c0_186 = arith.constant 0 : index
    %285 = vector.load %arg24[%c0_184, %c0_185, %c0_186] : memref<4x16x32xf32, #tpu.memory_space<vmem>>, vector<4x16x32xf32>
    %c0_187 = arith.constant 0 : index
    %c0_188 = arith.constant 0 : index
    %c0_189 = arith.constant 0 : index
    %286 = vector.load %arg25[%c0_187, %c0_188, %c0_189] : memref<4x16x32xf32, #tpu.memory_space<vmem>>, vector<4x16x32xf32>
    %c0_190 = arith.constant 0 : index
    %c0_191 = arith.constant 0 : index
    %c0_192 = arith.constant 0 : index
    %287 = vector.load %arg26[%c0_190, %c0_191, %c0_192] : memref<4x16x32xf32, #tpu.memory_space<vmem>>, vector<4x16x32xf32>
    "tpu.trace_start"() <{level = 10 : i32, message = "hqd,hkd->hqk"}> : () -> ()
    %cst_193 = arith.constant dense<0.000000e+00> : vector<4x16x16xf32>
    %288 = tpu.matmul %285, %286, %cst_193 {dimension_numbers = #tpu.dot_dimension_numbers<[2], [2], [1], [1], [0, 0, 0, 1, 1, 1], [0], [0]>} : vector<4x16x32xf32>, vector<4x16x32xf32>, vector<4x16x16xf32> -> vector<4x16x16xf32>
    "tpu.trace_stop"() : () -> ()
    %cst_194 = arith.constant 0.176776692 : f32
    %289 = vector.broadcast %cst_194 : f32 to vector<4x16x16xf32>
    %290 = arith.mulf %288, %289 : vector<4x16x16xf32>
    %291 = arith.addf %290, %0 : vector<4x16x16xf32>
    %cst_195 = arith.constant dense<0xFF800000> : vector<4x16xf32>
    %292 = vector.multi_reduction <maximumf>, %291, %cst_195 [2] : vector<4x16x16xf32> to vector<4x16xf32>
    %293 = vector.shape_cast %292 : vector<4x16xf32> to vector<4x16x1xf32>
    %294 = vector.broadcast %293 : vector<4x16x1xf32> to vector<4x16x16xf32>
    %295 = arith.subf %291, %294 : vector<4x16x16xf32>
    %296 = math.exp %295 : vector<4x16x16xf32>
    %cst_196 = arith.constant dense<0.000000e+00> : vector<4x16xf32>
    %297 = vector.multi_reduction <add>, %296, %cst_196 [2] : vector<4x16x16xf32> to vector<4x16xf32>
    %298 = vector.shape_cast %297 : vector<4x16xf32> to vector<4x16x1xf32>
    %299 = tpu.reciprocal %298 {approx = true} : vector<4x16x1xf32> -> vector<4x16x1xf32>
    %300 = vector.broadcast %299 : vector<4x16x1xf32> to vector<4x16x16xf32>
    %301 = arith.mulf %296, %300 : vector<4x16x16xf32>
    "tpu.trace_start"() <{level = 10 : i32, message = "hqk,hkd->hqd"}> : () -> ()
    %cst_197 = arith.constant dense<0.000000e+00> : vector<4x16x32xf32>
    %302 = tpu.matmul %301, %287, %cst_197 {dimension_numbers = #tpu.dot_dimension_numbers<[2], [1], [1], [2], [0, 0, 0, 1, 1, 2], [0], [0]>} : vector<4x16x16xf32>, vector<4x16x32xf32>, vector<4x16x32xf32> -> vector<4x16x32xf32>
    "tpu.trace_stop"() : () -> ()
    %303 = vector.extract_strided_slice %302 {offsets = [0, 0, 0], sizes = [1, 16, 32], strides = [1, 1, 1]} : vector<4x16x32xf32> to vector<1x16x32xf32>
    %304 = vector.shape_cast %303 : vector<1x16x32xf32> to vector<16x32xf32>
    %305 = vector.extract_strided_slice %302 {offsets = [1, 0, 0], sizes = [1, 16, 32], strides = [1, 1, 1]} : vector<4x16x32xf32> to vector<1x16x32xf32>
    %306 = vector.shape_cast %305 : vector<1x16x32xf32> to vector<16x32xf32>
    %307 = vector.extract_strided_slice %302 {offsets = [2, 0, 0], sizes = [1, 16, 32], strides = [1, 1, 1]} : vector<4x16x32xf32> to vector<1x16x32xf32>
    %308 = vector.shape_cast %307 : vector<1x16x32xf32> to vector<16x32xf32>
    %309 = vector.extract_strided_slice %302 {offsets = [3, 0, 0], sizes = [1, 16, 32], strides = [1, 1, 1]} : vector<4x16x32xf32> to vector<1x16x32xf32>
    %310 = vector.shape_cast %309 : vector<1x16x32xf32> to vector<16x32xf32>
    %311 = tpu.concatenate %304, %306, %308, %310 in 1 : vector<16x32xf32>, vector<16x32xf32>, vector<16x32xf32>, vector<16x32xf32> -> vector<16x128xf32>
    %c1_198 = arith.constant 1 : index
    %c0_199 = arith.constant 0 : index
    %c0_200 = arith.constant 0 : index
    %312 = vector.load %arg11[%c1_198, %c0_199, %c0_200] : memref<2x128x128xf32, #tpu.memory_space<vmem>>, vector<1x128x128xf32>
    %313 = vector.shape_cast %312 : vector<1x128x128xf32> to vector<128x128xf32>
    %cst_201 = arith.constant dense<0.000000e+00> : vector<16x128xf32>
    %314 = tpu.matmul %311, %313, %cst_201 {dimension_numbers = #tpu.dot_dimension_numbers<[1], [0], [0], [1], [0, 0, 1, 1], [], []>} : vector<16x128xf32>, vector<128x128xf32>, vector<16x128xf32> -> vector<16x128xf32>
    %c1_202 = arith.constant 1 : index
    %c0_203 = arith.constant 0 : index
    %c0_204 = arith.constant 0 : index
    %315 = vector.load %arg12[%c1_202, %c0_203, %c0_204] : memref<2x1x128xf32, #tpu.memory_space<vmem>>, vector<1x1x128xf32>
    %316 = vector.shape_cast %315 : vector<1x1x128xf32> to vector<1x128xf32>
    %317 = vector.broadcast %316 : vector<1x128xf32> to vector<16x128xf32>
    %318 = arith.addf %314, %317 : vector<16x128xf32>
    %319 = arith.addf %215, %318 : vector<16x128xf32>
    %c1_205 = arith.constant 1 : index
    %c0_206 = arith.constant 0 : index
    %c0_207 = arith.constant 0 : index
    %320 = vector.load %arg13[%c1_205, %c0_206, %c0_207] : memref<2x1x128xf32, #tpu.memory_space<vmem>>, vector<1x1x128xf32>
    %321 = vector.shape_cast %320 : vector<1x1x128xf32> to vector<1x128xf32>
    %c1_208 = arith.constant 1 : index
    %c0_209 = arith.constant 0 : index
    %c0_210 = arith.constant 0 : index
    %322 = vector.load %arg14[%c1_208, %c0_209, %c0_210] : memref<2x1x128xf32, #tpu.memory_space<vmem>>, vector<1x1x128xf32>
    %323 = vector.shape_cast %322 : vector<1x1x128xf32> to vector<1x128xf32>
    %cst_211 = arith.constant dense<0.000000e+00> : vector<16xf32>
    %324 = vector.multi_reduction <add>, %319, %cst_211 [1] : vector<16x128xf32> to vector<16xf32>
    %325 = vector.shape_cast %324 : vector<16xf32> to vector<16x1xf32>
    %cst_212 = arith.constant 1.280000e+02 : f32
    %326 = vector.broadcast %cst_212 : f32 to vector<16x1xf32>
    %327 = arith.divf %325, %326 : vector<16x1xf32>
    %328 = vector.broadcast %327 : vector<16x1xf32> to vector<16x128xf32>
    %329 = arith.subf %319, %328 : vector<16x128xf32>
    %330 = vector.broadcast %327 : vector<16x1xf32> to vector<16x128xf32>
    %331 = arith.subf %319, %330 : vector<16x128xf32>
    %332 = arith.mulf %329, %331 : vector<16x128xf32>
    %cst_213 = arith.constant dense<0.000000e+00> : vector<16xf32>
    %333 = vector.multi_reduction <add>, %332, %cst_213 [1] : vector<16x128xf32> to vector<16xf32>
    %334 = vector.shape_cast %333 : vector<16xf32> to vector<16x1xf32>
    %cst_214 = arith.constant 1.280000e+02 : f32
    %335 = vector.broadcast %cst_214 : f32 to vector<16x1xf32>
    %336 = arith.divf %334, %335 : vector<16x1xf32>
    %337 = vector.broadcast %327 : vector<16x1xf32> to vector<16x128xf32>
    %338 = arith.subf %319, %337 : vector<16x128xf32>
    %cst_215 = arith.constant 9.99999974E-6 : f32
    %339 = vector.broadcast %cst_215 : f32 to vector<16x1xf32>
    %340 = arith.addf %336, %339 : vector<16x1xf32>
    %341 = math.rsqrt %340 : vector<16x1xf32>
    %342 = vector.broadcast %341 : vector<16x1xf32> to vector<16x128xf32>
    %343 = arith.mulf %338, %342 : vector<16x128xf32>
    %344 = vector.broadcast %321 : vector<1x128xf32> to vector<16x128xf32>
    %345 = arith.mulf %343, %344 : vector<16x128xf32>
    %346 = vector.broadcast %323 : vector<1x128xf32> to vector<16x128xf32>
    %347 = arith.addf %345, %346 : vector<16x128xf32>
    %c1_216 = arith.constant 1 : index
    %c0_217 = arith.constant 0 : index
    %c0_218 = arith.constant 0 : index
    %348 = vector.load %arg15[%c1_216, %c0_217, %c0_218] : memref<2x128x256xf32, #tpu.memory_space<vmem>>, vector<1x128x256xf32>
    %349 = vector.shape_cast %348 : vector<1x128x256xf32> to vector<128x256xf32>
    %cst_219 = arith.constant dense<0.000000e+00> : vector<16x256xf32>
    %350 = tpu.matmul %347, %349, %cst_219 {dimension_numbers = #tpu.dot_dimension_numbers<[1], [0], [0], [1], [0, 0, 1, 1], [], []>} : vector<16x128xf32>, vector<128x256xf32>, vector<16x256xf32> -> vector<16x256xf32>
    %c1_220 = arith.constant 1 : index
    %c0_221 = arith.constant 0 : index
    %c0_222 = arith.constant 0 : index
    %351 = vector.load %arg16[%c1_220, %c0_221, %c0_222] : memref<2x1x256xf32, #tpu.memory_space<vmem>>, vector<1x1x256xf32>
    %352 = vector.shape_cast %351 : vector<1x1x256xf32> to vector<1x256xf32>
    %353 = vector.broadcast %352 : vector<1x256xf32> to vector<16x256xf32>
    %354 = arith.addf %350, %353 : vector<16x256xf32>
    %cst_223 = arith.constant 5.000000e-01 : f32
    %355 = vector.broadcast %cst_223 : f32 to vector<16x256xf32>
    %356 = arith.mulf %355, %354 : vector<16x256xf32>
    %cst_224 = arith.constant 4.471500e-02 : f32
    %357 = vector.broadcast %cst_224 : f32 to vector<16x256xf32>
    %358 = arith.mulf %357, %354 : vector<16x256xf32>
    %359 = arith.mulf %358, %354 : vector<16x256xf32>
    %360 = arith.mulf %359, %354 : vector<16x256xf32>
    %361 = arith.addf %354, %360 : vector<16x256xf32>
    %cst_225 = arith.constant 0.797884583 : f32
    %362 = vector.broadcast %cst_225 : f32 to vector<16x256xf32>
    %363 = arith.mulf %362, %361 : vector<16x256xf32>
    %364 = math.tanh %363 : vector<16x256xf32>
    %cst_226 = arith.constant 1.000000e+00 : f32
    %365 = vector.broadcast %cst_226 : f32 to vector<16x256xf32>
    %366 = arith.addf %365, %364 : vector<16x256xf32>
    %367 = arith.mulf %356, %366 : vector<16x256xf32>
    %c1_227 = arith.constant 1 : index
    %c0_228 = arith.constant 0 : index
    %c0_229 = arith.constant 0 : index
    %368 = vector.load %arg17[%c1_227, %c0_228, %c0_229] : memref<2x256x128xf32, #tpu.memory_space<vmem>>, vector<1x256x128xf32>
    %369 = vector.shape_cast %368 : vector<1x256x128xf32> to vector<256x128xf32>
    %cst_230 = arith.constant dense<0.000000e+00> : vector<16x128xf32>
    %370 = tpu.matmul %367, %369, %cst_230 {dimension_numbers = #tpu.dot_dimension_numbers<[1], [0], [0], [1], [0, 0, 1, 1], [], []>} : vector<16x256xf32>, vector<256x128xf32>, vector<16x128xf32> -> vector<16x128xf32>
    %c1_231 = arith.constant 1 : index
    %c0_232 = arith.constant 0 : index
    %c0_233 = arith.constant 0 : index
    %371 = vector.load %arg18[%c1_231, %c0_232, %c0_233] : memref<2x1x128xf32, #tpu.memory_space<vmem>>, vector<1x1x128xf32>
    %372 = vector.shape_cast %371 : vector<1x1x128xf32> to vector<1x128xf32>
    %373 = vector.broadcast %372 : vector<1x128xf32> to vector<16x128xf32>
    %374 = arith.addf %370, %373 : vector<16x128xf32>
    %375 = arith.addf %347, %374 : vector<16x128xf32>
    %c1_234 = arith.constant 1 : index
    %c0_235 = arith.constant 0 : index
    %c0_236 = arith.constant 0 : index
    %376 = vector.load %arg19[%c1_234, %c0_235, %c0_236] : memref<2x1x128xf32, #tpu.memory_space<vmem>>, vector<1x1x128xf32>
    %377 = vector.shape_cast %376 : vector<1x1x128xf32> to vector<1x128xf32>
    %c1_237 = arith.constant 1 : index
    %c0_238 = arith.constant 0 : index
    %c0_239 = arith.constant 0 : index
    %378 = vector.load %arg20[%c1_237, %c0_238, %c0_239] : memref<2x1x128xf32, #tpu.memory_space<vmem>>, vector<1x1x128xf32>
    %379 = vector.shape_cast %378 : vector<1x1x128xf32> to vector<1x128xf32>
    %cst_240 = arith.constant dense<0.000000e+00> : vector<16xf32>
    %380 = vector.multi_reduction <add>, %375, %cst_240 [1] : vector<16x128xf32> to vector<16xf32>
    %381 = vector.shape_cast %380 : vector<16xf32> to vector<16x1xf32>
    %cst_241 = arith.constant 1.280000e+02 : f32
    %382 = vector.broadcast %cst_241 : f32 to vector<16x1xf32>
    %383 = arith.divf %381, %382 : vector<16x1xf32>
    %384 = vector.broadcast %383 : vector<16x1xf32> to vector<16x128xf32>
    %385 = arith.subf %375, %384 : vector<16x128xf32>
    %386 = vector.broadcast %383 : vector<16x1xf32> to vector<16x128xf32>
    %387 = arith.subf %375, %386 : vector<16x128xf32>
    %388 = arith.mulf %385, %387 : vector<16x128xf32>
    %cst_242 = arith.constant dense<0.000000e+00> : vector<16xf32>
    %389 = vector.multi_reduction <add>, %388, %cst_242 [1] : vector<16x128xf32> to vector<16xf32>
    %390 = vector.shape_cast %389 : vector<16xf32> to vector<16x1xf32>
    %cst_243 = arith.constant 1.280000e+02 : f32
    %391 = vector.broadcast %cst_243 : f32 to vector<16x1xf32>
    %392 = arith.divf %390, %391 : vector<16x1xf32>
    %393 = vector.broadcast %383 : vector<16x1xf32> to vector<16x128xf32>
    %394 = arith.subf %375, %393 : vector<16x128xf32>
    %cst_244 = arith.constant 9.99999974E-6 : f32
    %395 = vector.broadcast %cst_244 : f32 to vector<16x1xf32>
    %396 = arith.addf %392, %395 : vector<16x1xf32>
    %397 = math.rsqrt %396 : vector<16x1xf32>
    %398 = vector.broadcast %397 : vector<16x1xf32> to vector<16x128xf32>
    %399 = arith.mulf %394, %398 : vector<16x128xf32>
    %400 = vector.broadcast %377 : vector<1x128xf32> to vector<16x128xf32>
    %401 = arith.mulf %399, %400 : vector<16x128xf32>
    %402 = vector.broadcast %379 : vector<1x128xf32> to vector<16x128xf32>
    %403 = arith.addf %401, %402 : vector<16x128xf32>
    %c0_245 = arith.constant 0 : index
    %c0_246 = arith.constant 0 : index
    %404 = vector.load %arg21[%c0_245, %c0_246] : memref<128x128xf32, #tpu.memory_space<vmem>>, vector<128x128xf32>
    %cst_247 = arith.constant dense<0.000000e+00> : vector<16x128xf32>
    %405 = tpu.matmul %403, %404, %cst_247 {dimension_numbers = #tpu.dot_dimension_numbers<[1], [0], [0], [1], [0, 0, 1, 1], [], []>} : vector<16x128xf32>, vector<128x128xf32>, vector<16x128xf32> -> vector<16x128xf32>
    %c0_248 = arith.constant 0 : index
    %c0_249 = arith.constant 0 : index
    %406 = vector.load %arg22[%c0_248, %c0_249] : memref<1x128xf32, #tpu.memory_space<vmem>>, vector<1x128xf32>
    %407 = vector.broadcast %406 : vector<1x128xf32> to vector<16x128xf32>
    %408 = arith.addf %405, %407 : vector<16x128xf32>
    %c0_250 = arith.constant 0 : index
    %c0_251 = arith.constant 0 : index
    %409 = vector.load %arg23[%c0_250, %c0_251] : memref<16x128xf32, #tpu.memory_space<vmem>>, vector<16x128xf32>
    tpu.vector_store %arg23[%c0_250, %c0_251], %408 {strides = array<i32>} : memref<16x128xf32, #tpu.memory_space<vmem>>, vector<16x128xf32>,
    return
  }
  func.func @transform_0(%arg0: i32) -> (i32, i32) {
    %c0_i32 = arith.constant 0 : i32
    %c0_i32_0 = arith.constant 0 : i32
    %c0_i32_1 = arith.constant 0 : i32
    return %c0_i32, %c0_i32_0 : i32, i32
  }
  func.func @transform_1(%arg0: i32) -> (i32, i32, i32) {
    %c0_i32 = arith.constant 0 : i32
    %c0_i32_0 = arith.constant 0 : i32
    %c0_i32_1 = arith.constant 0 : i32
    %c0_i32_2 = arith.constant 0 : i32
    return %c0_i32, %c0_i32_0, %c0_i32_1 : i32, i32, i32
  }
  func.func @transform_2(%arg0: i32) -> (i32, i32) {
    %c0_i32 = arith.constant 0 : i32
    %c0_i32_0 = arith.constant 0 : i32
    %c0_i32_1 = arith.constant 0 : i32
    return %c0_i32, %c0_i32_0 : i32, i32
  }
  func.func @transform_3(%arg0: i32) -> (i32, i32) {
    %c0_i32 = arith.constant 0 : i32
    %c0_i32_0 = arith.constant 0 : i32
    %c0_i32_1 = arith.constant 0 : i32
    return %c0_i32, %c0_i32_0 : i32, i32
  }
  func.func @transform_4(%arg0: i32) -> (i32, i32, i32) {
    %c0_i32 = arith.constant 0 : i32
    %c0_i32_0 = arith.constant 0 : i32
    %c0_i32_1 = arith.constant 0 : i32
    %c0_i32_2 = arith.constant 0 : i32
    return %c0_i32, %c0_i32_0, %c0_i32_1 : i32, i32, i32
  }
  func.func @transform_5(%arg0: i32) -> (i32, i32, i32) {
    %c0_i32 = arith.constant 0 : i32
    %c0_i32_0 = arith.constant 0 : i32
    %c0_i32_1 = arith.constant 0 : i32
    %c0_i32_2 = arith.constant 0 : i32
    return %c0_i32, %c0_i32_0, %c0_i32_1 : i32, i32, i32
  }
  func.func @transform_6(%arg0: i32) -> (i32, i32, i32) {
    %c0_i32 = arith.constant 0 : i32
    %c0_i32_0 = arith.constant 0 : i32
    %c0_i32_1 = arith.constant 0 : i32
    %c0_i32_2 = arith.constant 0 : i32
    return %c0_i32, %c0_i32_0, %c0_i32_1 : i32, i32, i32
  }
  func.func @transform_7(%arg0: i32) -> (i32, i32, i32) {
    %c0_i32 = arith.constant 0 : i32
    %c0_i32_0 = arith.constant 0 : i32
    %c0_i32_1 = arith.constant 0 : i32
    %c0_i32_2 = arith.constant 0 : i32
    return %c0_i32, %c0_i32_0, %c0_i32_1 : i32, i32, i32
  }
  func.func @transform_8(%arg0: i32) -> (i32, i32, i32) {
    %c0_i32 = arith.constant 0 : i32
    %c0_i32_0 = arith.constant 0 : i32
    %c0_i32_1 = arith.constant 0 : i32
    %c0_i32_2 = arith.constant 0 : i32
    return %c0_i32, %c0_i32_0, %c0_i32_1 : i32, i32, i32
  }
  func.func @transform_9(%arg0: i32) -> (i32, i32, i32) {
    %c0_i32 = arith.constant 0 : i32
    %c0_i32_0 = arith.constant 0 : i32
    %c0_i32_1 = arith.constant 0 : i32
    %c0_i32_2 = arith.constant 0 : i32
    return %c0_i32, %c0_i32_0, %c0_i32_1 : i32, i32, i32
  }
  func.func @transform_10(%arg0: i32) -> (i32, i32, i32) {
    %c0_i32 = arith.constant 0 : i32
    %c0_i32_0 = arith.constant 0 : i32
    %c0_i32_1 = arith.constant 0 : i32
    %c0_i32_2 = arith.constant 0 : i32
    return %c0_i32, %c0_i32_0, %c0_i32_1 : i32, i32, i32
  }
  func.func @transform_11(%arg0: i32) -> (i32, i32, i32) {
    %c0_i32 = arith.constant 0 : i32
    %c0_i32_0 = arith.constant 0 : i32
    %c0_i32_1 = arith.constant 0 : i32
    %c0_i32_2 = arith.constant 0 : i32
    return %c0_i32, %c0_i32_0, %c0_i32_1 : i32, i32, i32
  }
  func.func @transform_12(%arg0: i32) -> (i32, i32, i32) {
    %c0_i32 = arith.constant 0 : i32
    %c0_i32_0 = arith.constant 0 : i32
    %c0_i32_1 = arith.constant 0 : i32
    %c0_i32_2 = arith.constant 0 : i32
    return %c0_i32, %c0_i32_0, %c0_i32_1 : i32, i32, i32
  }
  func.func @transform_13(%arg0: i32) -> (i32, i32, i32) {
    %c0_i32 = arith.constant 0 : i32
    %c0_i32_0 = arith.constant 0 : i32
    %c0_i32_1 = arith.constant 0 : i32
    %c0_i32_2 = arith.constant 0 : i32
    return %c0_i32, %c0_i32_0, %c0_i32_1 : i32, i32, i32
  }
  func.func @transform_14(%arg0: i32) -> (i32, i32, i32) {
    %c0_i32 = arith.constant 0 : i32
    %c0_i32_0 = arith.constant 0 : i32
    %c0_i32_1 = arith.constant 0 : i32
    %c0_i32_2 = arith.constant 0 : i32
    return %c0_i32, %c0_i32_0, %c0_i32_1 : i32, i32, i32
  }
  func.func @transform_15(%arg0: i32) -> (i32, i32, i32) {
    %c0_i32 = arith.constant 0 : i32
    %c0_i32_0 = arith.constant 0 : i32
    %c0_i32_1 = arith.constant 0 : i32
    %c0_i32_2 = arith.constant 0 : i32
    return %c0_i32, %c0_i32_0, %c0_i32_1 : i32, i32, i32
  }
  func.func @transform_16(%arg0: i32) -> (i32, i32, i32) {
    %c0_i32 = arith.constant 0 : i32
    %c0_i32_0 = arith.constant 0 : i32
    %c0_i32_1 = arith.constant 0 : i32
    %c0_i32_2 = arith.constant 0 : i32
    return %c0_i32, %c0_i32_0, %c0_i32_1 : i32, i32, i32
  }
  func.func @transform_17(%arg0: i32) -> (i32, i32, i32) {
    %c0_i32 = arith.constant 0 : i32
    %c0_i32_0 = arith.constant 0 : i32
    %c0_i32_1 = arith.constant 0 : i32
    %c0_i32_2 = arith.constant 0 : i32
    return %c0_i32, %c0_i32_0, %c0_i32_1 : i32, i32, i32
  }
  func.func @transform_18(%arg0: i32) -> (i32, i32, i32) {
    %c0_i32 = arith.constant 0 : i32
    %c0_i32_0 = arith.constant 0 : i32
    %c0_i32_1 = arith.constant 0 : i32
    %c0_i32_2 = arith.constant 0 : i32
    return %c0_i32, %c0_i32_0, %c0_i32_1 : i32, i32, i32
  }
  func.func @transform_19(%arg0: i32) -> (i32, i32, i32) {
    %c0_i32 = arith.constant 0 : i32
    %c0_i32_0 = arith.constant 0 : i32
    %c0_i32_1 = arith.constant 0 : i32
    %c0_i32_2 = arith.constant 0 : i32
    return %c0_i32, %c0_i32_0, %c0_i32_1 : i32, i32, i32
  }
  func.func @transform_20(%arg0: i32) -> (i32, i32) {
    %c0_i32 = arith.constant 0 : i32
    %c0_i32_0 = arith.constant 0 : i32
    %c0_i32_1 = arith.constant 0 : i32
    return %c0_i32, %c0_i32_0 : i32, i32
  }
  func.func @transform_21(%arg0: i32) -> (i32, i32) {
    %c0_i32 = arith.constant 0 : i32
    %c0_i32_0 = arith.constant 0 : i32
    %c0_i32_1 = arith.constant 0 : i32
    return %c0_i32, %c0_i32_0 : i32, i32
  }
  func.func @transform_22(%arg0: i32) -> (i32, i32) {
    %c0_i32 = arith.constant 0 : i32
    %c0_i32_0 = arith.constant 0 : i32
    %c0_i32_1 = arith.constant 0 : i32
    return %c0_i32, %c0_i32_0 : i32, i32
  }
}

</mosaic_0001>

<llo_original>
// kernel: bert_regressor_forward.1
$region0: #{bert_regressor_forward.1}
  #allocation0 [shape = 'u32[]', space=smem, size = 0x4, offset = 0x4, fixed_abs, tag = 'smem constant byte address 0x4 - core index']
  #allocation1 [shape = 'u32[72,128]{1,0:T(1,128)}', space=vmem, size = 0x9000, scoped, tag = 'internal scratch']
  #allocation2 [shape = 'f32[4,16,32]{2,1,0:T(8,128)}', space=vmem, size = 0x8000, scoped, tag = 'scratch operand']
  #allocation3 [shape = 'f32[4,16,32]{2,1,0:T(8,128)}', space=vmem, size = 0x8000, scoped, tag = 'scratch operand']
  #allocation4 [shape = 'f32[4,16,32]{2,1,0:T(8,128)}', space=vmem, size = 0x8000, scoped, tag = 'scratch operand']
  %s0 = inlined_call_operand.vmem [shape: f32[16,128], index: 0, kind: input, shape index: {}]
  %s1 = inlined_call_operand.vmem [shape: f32[4,16,16], index: 1, kind: input, shape index: {}]
  %s2 = inlined_call_operand.vmem [shape: f32[1,128], index: 2, kind: input, shape index: {}]
  %s3 = inlined_call_operand.vmem [shape: f32[1,128], index: 3, kind: input, shape index: {}]
  %s4 = inlined_call_operand.vmem [shape: f32[2,128,128], index: 4, kind: input, shape index: {}]
  %s5 = inlined_call_operand.vmem [shape: f32[2,1,128], index: 5, kind: input, shape index: {}]
  %s6 = inlined_call_operand.hbm [shape: f32[2,128,128], index: 6, kind: input, shape index: {}]
  %s7 = inlined_call_operand.vmem [shape: f32[2,1,128], index: 7, kind: input, shape index: {}]
  %s8 = inlined_call_operand.hbm [shape: f32[2,128,128], index: 8, kind: input, shape index: {}]
  %s9 = inlined_call_operand.vmem [shape: f32[2,1,128], index: 9, kind: input, shape index: {}]
  %s10 = inlined_call_operand.hbm [shape: f32[2,128,128], index: 10, kind: input, shape index: {}]
  %s11 = inlined_call_operand.vmem [shape: f32[2,1,128], index: 11, kind: input, shape index: {}]
  %s12 = inlined_call_operand.vmem [shape: f32[2,1,128], index: 12, kind: input, shape index: {}]
  %s13 = inlined_call_operand.vmem [shape: f32[2,1,128], index: 13, kind: input, shape index: {}]
  %s14 = inlined_call_operand.hbm [shape: f32[2,128,256], index: 14, kind: input, shape index: {}]
  %s15 = inlined_call_operand.vmem [shape: f32[2,1,256], index: 15, kind: input, shape index: {}]
  %s16 = inlined_call_operand.hbm [shape: f32[2,256,128], index: 16, kind: input, shape index: {}]
  %s17 = inlined_call_operand.vmem [shape: f32[2,1,128], index: 17, kind: input, shape index: {}]
  %s18 = inlined_call_operand.vmem [shape: f32[2,1,128], index: 18, kind: input, shape index: {}]
  %s19 = inlined_call_operand.vmem [shape: f32[2,1,128], index: 19, kind: input, shape index: {}]
  %s20 = inlined_call_operand.vmem [shape: f32[128,128], index: 20, kind: input, shape index: {}]
  %s21 = inlined_call_operand.vmem [shape: f32[1,128], index: 21, kind: input, shape index: {}]
  %s22 = inlined_call_operand.vmem [shape: f32[16,128], index: 22, kind: output, shape index: {}]
  %s23 = sld [smem:[#allocation0]]
  $region118: #{bert_regressor_forward.1} parent=0
    _
  %s25 = ssub.s32 1, %s23
  %s26 = scalar_select 0, %s25, %s23
  $region1: #{bert_regressor_forward.1} parent=0
    #allocation5 [shape = 'u8[131072]{0}', space=vmem, size = 0x20000, scoped, tag = 'input window, operand 6, single buffered']
    #allocation6 [shape = 's32[1]{0}', space=sflag, size = 0x4, scoped, tag = 'scoped memory for bert_regressor_forward.1']
    #allocation7 [shape = 'u8[131072]{0}', space=vmem, size = 0x20000, scoped, tag = 'input window, operand 8, single buffered']
    #allocation8 [shape = 's32[1]{0}', space=sflag, size = 0x4, scoped, tag = 'scoped memory for bert_regressor_forward.1']
    #allocation9 [shape = 'u8[131072]{0}', space=vmem, size = 0x20000, scoped, tag = 'input window, operand 10, single buffered']
    #allocation10 [shape = 'u8[262144]{0}', space=vmem, size = 0x40000, scoped, tag = 'input window, operand 14, single buffered']
    #allocation11 [shape = 's32[1]{0}', space=sflag, size = 0x4, scoped, tag = 'scoped memory for bert_regressor_forward.1']
    #allocation12 [shape = 'u8[262144]{0}', space=vmem, size = 0x40000, scoped, tag = 'input window, operand 16, single buffered']
    %27 = vsyncpa [#allocation6], 0
    %28 = vsyncpa [#allocation8], 0
    %29 = vsyncpa [#allocation11], 0
    // Predicated region
    $region2: #{bert_regressor_forward.1} parent=1 // pred_check
      _
    $region3: #{bert_regressor_forward.1} parent=1 // pred_check_branch
      %31 = sbr.rel (0) target = $region5
    $region4: #{bert_regressor_forward.1} parent=1 // pred_region
      _
    $region5: #{bert_regressor_forward.1} parent=1 // pred_fallthru
      _
    // Predicated region
    $region6: #{bert_regressor_forward.1} parent=1 // pred_check
      _
    $region7: #{bert_regressor_forward.1} parent=1 // pred_check_branch
      %33 = sbr.rel (0) target = $region9
    $region8: #{bert_regressor_forward.1} parent=1 // pred_region
      _
    $region9: #{bert_regressor_forward.1} parent=1 // pred_fallthru
      _
    // Predicated region
    $region10: #{bert_regressor_forward.1} parent=1 // pred_check
      _
    $region11: #{bert_regressor_forward.1} parent=1 // pred_check_branch
      %35 = sbr.rel (0) target = $region13
    $region12: #{bert_regressor_forward.1} parent=1 // pred_region
      _
    $region13: #{bert_regressor_forward.1} parent=1 // pred_fallthru
      _
    // Predicated region
    $region14: #{bert_regressor_forward.1} parent=1 // pred_check
      _
    $region15: #{bert_regressor_forward.1} parent=1 // pred_check_branch
      %37 = sbr.rel (0) target = $region17
    $region16: #{bert_regressor_forward.1} parent=1 // pred_region
      _
    $region17: #{bert_regressor_forward.1} parent=1 // pred_fallthru
      _
    // Predicated region
    $region18: #{bert_regressor_forward.1} parent=1 // pred_check
      _
    $region19: #{bert_regressor_forward.1} parent=1 // pred_check_branch
      %39 = sbr.rel (0) target = $region21
    $region20: #{bert_regressor_forward.1} parent=1 // pred_region
      _
    $region21: #{bert_regressor_forward.1} parent=1 // pred_fallthru
      _
    // Predicated region
    $region22: #{bert_regressor_forward.1} parent=1 // pred_check
      _
    $region23: #{bert_regressor_forward.1} parent=1 // pred_check_branch
      %41 = sbr.rel (0) target = $region25
    $region24: #{bert_regressor_forward.1} parent=1 // pred_region
      _
    $region25: #{bert_regressor_forward.1} parent=1 // pred_fallthru
      _
    // Predicated region
    $region26: #{bert_regressor_forward.1} parent=1 // pred_check
      _
    $region27: #{bert_regressor_forward.1} parent=1 // pred_check_branch
      %43 = sbr.rel (0) target = $region29
    $region28: #{bert_regressor_forward.1} parent=1 // pred_region
      %45 = vsyncadd [#allocation6], 0
      %s46 = sshll.u32 %s6, 4
      %s47 = int_to_ptr.hbm [resolvable:$true] %s46
      %s48 = sshll.u32 [#allocation5], 4
      %s49 = int_to_ptr.vmem [resolvable:$true] %s48
      %54 = dma.hbm_to_vmem [thread:$0]  %s47, 4096, %s49, [#allocation6], 128, 128, 8
    $region29: #{bert_regressor_forward.1} parent=1 // pred_fallthru
      _
    // Predicated region
    $region30: #{bert_regressor_forward.1} parent=1 // pred_check
      _
    $region31: #{bert_regressor_forward.1} parent=1 // pred_check_branch
      %56 = sbr.rel (0) target = $region33
    $region32: #{bert_regressor_forward.1} parent=1 // pred_region
      _
    $region33: #{bert_regressor_forward.1} parent=1 // pred_fallthru
      _
    // Predicated region
    $region34: #{bert_regressor_forward.1} parent=1 // pred_check
      _
    $region35: #{bert_regressor_forward.1} parent=1 // pred_check_branch
      %58 = sbr.rel (0) target = $region37
    $region36: #{bert_regressor_forward.1} parent=1 // pred_region
      %60 = vsyncadd [#allocation8], 0
      %s61 = sshll.u32 %s8, 4
      %s62 = int_to_ptr.hbm [resolvable:$true] %s61
      %s63 = sshll.u32 [#allocation7], 4
      %s64 = int_to_ptr.vmem [resolvable:$true] %s63
      %69 = dma.hbm_to_vmem [thread:$0]  %s62, 4096, %s64, [#allocation8], 128, 128, 8
    $region37: #{bert_regressor_forward.1} parent=1 // pred_fallthru
      _
    // Predicated region
    $region38: #{bert_regressor_forward.1} parent=1 // pred_check
      _
    $region39: #{bert_regressor_forward.1} parent=1 // pred_check_branch
      %71 = sbr.rel (0) target = $region41
    $region40: #{bert_regressor_forward.1} parent=1 // pred_region
      _
    $region41: #{bert_regressor_forward.1} parent=1 // pred_fallthru
      _
    // Predicated region
    $region42: #{bert_regressor_forward.1} parent=1 // pred_check
      _
    $region43: #{bert_regressor_forward.1} parent=1 // pred_check_branch
      %73 = sbr.rel (0) target = $region45
    $region44: #{bert_regressor_forward.1} parent=1 // pred_region
      %75 = vsyncadd [#allocation8], 0
      %s76 = sshll.u32 %s10, 4
      %s77 = int_to_ptr.hbm [resolvable:$true] %s76
      %s78 = sshll.u32 [#allocation9], 4
      %s79 = int_to_ptr.vmem [resolvable:$true] %s78
      %84 = dma.hbm_to_vmem [thread:$0]  %s77, 4096, %s79, [#allocation8], 128, 128, 8
    $region45: #{bert_regressor_forward.1} parent=1 // pred_fallthru
      _
    // Predicated region
    $region46: #{bert_regressor_forward.1} parent=1 // pred_check
      _
    $region47: #{bert_regressor_forward.1} parent=1 // pred_check_branch
      %86 = sbr.rel (0) target = $region49
    $region48: #{bert_regressor_forward.1} parent=1 // pred_region
      _
    $region49: #{bert_regressor_forward.1} parent=1 // pred_fallthru
      _
    // Predicated region
    $region50: #{bert_regressor_forward.1} parent=1 // pred_check
      _
    $region51: #{bert_regressor_forward.1} parent=1 // pred_check_branch
      %88 = sbr.rel (0) target = $region53
    $region52: #{bert_regressor_forward.1} parent=1 // pred_region
      _
    $region53: #{bert_regressor_forward.1} parent=1 // pred_fallthru
      _
    // Predicated region
    $region54: #{bert_regressor_forward.1} parent=1 // pred_check
      _
    $region55: #{bert_regressor_forward.1} parent=1 // pred_check_branch
      %90 = sbr.rel (0) target = $region57
    $region56: #{bert_regressor_forward.1} parent=1 // pred_region
      _
    $region57: #{bert_regressor_forward.1} parent=1 // pred_fallthru
      _
    // Predicated region
    $region58: #{bert_regressor_forward.1} parent=1 // pred_check
      _
    $region59: #{bert_regressor_forward.1} parent=1 // pred_check_branch
      %92 = sbr.rel (0) target = $region61
    $region60: #{bert_regressor_forward.1} parent=1 // pred_region
      %94 = vsyncadd [#allocation11], 0
      %s95 = sshll.u32 %s14, 4
      %s96 = int_to_ptr.hbm [resolvable:$true] %s95
      %s97 = sshll.u32 [#allocation10], 4
      %s98 = int_to_ptr.vmem [resolvable:$true] %s97
      %103 = dma.hbm_to_vmem [thread:$0]  %s96, 8192, %s98, [#allocation11], 256, 256, 16
    $region61: #{bert_regressor_forward.1} parent=1 // pred_fallthru
      _
    // Predicated region
    $region62: #{bert_regressor_forward.1} parent=1 // pred_check
      _
    $region63: #{bert_regressor_forward.1} parent=1 // pred_check_branch
      %105 = sbr.rel (0) target = $region65
    $region64: #{bert_regressor_forward.1} parent=1 // pred_region
      _
    $region65: #{bert_regressor_forward.1} parent=1 // pred_fallthru
      _
    // Predicated region
    $region66: #{bert_regressor_forward.1} parent=1 // pred_check
      _
    $region67: #{bert_regressor_forward.1} parent=1 // pred_check_branch
      %107 = sbr.rel (0) target = $region69
    $region68: #{bert_regressor_forward.1} parent=1 // pred_region
      %109 = vsyncadd [#allocation11], 0
      %s110 = sshll.u32 %s16, 4
      %s111 = int_to_ptr.hbm [resolvable:$true] %s110
      %s112 = sshll.u32 [#allocation12], 4
      %s113 = int_to_ptr.vmem [resolvable:$true] %s112
      %118 = dma.hbm_to_vmem [thread:$0]  %s111, 8192, %s113, [#allocation11], 128, 128, 8
    $region69: #{bert_regressor_forward.1} parent=1 // pred_fallthru
      _
    // Predicated region
    $region70: #{bert_regressor_forward.1} parent=1 // pred_check
      _
    $region71: #{bert_regressor_forward.1} parent=1 // pred_check_branch
      %120 = sbr.rel (0) target = $region73
    $region72: #{bert_regressor_forward.1} parent=1 // pred_region
      _
    $region73: #{bert_regressor_forward.1} parent=1 // pred_fallthru
      _
    // Predicated region
    $region74: #{bert_regressor_forward.1} parent=1 // pred_check
      _
    $region75: #{bert_regressor_forward.1} parent=1 // pred_check_branch
      %122 = sbr.rel (0) target = $region77
    $region76: #{bert_regressor_forward.1} parent=1 // pred_region
      _
    $region77: #{bert_regressor_forward.1} parent=1 // pred_fallthru
      _
    // Predicated region
    $region78: #{bert_regressor_forward.1} parent=1 // pred_check
      _
    $region79: #{bert_regressor_forward.1} parent=1 // pred_check_branch
      %124 = sbr.rel (0) target = $region81
    $region80: #{bert_regressor_forward.1} parent=1 // pred_region
      _
    $region81: #{bert_regressor_forward.1} parent=1 // pred_fallthru
      _
    // Predicated region
    $region82: #{bert_regressor_forward.1} parent=1 // pred_check
      _
    $region83: #{bert_regressor_forward.1} parent=1 // pred_check_branch
      %126 = sbr.rel (0) target = $region85
    $region84: #{bert_regressor_forward.1} parent=1 // pred_region
      _
    $region85: #{bert_regressor_forward.1} parent=1 // pred_fallthru
      _
    // Predicated region
    $region86: #{bert_regressor_forward.1} parent=1 // pred_check
      _
    $region87: #{bert_regressor_forward.1} parent=1 // pred_check_branch
      %128 = sbr.rel (0) target = $region89
    $region88: #{bert_regressor_forward.1} parent=1 // pred_region
      _
    $region89: #{bert_regressor_forward.1} parent=1 // pred_fallthru
      _
    // Predicated region
    $region90: #{bert_regressor_forward.1} parent=1 // pred_check
      _
    $region91: #{bert_regressor_forward.1} parent=1 // pred_check_branch
      %130 = sbr.rel (0) target = $region93
    $region92: #{bert_regressor_forward.1} parent=1 // pred_region
      %132 = dma.done [#allocation6], 4096
    $region93: #{bert_regressor_forward.1} parent=1 // pred_fallthru
      _
    // Predicated region
    $region94: #{bert_regressor_forward.1} parent=1 // pred_check
      _
    $region95: #{bert_regressor_forward.1} parent=1 // pred_check_branch
      %134 = sbr.rel (0) target = $region97
    $region96: #{bert_regressor_forward.1} parent=1 // pred_region
      %136 = dma.done [#allocation8], 4096
    $region97: #{bert_regressor_forward.1} parent=1 // pred_fallthru
      _
    // Predicated region
    $region98: #{bert_regressor_forward.1} parent=1 // pred_check
      _
    $region99: #{bert_regressor_forward.1} parent=1 // pred_check_branch
      %138 = sbr.rel (0) target = $region101
    $region100: #{bert_regressor_forward.1} parent=1 // pred_region
      %140 = dma.done [#allocation8], 4096
    $region101: #{bert_regressor_forward.1} parent=1 // pred_fallthru
      _
    // Predicated region
    $region102: #{bert_regressor_forward.1} parent=1 // pred_check
      _
    $region103: #{bert_regressor_forward.1} parent=1 // pred_check_branch
      %142 = sbr.rel (0) target = $region105
    $region104: #{bert_regressor_forward.1} parent=1 // pred_region
      %144 = dma.done [#allocation11], 8192
    $region105: #{bert_regressor_forward.1} parent=1 // pred_fallthru
      _
    // Predicated region
    $region106: #{bert_regressor_forward.1} parent=1 // pred_check
      _
    $region107: #{bert_regressor_forward.1} parent=1 // pred_check_branch
      %146 = sbr.rel (0) target = $region109
    $region108: #{bert_regressor_forward.1} parent=1 // pred_region
      %148 = dma.done [#allocation11], 8192
    $region109: #{bert_regressor_forward.1} parent=1 // pred_fallthru
      _
    %v149 = vld [vmem:[%s1] sm:$0xff]
    %v150 = vld [vmem:[%s1 + $0x8] sm:$0xff]
    %v151 = vld [vmem:[%s1 + $0x10] sm:$0xff]
    %v152 = vld [vmem:[%s1 + $0x18] sm:$0xff]
    %v153 = vld [vmem:[%s1 + $0x20] sm:$0xff]
    %v154 = vld [vmem:[%s1 + $0x28] sm:$0xff]
    %v155 = vld [vmem:[%s1 + $0x30] sm:$0xff]
    %v156 = vld [vmem:[%s1 + $0x38] sm:$0xff]
    %v157 = vld [vmem:[%s0] sm:$0xff]
    %v158 = vld [vmem:[%s0 + $0x8] sm:$0xff]
    %v159 = vld [vmem:[%s2] sm:$0x1]
    %v160 = vld [vmem:[%s3] sm:$0x1]
    %161 = vadd.xlane.f32.xlu0 %v157
    %v162 = vpop.xlane.xlu0 %161
    %163 = vadd.xlane.f32.xlu0 %v158
    %v164 = vpop.xlane.xlu0 %163
    %v165 = vrcp.pop 128.0
    %v166 = vmul.f32 128.0, %v165
    %v167 = vsub.f32 1.0, %v166
    %v168 = vmul.f32 %v165, %v167
    %v169 = vadd.f32 %v165, %v168
    %vm170 = vweird.f32 %v165
    %v171 = vsel %vm170, %v165, %v169
    %v172 = vmul.f32 %v162, %v171
    %v173 = vmul.f32 %v164, %v171
    %v174 = vsub.f32 %v157, %v172
    %v175 = vsub.f32 %v158, %v173
    %v176 = vmul.f32 %v174, %v174
    %v177 = vmul.f32 %v175, %v175
    %178 = vadd.xlane.f32.xlu0 %v176
    %v179 = vpop.xlane.xlu0 %178
    %180 = vadd.xlane.f32.xlu0 %v177
    %v181 = vpop.xlane.xlu0 %180
    %v182 = vmul.f32 %v179, %v171
    %v183 = vmul.f32 %v181, %v171
    %v184 = vadd.f32 %v182, 1e-05
    %v185 = vadd.f32 %v183, 1e-05
    %v186 = vrsqrt.pop %v184
    %v187 = vmul.f32 %v186, %v184
    %v188 = vmul.f32 %v187, %v186
    %v189 = vmul.f32 0.5, %v188
    %v190 = vsub.f32 1.5, %v189
    %v191 = vmul.f32 %v186, %v190
    %vm192 = vweird.f32 %v184
    %vm193 = vweird.f32 %v186
    %vm194 = vmor %vm192, %vm193
    %v195 = vsel %vm194, %v186, %v191
    %v196 = vrsqrt.pop %v185
    %v197 = vmul.f32 %v196, %v185
    %v198 = vmul.f32 %v197, %v196
    %v199 = vmul.f32 0.5, %v198
    %v200 = vsub.f32 1.5, %v199
    %v201 = vmul.f32 %v196, %v200
    %vm202 = vweird.f32 %v185
    %vm203 = vweird.f32 %v196
    %vm204 = vmor %vm202, %vm203
    %v205 = vsel %vm204, %v196, %v201
    %v206 = vmul.f32 %v174, %v195
    %v207 = vmul.f32 %v175, %v205
    %v209 = vperm.slane %v159, 0
    %v211 = vmul.f32 %v206, %v209
    %v212 = vmul.f32 %v207, %v209
    %v214 = vperm.slane %v160, 0
    %v216 = vadd.f32 %v211, %v214
    %v217 = vadd.f32 %v212, %v214
    %v218 = vld [vmem:[%s4] sm:$0xff]
    %v219 = vld [vmem:[%s4 + $0x8] sm:$0xff]
    %v220 = vld [vmem:[%s4 + $0x10] sm:$0xff]
    %v221 = vld [vmem:[%s4 + $0x18] sm:$0xff]
    %v222 = vld [vmem:[%s4 + $0x20] sm:$0xff]
    %v223 = vld [vmem:[%s4 + $0x28] sm:$0xff]
    %v224 = vld [vmem:[%s4 + $0x30] sm:$0xff]
    %v225 = vld [vmem:[%s4 + $0x38] sm:$0xff]
    %v226 = vld [vmem:[%s4 + $0x40] sm:$0xff]
    %v227 = vld [vmem:[%s4 + $0x48] sm:$0xff]
    %v228 = vld [vmem:[%s4 + $0x50] sm:$0xff]
    %v229 = vld [vmem:[%s4 + $0x58] sm:$0xff]
    %v230 = vld [vmem:[%s4 + $0x60] sm:$0xff]
    %v231 = vld [vmem:[%s4 + $0x68] sm:$0xff]
    %v232 = vld [vmem:[%s4 + $0x70] sm:$0xff]
    %v233 = vld [vmem:[%s4 + $0x78] sm:$0xff]
    %v234 = vld [vmem:[%s5] sm:$0x1]
    %v236 = vperm.slane %v234, 0
    %238 = vmatpush.msra.mxu0 %v233
    %239 = vmatpush.msra.mxu0 %v232
    %240 = vmatpush.msra.mxu0 %v231
    %241 = vmatpush.msra.mxu0 %v230
    %242 = vmatpush.msra.mxu0 %v229
    %243 = vmatpush.msra.mxu0 %v228
    %244 = vmatpush.msra.mxu0 %v227
    %245 = vmatpush.msra.mxu0 %v226
    %246 = vmatpush.msra.mxu0 %v225
    %247 = vmatpush.msra.mxu0 %v224
    %248 = vmatpush.msra.mxu0 %v223
    %249 = vmatpush.msra.mxu0 %v222
    %250 = vmatpush.msra.mxu0 %v221
    %251 = vmatpush.msra.mxu0 %v220
    %252 = vmatpush.msra.mxu0 %v219
    %253 = vmatpush.msra.mxu0 %v218
    %254 = vmatmul.f32.gmra.mxu0 %v216
    %v255 = vpop.f32.mrf.mxu0
    %v256 = vadd.f32 %v236, %v255
    %257 = vmatmul.f32.gmra.mxu0 %v217
    %v258 = vpop.f32.mrf.mxu0
    %v259 = vadd.f32 %v236, %v258
    %260 = vdwg.mxu0
    %v261 = vld [vmem:[#allocation5] sm:$0xff]
    %v262 = vld [vmem:[#allocation5 + $0x8] sm:$0xff]
    %v263 = vld [vmem:[#allocation5 + $0x10] sm:$0xff]
    %v264 = vld [vmem:[#allocation5 + $0x18] sm:$0xff]
    %v265 = vld [vmem:[#allocation5 + $0x20] sm:$0xff]
    %v266 = vld [vmem:[#allocation5 + $0x28] sm:$0xff]
    %v267 = vld [vmem:[#allocation5 + $0x30] sm:$0xff]
    %v268 = vld [vmem:[#allocation5 + $0x38] sm:$0xff]
    %v269 = vld [vmem:[#allocation5 + $0x40] sm:$0xff]
    %v270 = vld [vmem:[#allocation5 + $0x48] sm:$0xff]
    %v271 = vld [vmem:[#allocation5 + $0x50] sm:$0xff]
    %v272 = vld [vmem:[#allocation5 + $0x58] sm:$0xff]
    %v273 = vld [vmem:[#allocation5 + $0x60] sm:$0xff]
    %v274 = vld [vmem:[#allocation5 + $0x68] sm:$0xff]
    %v275 = vld [vmem:[#allocation5 + $0x70] sm:$0xff]
    %v276 = vld [vmem:[#allocation5 + $0x78] sm:$0xff]
    %v277 = vld [vmem:[%s7] sm:$0x1]
    %v279 = vperm.slane %v277, 0
    %281 = vmatpush.msra.mxu0 %v276
    %282 = vmatpush.msra.mxu0 %v275
    %283 = vmatpush.msra.mxu0 %v274
    %284 = vmatpush.msra.mxu0 %v273
    %285 = vmatpush.msra.mxu0 %v272
    %286 = vmatpush.msra.mxu0 %v271
    %287 = vmatpush.msra.mxu0 %v270
    %288 = vmatpush.msra.mxu0 %v269
    %289 = vmatpush.msra.mxu0 %v268
    %290 = vmatpush.msra.mxu0 %v267
    %291 = vmatpush.msra.mxu0 %v266
    %292 = vmatpush.msra.mxu0 %v265
    %293 = vmatpush.msra.mxu0 %v264
    %294 = vmatpush.msra.mxu0 %v263
    %295 = vmatpush.msra.mxu0 %v262
    %296 = vmatpush.msra.mxu0 %v261
    %297 = vmatmul.f32.gmra.mxu0 %v216
    %v298 = vpop.f32.mrf.mxu0
    %v299 = vadd.f32 %v279, %v298
    %300 = vmatmul.f32.gmra.mxu0 %v217
    %v301 = vpop.f32.mrf.mxu0
    %v302 = vadd.f32 %v279, %v301
    %303 = vdwg.mxu0
    %v304 = vld [vmem:[#allocation7] sm:$0xff]
    %v305 = vld [vmem:[#allocation7 + $0x8] sm:$0xff]
    %v306 = vld [vmem:[#allocation7 + $0x10] sm:$0xff]
    %v307 = vld [vmem:[#allocation7 + $0x18] sm:$0xff]
    %v308 = vld [vmem:[#allocation7 + $0x20] sm:$0xff]
    %v309 = vld [vmem:[#allocation7 + $0x28] sm:$0xff]
    %v310 = vld [vmem:[#allocation7 + $0x30] sm:$0xff]
    %v311 = vld [vmem:[#allocation7 + $0x38] sm:$0xff]
    %v312 = vld [vmem:[#allocation7 + $0x40] sm:$0xff]
    %v313 = vld [vmem:[#allocation7 + $0x48] sm:$0xff]
    %v314 = vld [vmem:[#allocation7 + $0x50] sm:$0xff]
    %v315 = vld [vmem:[#allocation7 + $0x58] sm:$0xff]
    %v316 = vld [vmem:[#allocation7 + $0x60] sm:$0xff]
    %v317 = vld [vmem:[#allocation7 + $0x68] sm:$0xff]
    %v318 = vld [vmem:[#allocation7 + $0x70] sm:$0xff]
    %v319 = vld [vmem:[#allocation7 + $0x78] sm:$0xff]
    %v320 = vld [vmem:[%s9] sm:$0x1]
    %v322 = vperm.slane %v320, 0
    %324 = vmatpush.msra.mxu0 %v319
    %325 = vmatpush.msra.mxu0 %v318
    %326 = vmatpush.msra.mxu0 %v317
    %327 = vmatpush.msra.mxu0 %v316
    %328 = vmatpush.msra.mxu0 %v315
    %329 = vmatpush.msra.mxu0 %v314
    %330 = vmatpush.msra.mxu0 %v313
    %331 = vmatpush.msra.mxu0 %v312
    %332 = vmatpush.msra.mxu0 %v311
    %333 = vmatpush.msra.mxu0 %v310
    %334 = vmatpush.msra.mxu0 %v309
    %335 = vmatpush.msra.mxu0 %v308
    %336 = vmatpush.msra.mxu0 %v307
    %337 = vmatpush.msra.mxu0 %v306
    %338 = vmatpush.msra.mxu0 %v305
    %339 = vmatpush.msra.mxu0 %v304
    %340 = vmatmul.f32.gmra.mxu0 %v216
    %v341 = vpop.f32.mrf.mxu0
    %v342 = vadd.f32 %v322, %v341
    %343 = vmatmul.f32.gmra.mxu0 %v217
    %v344 = vpop.f32.mrf.mxu0
    %v345 = vadd.f32 %v322, %v344
    %346 = vdwg.mxu0
    %vm347 = vcmask 261120
    %348 = vst.msk [vmem:[#allocation2] sm:$0xff] %vm347, %v256
    %349 = vst.msk [vmem:[#allocation2 + $0x8] sm:$0xff] %vm347, %v259
    %350 = vst.msk [vmem:[#allocation3] sm:$0xff] %vm347, %v299
    %351 = vst.msk [vmem:[#allocation3 + $0x8] sm:$0xff] %vm347, %v302
    %352 = vst.msk [vmem:[#allocation4] sm:$0xff] %vm347, %v342
    %353 = vst.msk [vmem:[#allocation4 + $0x8] sm:$0xff] %vm347, %v345
    %356 = vrot.lane.b32.xlu0 %v256, 96
    %v357 = vpop.permute.xlu0 %356
    %358 = vrot.lane.b32.xlu0 %v259, 96
    %v359 = vpop.permute.xlu0 %358
    %s362 = scalar_lea.vmem [#allocation2], 16
    %363 = vst.msk [vmem:[%s362] sm:$0xff] %vm347, %v357
    %364 = vst.msk [vmem:[%s362 + $0x8] sm:$0xff] %vm347, %v359
    %367 = vrot.lane.b32.xlu0 %v299, 96
    %v368 = vpop.permute.xlu0 %367
    %369 = vrot.lane.b32.xlu0 %v302, 96
    %v370 = vpop.permute.xlu0 %369
    %s373 = scalar_lea.vmem [#allocation3], 16
    %374 = vst.msk [vmem:[%s373] sm:$0xff] %vm347, %v368
    %375 = vst.msk [vmem:[%s373 + $0x8] sm:$0xff] %vm347, %v370
    %378 = vrot.lane.b32.xlu0 %v342, 96
    %v379 = vpop.permute.xlu0 %378
    %380 = vrot.lane.b32.xlu0 %v345, 96
    %v381 = vpop.permute.xlu0 %380
    %s384 = scalar_lea.vmem [#allocation4], 16
    %385 = vst.msk [vmem:[%s384] sm:$0xff] %vm347, %v379
    %386 = vst.msk [vmem:[%s384 + $0x8] sm:$0xff] %vm347, %v381
    %387 = vrot.lane.b32.xlu0 %v256, 64
    %v388 = vpop.permute.xlu0 %387
    %389 = vrot.lane.b32.xlu0 %v259, 64
    %v390 = vpop.permute.xlu0 %389
    %s393 = scalar_lea.vmem [#allocation2], 32
    %394 = vst.msk [vmem:[%s393] sm:$0xff] %vm347, %v388
    %395 = vst.msk [vmem:[%s393 + $0x8] sm:$0xff] %vm347, %v390
    %396 = vrot.lane.b32.xlu0 %v299, 64
    %v397 = vpop.permute.xlu0 %396
    %398 = vrot.lane.b32.xlu0 %v302, 64
    %v399 = vpop.permute.xlu0 %398
    %s402 = scalar_lea.vmem [#allocation3], 32
    %403 = vst.msk [vmem:[%s402] sm:$0xff] %vm347, %v397
    %404 = vst.msk [vmem:[%s402 + $0x8] sm:$0xff] %vm347, %v399
    %405 = vrot.lane.b32.xlu0 %v342, 64
    %v406 = vpop.permute.xlu0 %405
    %407 = vrot.lane.b32.xlu0 %v345, 64
    %v408 = vpop.permute.xlu0 %407
    %s411 = scalar_lea.vmem [#allocation4], 32
    %412 = vst.msk [vmem:[%s411] sm:$0xff] %vm347, %v406
    %413 = vst.msk [vmem:[%s411 + $0x8] sm:$0xff] %vm347, %v408
    %414 = vrot.lane.b32.xlu0 %v256, 32
    %v415 = vpop.permute.xlu0 %414
    %416 = vrot.lane.b32.xlu0 %v259, 32
    %v417 = vpop.permute.xlu0 %416
    %s420 = scalar_lea.vmem [#allocation2], 48
    %421 = vst.msk [vmem:[%s420] sm:$0xff] %vm347, %v415
    %422 = vst.msk [vmem:[%s420 + $0x8] sm:$0xff] %vm347, %v417
    %423 = vrot.lane.b32.xlu0 %v299, 32
    %v424 = vpop.permute.xlu0 %423
    %425 = vrot.lane.b32.xlu0 %v302, 32
    %v426 = vpop.permute.xlu0 %425
    %s429 = scalar_lea.vmem [#allocation3], 48
    %430 = vst.msk [vmem:[%s429] sm:$0xff] %vm347, %v424
    %431 = vst.msk [vmem:[%s429 + $0x8] sm:$0xff] %vm347, %v426
    %432 = vrot.lane.b32.xlu0 %v342, 32
    %v433 = vpop.permute.xlu0 %432
    %434 = vrot.lane.b32.xlu0 %v345, 32
    %v435 = vpop.permute.xlu0 %434
    %s438 = scalar_lea.vmem [#allocation4], 48
    %439 = vst.msk [vmem:[%s438] sm:$0xff] %vm347, %v433
    %440 = vst.msk [vmem:[%s438 + $0x8] sm:$0xff] %vm347, %v435
    %v441 = vld [vmem:[#allocation2] sm:$0xff]
    %v442 = vld [vmem:[#allocation2 + $0x8] sm:$0xff]
    %v443 = vld [vmem:[#allocation2 + $0x10] sm:$0xff]
    %v444 = vld [vmem:[#allocation2 + $0x18] sm:$0xff]
    %v445 = vld [vmem:[#allocation2 + $0x20] sm:$0xff]
    %v446 = vld [vmem:[#allocation2 + $0x28] sm:$0xff]
    %v447 = vld [vmem:[#allocation2 + $0x30] sm:$0xff]
    %v448 = vld [vmem:[#allocation2 + $0x38] sm:$0xff]
    %v449 = vld [vmem:[#allocation3] sm:$0xff]
    %v450 = vld [vmem:[#allocation3 + $0x8] sm:$0xff]
    %v451 = vld [vmem:[#allocation3 + $0x10] sm:$0xff]
    %v452 = vld [vmem:[#allocation3 + $0x18] sm:$0xff]
    %v453 = vld [vmem:[#allocation3 + $0x20] sm:$0xff]
    %v454 = vld [vmem:[#allocation3 + $0x28] sm:$0xff]
    %v455 = vld [vmem:[#allocation3 + $0x30] sm:$0xff]
    %v456 = vld [vmem:[#allocation3 + $0x38] sm:$0xff]
    %v457 = vld [vmem:[#allocation4] sm:$0xff]
    %v458 = vld [vmem:[#allocation4 + $0x8] sm:$0xff]
    %v459 = vld [vmem:[#allocation4 + $0x10] sm:$0xff]
    %v460 = vld [vmem:[#allocation4 + $0x18] sm:$0xff]
    %v461 = vld [vmem:[#allocation4 + $0x20] sm:$0xff]
    %v462 = vld [vmem:[#allocation4 + $0x28] sm:$0xff]
    %v463 = vld [vmem:[#allocation4 + $0x30] sm:$0xff]
    %v464 = vld [vmem:[#allocation4 + $0x38] sm:$0xff]
    %v466 = vsel %vm347, %v441, 0
    %v469 = vsel %vm347, %v442, 0
    %v472 = vsel %vm347, %v449, 0
    %v475 = vsel %vm347, %v450, 0
    %477 = vmatpush.xpose.msra.mxu0 0.0
    %478 = vmatpush.xpose.msra.mxu0 0.0
    %479 = vmatpush.xpose.msra.mxu0 0.0
    %480 = vmatpush.xpose.msra.mxu0 0.0
    %481 = vmatpush.xpose.msra.mxu0 0.0
    %482 = vmatpush.xpose.msra.mxu0 0.0
    %483 = vmatpush.xpose.msra.mxu0 0.0
    %484 = vmatpush.xpose.msra.mxu0 0.0
    %485 = vmatpush.xpose.msra.mxu0 0.0
    %486 = vmatpush.xpose.msra.mxu0 0.0
    %487 = vmatpush.xpose.msra.mxu0 0.0
    %488 = vmatpush.xpose.msra.mxu0 0.0
    %489 = vmatpush.xpose.msra.mxu0 0.0
    %490 = vmatpush.xpose.msra.mxu0 0.0
    %491 = vmatpush.xpose.msra.mxu0 %v475
    %492 = vmatpush.xpose.msra.mxu0 %v472
    %493 = vmatmul.f32.gmra.mxu0 %v466
    %v494 = vpop.f32.mrf.mxu0
    %v495 = vadd.f32 0.0, %v494
    %496 = vmatmul.f32.gmra.mxu0 %v469
    %v497 = vpop.f32.mrf.mxu0
    %v498 = vadd.f32 0.0, %v497
    %499 = vdwg.mxu0
    %v501 = vsel %vm347, %v443, 0
    %v504 = vsel %vm347, %v444, 0
    %v507 = vsel %vm347, %v451, 0
    %v510 = vsel %vm347, %v452, 0
    %512 = vmatpush.xpose.msra.mxu0 0.0
    %513 = vmatpush.xpose.msra.mxu0 0.0
    %514 = vmatpush.xpose.msra.mxu0 0.0
    %515 = vmatpush.xpose.msra.mxu0 0.0
    %516 = vmatpush.xpose.msra.mxu0 0.0
    %517 = vmatpush.xpose.msra.mxu0 0.0
    %518 = vmatpush.xpose.msra.mxu0 0.0
    %519 = vmatpush.xpose.msra.mxu0 0.0
    %520 = vmatpush.xpose.msra.mxu0 0.0
    %521 = vmatpush.xpose.msra.mxu0 0.0
    %522 = vmatpush.xpose.msra.mxu0 0.0
    %523 = vmatpush.xpose.msra.mxu0 0.0
    %524 = vmatpush.xpose.msra.mxu0 0.0
    %525 = vmatpush.xpose.msra.mxu0 0.0
    %526 = vmatpush.xpose.msra.mxu0 %v510
    %527 = vmatpush.xpose.msra.mxu0 %v507
    %528 = vmatmul.f32.gmra.mxu0 %v501
    %v529 = vpop.f32.mrf.mxu0
    %v530 = vadd.f32 0.0, %v529
    %531 = vmatmul.f32.gmra.mxu0 %v504
    %v532 = vpop.f32.mrf.mxu0
    %v533 = vadd.f32 0.0, %v532
    %534 = vdwg.mxu0
    %v536 = vsel %vm347, %v445, 0
    %v539 = vsel %vm347, %v446, 0
    %v542 = vsel %vm347, %v453, 0
    %v545 = vsel %vm347, %v454, 0
    %547 = vmatpush.xpose.msra.mxu0 0.0
    %548 = vmatpush.xpose.msra.mxu0 0.0
    %549 = vmatpush.xpose.msra.mxu0 0.0
    %550 = vmatpush.xpose.msra.mxu0 0.0
    %551 = vmatpush.xpose.msra.mxu0 0.0
    %552 = vmatpush.xpose.msra.mxu0 0.0
    %553 = vmatpush.xpose.msra.mxu0 0.0
    %554 = vmatpush.xpose.msra.mxu0 0.0
    %555 = vmatpush.xpose.msra.mxu0 0.0
    %556 = vmatpush.xpose.msra.mxu0 0.0
    %557 = vmatpush.xpose.msra.mxu0 0.0
    %558 = vmatpush.xpose.msra.mxu0 0.0
    %559 = vmatpush.xpose.msra.mxu0 0.0
    %560 = vmatpush.xpose.msra.mxu0 0.0
    %561 = vmatpush.xpose.msra.mxu0 %v545
    %562 = vmatpush.xpose.msra.mxu0 %v542
    %563 = vmatmul.f32.gmra.mxu0 %v536
    %v564 = vpop.f32.mrf.mxu0
    %v565 = vadd.f32 0.0, %v564
    %566 = vmatmul.f32.gmra.mxu0 %v539
    %v567 = vpop.f32.mrf.mxu0
    %v568 = vadd.f32 0.0, %v567
    %569 = vdwg.mxu0
    %v571 = vsel %vm347, %v447, 0
    %v574 = vsel %vm347, %v448, 0
    %v577 = vsel %vm347, %v455, 0
    %v580 = vsel %vm347, %v456, 0
    %582 = vmatpush.xpose.msra.mxu0 0.0
    %583 = vmatpush.xpose.msra.mxu0 0.0
    %584 = vmatpush.xpose.msra.mxu0 0.0
    %585 = vmatpush.xpose.msra.mxu0 0.0
    %586 = vmatpush.xpose.msra.mxu0 0.0
    %587 = vmatpush.xpose.msra.mxu0 0.0
    %588 = vmatpush.xpose.msra.mxu0 0.0
    %589 = vmatpush.xpose.msra.mxu0 0.0
    %590 = vmatpush.xpose.msra.mxu0 0.0
    %591 = vmatpush.xpose.msra.mxu0 0.0
    %592 = vmatpush.xpose.msra.mxu0 0.0
    %593 = vmatpush.xpose.msra.mxu0 0.0
    %594 = vmatpush.xpose.msra.mxu0 0.0
    %595 = vmatpush.xpose.msra.mxu0 0.0
    %596 = vmatpush.xpose.msra.mxu0 %v580
    %597 = vmatpush.xpose.msra.mxu0 %v577
    %598 = vmatmul.f32.gmra.mxu0 %v571
    %v599 = vpop.f32.mrf.mxu0
    %v600 = vadd.f32 0.0, %v599
    %601 = vmatmul.f32.gmra.mxu0 %v574
    %v602 = vpop.f32.mrf.mxu0
    %v603 = vadd.f32 0.0, %v602
    %604 = vdwg.mxu0
    %v605 = vmul.f32 %v495, 0.17677669
    %v606 = vmul.f32 %v498, 0.17677669
    %v607 = vmul.f32 %v530, 0.17677669
    %v608 = vmul.f32 %v533, 0.17677669
    %v609 = vmul.f32 %v565, 0.17677669
    %v610 = vmul.f32 %v568, 0.17677669
    %v611 = vmul.f32 %v600, 0.17677669
    %v612 = vmul.f32 %v603, 0.17677669
    %v613 = vadd.f32 %v605, %v149
    %v614 = vadd.f32 %v606, %v150
    %v615 = vadd.f32 %v607, %v151
    %v616 = vadd.f32 %v608, %v152
    %v617 = vadd.f32 %v609, %v153
    %v618 = vadd.f32 %v610, %v154
    %v619 = vadd.f32 %v611, %v155
    %v620 = vadd.f32 %v612, %v156
    %vm621 = vcmask 130048
    %v622 = vsel %vm621, %v613, -inf
    %623 = vmax.xlane.f32.xlu0 %v622
    %v624 = vpop.xlane.xlu0 %623
    %v625 = vsel %vm621, %v614, -inf
    %626 = vmax.xlane.f32.xlu0 %v625
    %v627 = vpop.xlane.xlu0 %626
    %v628 = vsel %vm621, %v615, -inf
    %629 = vmax.xlane.f32.xlu0 %v628
    %v630 = vpop.xlane.xlu0 %629
    %v631 = vsel %vm621, %v616, -inf
    %632 = vmax.xlane.f32.xlu0 %v631
    %v633 = vpop.xlane.xlu0 %632
    %v634 = vsel %vm621, %v617, -inf
    %635 = vmax.xlane.f32.xlu0 %v634
    %v636 = vpop.xlane.xlu0 %635
    %v637 = vsel %vm621, %v618, -inf
    %638 = vmax.xlane.f32.xlu0 %v637
    %v639 = vpop.xlane.xlu0 %638
    %v640 = vsel %vm621, %v619, -inf
    %641 = vmax.xlane.f32.xlu0 %v640
    %v642 = vpop.xlane.xlu0 %641
    %v643 = vsel %vm621, %v620, -inf
    %644 = vmax.xlane.f32.xlu0 %v643
    %v645 = vpop.xlane.xlu0 %644
    %v646 = vsub.f32 %v613, %v624
    %v647 = vsub.f32 %v614, %v627
    %v648 = vsub.f32 %v615, %v630
    %v649 = vsub.f32 %v616, %v633
    %v650 = vsub.f32 %v617, %v636
    %v651 = vsub.f32 %v618, %v639
    %v652 = vsub.f32 %v619, %v642
    %v653 = vsub.f32 %v620, %v645
    %v654 = vmul.f32 %v646, 1.442695
    %v655 = vpow.pop %v654
    %v656 = vmul.f32 %v647, 1.442695
    %v657 = vpow.pop %v656
    %v658 = vmul.f32 %v648, 1.442695
    %v659 = vpow.pop %v658
    %v660 = vmul.f32 %v649, 1.442695
    %v661 = vpow.pop %v660
    %v662 = vmul.f32 %v650, 1.442695
    %v663 = vpow.pop %v662
    %v664 = vmul.f32 %v651, 1.442695
    %v665 = vpow.pop %v664
    %v666 = vmul.f32 %v652, 1.442695
    %v667 = vpow.pop %v666
    %v668 = vmul.f32 %v653, 1.442695
    %v669 = vpow.pop %v668
    %v670 = vsel %vm621, %v655, 0.0
    %671 = vadd.xlane.f32.xlu0 %v670
    %v672 = vpop.xlane.xlu0 %671
    %v673 = vsel %vm621, %v657, 0.0
    %674 = vadd.xlane.f32.xlu0 %v673
    %v675 = vpop.xlane.xlu0 %674
    %v676 = vsel %vm621, %v659, 0.0
    %677 = vadd.xlane.f32.xlu0 %v676
    %v678 = vpop.xlane.xlu0 %677
    %v679 = vsel %vm621, %v661, 0.0
    %680 = vadd.xlane.f32.xlu0 %v679
    %v681 = vpop.xlane.xlu0 %680
    %v682 = vsel %vm621, %v663, 0.0
    %683 = vadd.xlane.f32.xlu0 %v682
    %v684 = vpop.xlane.xlu0 %683
    %v685 = vsel %vm621, %v665, 0.0
    %686 = vadd.xlane.f32.xlu0 %v685
    %v687 = vpop.xlane.xlu0 %686
    %v688 = vsel %vm621, %v667, 0.0
    %689 = vadd.xlane.f32.xlu0 %v688
    %v690 = vpop.xlane.xlu0 %689
    %v691 = vsel %vm621, %v669, 0.0
    %692 = vadd.xlane.f32.xlu0 %v691
    %v693 = vpop.xlane.xlu0 %692
    %v694 = vrcp.pop %v672
    %v695 = vrcp.pop %v675
    %v696 = vrcp.pop %v678
    %v697 = vrcp.pop %v681
    %v698 = vrcp.pop %v684
    %v699 = vrcp.pop %v687
    %v700 = vrcp.pop %v690
    %v701 = vrcp.pop %v693
    %v702 = vmul.f32 %v655, %v694
    %v703 = vmul.f32 %v657, %v695
    %v704 = vmul.f32 %v659, %v696
    %v705 = vmul.f32 %v661, %v697
    %v706 = vmul.f32 %v663, %v698
    %v707 = vmul.f32 %v665, %v699
    %v708 = vmul.f32 %v667, %v700
    %v709 = vmul.f32 %v669, %v701
    %v711 = vsel %vm621, %v702, 0
    %v714 = vsel %vm621, %v703, 0
    %716 = vmatpush.msra.mxu0 0.0
    %717 = vmatpush.msra.mxu0 0.0
    %718 = vmatpush.msra.mxu0 0.0
    %719 = vmatpush.msra.mxu0 0.0
    %720 = vmatpush.msra.mxu0 0.0
    %721 = vmatpush.msra.mxu0 0.0
    %722 = vmatpush.msra.mxu0 0.0
    %723 = vmatpush.msra.mxu0 0.0
    %724 = vmatpush.msra.mxu0 0.0
    %725 = vmatpush.msra.mxu0 0.0
    %726 = vmatpush.msra.mxu0 0.0
    %727 = vmatpush.msra.mxu0 0.0
    %728 = vmatpush.msra.mxu0 0.0
    %729 = vmatpush.msra.mxu0 0.0
    %730 = vmatpush.msra.mxu0 %v458
    %731 = vmatpush.msra.mxu0 %v457
    %732 = vmatmul.f32.gmra.mxu0 %v711
    %v733 = vpop.f32.mrf.mxu0
    %v734 = vadd.f32 0.0, %v733
    %735 = vmatmul.f32.gmra.mxu0 %v714
    %v736 = vpop.f32.mrf.mxu0
    %v737 = vadd.f32 0.0, %v736
    %738 = vdwg.mxu0
    %v740 = vsel %vm621, %v704, 0
    %v743 = vsel %vm621, %v705, 0
    %745 = vmatpush.msra.mxu0 0.0
    %746 = vmatpush.msra.mxu0 0.0
    %747 = vmatpush.msra.mxu0 0.0
    %748 = vmatpush.msra.mxu0 0.0
    %749 = vmatpush.msra.mxu0 0.0
    %750 = vmatpush.msra.mxu0 0.0
    %751 = vmatpush.msra.mxu0 0.0
    %752 = vmatpush.msra.mxu0 0.0
    %753 = vmatpush.msra.mxu0 0.0
    %754 = vmatpush.msra.mxu0 0.0
    %755 = vmatpush.msra.mxu0 0.0
    %756 = vmatpush.msra.mxu0 0.0
    %757 = vmatpush.msra.mxu0 0.0
    %758 = vmatpush.msra.mxu0 0.0
    %759 = vmatpush.msra.mxu0 %v460
    %760 = vmatpush.msra.mxu0 %v459
    %761 = vmatmul.f32.gmra.mxu0 %v740
    %v762 = vpop.f32.mrf.mxu0
    %v763 = vadd.f32 0.0, %v762
    %764 = vmatmul.f32.gmra.mxu0 %v743
    %v765 = vpop.f32.mrf.mxu0
    %v766 = vadd.f32 0.0, %v765
    %767 = vdwg.mxu0
    %v769 = vsel %vm621, %v706, 0
    %v772 = vsel %vm621, %v707, 0
    %774 = vmatpush.msra.mxu0 0.0
    %775 = vmatpush.msra.mxu0 0.0
    %776 = vmatpush.msra.mxu0 0.0
    %777 = vmatpush.msra.mxu0 0.0
    %778 = vmatpush.msra.mxu0 0.0
    %779 = vmatpush.msra.mxu0 0.0
    %780 = vmatpush.msra.mxu0 0.0
    %781 = vmatpush.msra.mxu0 0.0
    %782 = vmatpush.msra.mxu0 0.0
    %783 = vmatpush.msra.mxu0 0.0
    %784 = vmatpush.msra.mxu0 0.0
    %785 = vmatpush.msra.mxu0 0.0
    %786 = vmatpush.msra.mxu0 0.0
    %787 = vmatpush.msra.mxu0 0.0
    %788 = vmatpush.msra.mxu0 %v462
    %789 = vmatpush.msra.mxu0 %v461
    %790 = vmatmul.f32.gmra.mxu0 %v769
    %v791 = vpop.f32.mrf.mxu0
    %v792 = vadd.f32 0.0, %v791
    %793 = vmatmul.f32.gmra.mxu0 %v772
    %v794 = vpop.f32.mrf.mxu0
    %v795 = vadd.f32 0.0, %v794
    %796 = vdwg.mxu0
    %v798 = vsel %vm621, %v708, 0
    %v801 = vsel %vm621, %v709, 0
    %803 = vmatpush.msra.mxu0 0.0
    %804 = vmatpush.msra.mxu0 0.0
    %805 = vmatpush.msra.mxu0 0.0
    %806 = vmatpush.msra.mxu0 0.0
    %807 = vmatpush.msra.mxu0 0.0
    %808 = vmatpush.msra.mxu0 0.0
    %809 = vmatpush.msra.mxu0 0.0
    %810 = vmatpush.msra.mxu0 0.0
    %811 = vmatpush.msra.mxu0 0.0
    %812 = vmatpush.msra.mxu0 0.0
    %813 = vmatpush.msra.mxu0 0.0
    %814 = vmatpush.msra.mxu0 0.0
    %815 = vmatpush.msra.mxu0 0.0
    %816 = vmatpush.msra.mxu0 0.0
    %817 = vmatpush.msra.mxu0 %v464
    %818 = vmatpush.msra.mxu0 %v463
    %819 = vmatmul.f32.gmra.mxu0 %v798
    %v820 = vpop.f32.mrf.mxu0
    %v821 = vadd.f32 0.0, %v820
    %822 = vmatmul.f32.gmra.mxu0 %v801
    %v823 = vpop.f32.mrf.mxu0
    %v824 = vadd.f32 0.0, %v823
    %825 = vdwg.mxu0
    %828 = vrot.lane.b32.xlu0 %v763, 32
    %v829 = vpop.permute.xlu0 %828
    %830 = vrot.lane.b32.xlu0 %v766, 32
    %v831 = vpop.permute.xlu0 %830
    %836 = vrot.lane.b32.xlu0 %v792, 64
    %v837 = vpop.permute.xlu0 %836
    %838 = vrot.lane.b32.xlu0 %v795, 64
    %v839 = vpop.permute.xlu0 %838
    %844 = vrot.lane.b32.xlu0 %v821, 96
    %v845 = vpop.permute.xlu0 %844
    %846 = vrot.lane.b32.xlu0 %v824, 96
    %v847 = vpop.permute.xlu0 %846
    %v850 = vsel %vm347, %v734, %v829
    %v851 = vsel %vm347, %v737, %v831
    %vm852 = vcmask 523264
    %v853 = vsel %vm852, %v850, %v837
    %v854 = vsel %vm852, %v851, %v839
    %vm855 = vcmask 785408
    %v856 = vsel %vm855, %v853, %v845
    %v857 = vsel %vm855, %v854, %v847
    %v858 = vld [vmem:[#allocation9] sm:$0xff]
    %v859 = vld [vmem:[#allocation9 + $0x8] sm:$0xff]
    %v860 = vld [vmem:[#allocation9 + $0x10] sm:$0xff]
    %v861 = vld [vmem:[#allocation9 + $0x18] sm:$0xff]
    %v862 = vld [vmem:[#allocation9 + $0x20] sm:$0xff]
    %v863 = vld [vmem:[#allocation9 + $0x28] sm:$0xff]
    %v864 = vld [vmem:[#allocation9 + $0x30] sm:$0xff]
    %v865 = vld [vmem:[#allocation9 + $0x38] sm:$0xff]
    %v866 = vld [vmem:[#allocation9 + $0x40] sm:$0xff]
    %v867 = vld [vmem:[#allocation9 + $0x48] sm:$0xff]
    %v868 = vld [vmem:[#allocation9 + $0x50] sm:$0xff]
    %v869 = vld [vmem:[#allocation9 + $0x58] sm:$0xff]
    %v870 = vld [vmem:[#allocation9 + $0x60] sm:$0xff]
    %v871 = vld [vmem:[#allocation9 + $0x68] sm:$0xff]
    %v872 = vld [vmem:[#allocation9 + $0x70] sm:$0xff]
    %v873 = vld [vmem:[#allocation9 + $0x78] sm:$0xff]
    %v874 = vld [vmem:[%s11] sm:$0x1]
    %v876 = vperm.slane %v874, 0
    %878 = vmatpush.msra.mxu0 %v873
    %879 = vmatpush.msra.mxu0 %v872
    %880 = vmatpush.msra.mxu0 %v871
    %881 = vmatpush.msra.mxu0 %v870
    %882 = vmatpush.msra.mxu0 %v869
    %883 = vmatpush.msra.mxu0 %v868
    %884 = vmatpush.msra.mxu0 %v867
    %885 = vmatpush.msra.mxu0 %v866
    %886 = vmatpush.msra.mxu0 %v865
    %887 = vmatpush.msra.mxu0 %v864
    %888 = vmatpush.msra.mxu0 %v863
    %889 = vmatpush.msra.mxu0 %v862
    %890 = vmatpush.msra.mxu0 %v861
    %891 = vmatpush.msra.mxu0 %v860
    %892 = vmatpush.msra.mxu0 %v859
    %893 = vmatpush.msra.mxu0 %v858
    %894 = vmatmul.f32.gmra.mxu0 %v856
    %v895 = vpop.f32.mrf.mxu0
    %v896 = vadd.f32 %v876, %v895
    %897 = vmatmul.f32.gmra.mxu0 %v857
    %v898 = vpop.f32.mrf.mxu0
    %v899 = vadd.f32 %v876, %v898
    %900 = vdwg.mxu0
    %v901 = vadd.f32 %v216, %v896
    %v902 = vadd.f32 %v217, %v899
    %v903 = vld [vmem:[%s12] sm:$0x1]
    %v904 = vld [vmem:[%s13] sm:$0x1]
    %905 = vadd.xlane.f32.xlu0 %v901
    %v906 = vpop.xlane.xlu0 %905
    %907 = vadd.xlane.f32.xlu0 %v902
    %v908 = vpop.xlane.xlu0 %907
    %v909 = vmul.f32 %v906, %v171
    %v910 = vmul.f32 %v908, %v171
    %v911 = vsub.f32 %v901, %v909
    %v912 = vsub.f32 %v902, %v910
    %v913 = vmul.f32 %v911, %v911
    %v914 = vmul.f32 %v912, %v912
    %915 = vadd.xlane.f32.xlu0 %v913
    %v916 = vpop.xlane.xlu0 %915
    %917 = vadd.xlane.f32.xlu0 %v914
    %v918 = vpop.xlane.xlu0 %917
    %v919 = vmul.f32 %v916, %v171
    %v920 = vmul.f32 %v918, %v171
    %v921 = vadd.f32 %v919, 1e-05
    %v922 = vadd.f32 %v920, 1e-05
    %v923 = vrsqrt.pop %v921
    %v924 = vmul.f32 %v923, %v921
    %v925 = vmul.f32 %v924, %v923
    %v926 = vmul.f32 0.5, %v925
    %v927 = vsub.f32 1.5, %v926
    %v928 = vmul.f32 %v923, %v927
    %vm929 = vweird.f32 %v921
    %vm930 = vweird.f32 %v923
    %vm931 = vmor %vm929, %vm930
    %v932 = vsel %vm931, %v923, %v928
    %v933 = vrsqrt.pop %v922
    %v934 = vmul.f32 %v933, %v922
    %v935 = vmul.f32 %v934, %v933
    %v936 = vmul.f32 0.5, %v935
    %v937 = vsub.f32 1.5, %v936
    %v938 = vmul.f32 %v933, %v937
    %vm939 = vweird.f32 %v922
    %vm940 = vweird.f32 %v933
    %vm941 = vmor %vm939, %vm940
    %v942 = vsel %vm941, %v933, %v938
    %v943 = vmul.f32 %v911, %v932
    %v944 = vmul.f32 %v912, %v942
    %v946 = vperm.slane %v903, 0
    %v948 = vmul.f32 %v943, %v946
    %v949 = vmul.f32 %v944, %v946
    %v951 = vperm.slane %v904, 0
    %v953 = vadd.f32 %v948, %v951
    %v954 = vadd.f32 %v949, %v951
    %v955 = vld [vmem:[#allocation10] sm:$0xff]
    %v956 = vld [vmem:[#allocation10 + $0x8] sm:$0xff]
    %v957 = vld [vmem:[#allocation10 + $0x10] sm:$0xff]
    %v958 = vld [vmem:[#allocation10 + $0x18] sm:$0xff]
    %v959 = vld [vmem:[#allocation10 + $0x20] sm:$0xff]
    %v960 = vld [vmem:[#allocation10 + $0x28] sm:$0xff]
    %v961 = vld [vmem:[#allocation10 + $0x30] sm:$0xff]
    %v962 = vld [vmem:[#allocation10 + $0x38] sm:$0xff]
    %v963 = vld [vmem:[#allocation10 + $0x40] sm:$0xff]
    %v964 = vld [vmem:[#allocation10 + $0x48] sm:$0xff]
    %v965 = vld [vmem:[#allocation10 + $0x50] sm:$0xff]
    %v966 = vld [vmem:[#allocation10 + $0x58] sm:$0xff]
    %v967 = vld [vmem:[#allocation10 + $0x60] sm:$0xff]
    %v968 = vld [vmem:[#allocation10 + $0x68] sm:$0xff]
    %v969 = vld [vmem:[#allocation10 + $0x70] sm:$0xff]
    %v970 = vld [vmem:[#allocation10 + $0x78] sm:$0xff]
    %v971 = vld [vmem:[#allocation10 + $0x80] sm:$0xff]
    %v972 = vld [vmem:[#allocation10 + $0x88] sm:$0xff]
    %v973 = vld [vmem:[#allocation10 + $0x90] sm:$0xff]
    %v974 = vld [vmem:[#allocation10 + $0x98] sm:$0xff]
    %v975 = vld [vmem:[#allocation10 + $0xa0] sm:$0xff]
    %v976 = vld [vmem:[#allocation10 + $0xa8] sm:$0xff]
    %v977 = vld [vmem:[#allocation10 + $0xb0] sm:$0xff]
    %v978 = vld [vmem:[#allocation10 + $0xb8] sm:$0xff]
    %v979 = vld [vmem:[#allocation10 + $0xc0] sm:$0xff]
    %v980 = vld [vmem:[#allocation10 + $0xc8] sm:$0xff]
    %v981 = vld [vmem:[#allocation10 + $0xd0] sm:$0xff]
    %v982 = vld [vmem:[#allocation10 + $0xd8] sm:$0xff]
    %v983 = vld [vmem:[#allocation10 + $0xe0] sm:$0xff]
    %v984 = vld [vmem:[#allocation10 + $0xe8] sm:$0xff]
    %v985 = vld [vmem:[#allocation10 + $0xf0] sm:$0xff]
    %v986 = vld [vmem:[#allocation10 + $0xf8] sm:$0xff]
    %v987 = vld [vmem:[%s15] sm:$0x3]
    %v989 = vperm.slane %v987, 0
    %v990 = vperm.slane %v987, 1
    %993 = vmatpush.msra.mxu0 %v985
    %994 = vmatpush.msra.mxu0 %v983
    %995 = vmatpush.msra.mxu0 %v981
    %996 = vmatpush.msra.mxu0 %v979
    %997 = vmatpush.msra.mxu0 %v977
    %998 = vmatpush.msra.mxu0 %v975
    %999 = vmatpush.msra.mxu0 %v973
    %1000 = vmatpush.msra.mxu0 %v971
    %1001 = vmatpush.msra.mxu0 %v969
    %1002 = vmatpush.msra.mxu0 %v967
    %1003 = vmatpush.msra.mxu0 %v965
    %1004 = vmatpush.msra.mxu0 %v963
    %1005 = vmatpush.msra.mxu0 %v961
    %1006 = vmatpush.msra.mxu0 %v959
    %1007 = vmatpush.msra.mxu0 %v957
    %1008 = vmatpush.msra.mxu0 %v955
    %1009 = vmatmul.f32.gmra.mxu0 %v953
    %v1010 = vpop.f32.mrf.mxu0
    %v1011 = vadd.f32 %v989, %v1010
    %1012 = vmatmul.f32.gmra.mxu0 %v954
    %v1013 = vpop.f32.mrf.mxu0
    %v1014 = vadd.f32 %v989, %v1013
    %1015 = vdwg.mxu0
    %1016 = vmatpush.msra.mxu0 %v986
    %1017 = vmatpush.msra.mxu0 %v984
    %1018 = vmatpush.msra.mxu0 %v982
    %1019 = vmatpush.msra.mxu0 %v980
    %1020 = vmatpush.msra.mxu0 %v978
    %1021 = vmatpush.msra.mxu0 %v976
    %1022 = vmatpush.msra.mxu0 %v974
    %1023 = vmatpush.msra.mxu0 %v972
    %1024 = vmatpush.msra.mxu0 %v970
    %1025 = vmatpush.msra.mxu0 %v968
    %1026 = vmatpush.msra.mxu0 %v966
    %1027 = vmatpush.msra.mxu0 %v964
    %1028 = vmatpush.msra.mxu0 %v962
    %1029 = vmatpush.msra.mxu0 %v960
    %1030 = vmatpush.msra.mxu0 %v958
    %1031 = vmatpush.msra.mxu0 %v956
    %1032 = vmatmul.f32.gmra.mxu0 %v953
    %v1033 = vpop.f32.mrf.mxu0
    %v1034 = vadd.f32 %v990, %v1033
    %1035 = vmatmul.f32.gmra.mxu0 %v954
    %v1036 = vpop.f32.mrf.mxu0
    %v1037 = vadd.f32 %v990, %v1036
    %1038 = vdwg.mxu0
    %v1039 = vmul.f32 %v1011, 0.5
    %v1040 = vmul.f32 %v1034, 0.5
    %v1041 = vmul.f32 %v1014, 0.5
    %v1042 = vmul.f32 %v1037, 0.5
    %v1043 = vmul.f32 %v1011, 0.044715
    %v1044 = vmul.f32 %v1034, 0.044715
    %v1045 = vmul.f32 %v1014, 0.044715
    %v1046 = vmul.f32 %v1037, 0.044715
    %v1047 = vmul.f32 %v1043, %v1011
    %v1048 = vmul.f32 %v1044, %v1034
    %v1049 = vmul.f32 %v1045, %v1014
    %v1050 = vmul.f32 %v1046, %v1037
    %v1051 = vmul.f32 %v1047, %v1011
    %v1052 = vmul.f32 %v1048, %v1034
    %v1053 = vmul.f32 %v1049, %v1014
    %v1054 = vmul.f32 %v1050, %v1037
    %v1055 = vadd.f32 %v1011, %v1051
    %v1056 = vadd.f32 %v1034, %v1052
    %v1057 = vadd.f32 %v1014, %v1053
    %v1058 = vadd.f32 %v1037, %v1054
    %v1059 = vmul.f32 %v1055, 0.7978846
    %v1060 = vmul.f32 %v1056, 0.7978846
    %v1061 = vmul.f32 %v1057, 0.7978846
    %v1062 = vmul.f32 %v1058, 0.7978846
    %v1063 = vtanh.pop %v1059
    %v1064 = vtanh.pop %v1060
    %v1065 = vtanh.pop %v1061
    %v1066 = vtanh.pop %v1062
    %v1067 = vadd.f32 %v1063, 1.0
    %v1068 = vadd.f32 %v1064, 1.0
    %v1069 = vadd.f32 %v1065, 1.0
    %v1070 = vadd.f32 %v1066, 1.0
    %v1071 = vmul.f32 %v1039, %v1067
    %v1072 = vmul.f32 %v1040, %v1068
    %v1073 = vmul.f32 %v1041, %v1069
    %v1074 = vmul.f32 %v1042, %v1070
    %v1075 = vld [vmem:[#allocation12] sm:$0xff]
    %v1076 = vld [vmem:[#allocation12 + $0x8] sm:$0xff]
    %v1077 = vld [vmem:[#allocation12 + $0x10] sm:$0xff]
    %v1078 = vld [vmem:[#allocation12 + $0x18] sm:$0xff]
    %v1079 = vld [vmem:[#allocation12 + $0x20] sm:$0xff]
    %v1080 = vld [vmem:[#allocation12 + $0x28] sm:$0xff]
    %v1081 = vld [vmem:[#allocation12 + $0x30] sm:$0xff]
    %v1082 = vld [vmem:[#allocation12 + $0x38] sm:$0xff]
    %v1083 = vld [vmem:[#allocation12 + $0x40] sm:$0xff]
    %v1084 = vld [vmem:[#allocation12 + $0x48] sm:$0xff]
    %v1085 = vld [vmem:[#allocation12 + $0x50] sm:$0xff]
    %v1086 = vld [vmem:[#allocation12 + $0x58] sm:$0xff]
    %v1087 = vld [vmem:[#allocation12 + $0x60] sm:$0xff]
    %v1088 = vld [vmem:[#allocation12 + $0x68] sm:$0xff]
    %v1089 = vld [vmem:[#allocation12 + $0x70] sm:$0xff]
    %v1090 = vld [vmem:[#allocation12 + $0x78] sm:$0xff]
    %v1091 = vld [vmem:[#allocation12 + $0x80] sm:$0xff]
    %v1092 = vld [vmem:[#allocation12 + $0x88] sm:$0xff]
    %v1093 = vld [vmem:[#allocation12 + $0x90] sm:$0xff]
    %v1094 = vld [vmem:[#allocation12 + $0x98] sm:$0xff]
    %v1095 = vld [vmem:[#allocation12 + $0xa0] sm:$0xff]
    %v1096 = vld [vmem:[#allocation12 + $0xa8] sm:$0xff]
    %v1097 = vld [vmem:[#allocation12 + $0xb0] sm:$0xff]
    %v1098 = vld [vmem:[#allocation12 + $0xb8] sm:$0xff]
    %v1099 = vld [vmem:[#allocation12 + $0xc0] sm:$0xff]
    %v1100 = vld [vmem:[#allocation12 + $0xc8] sm:$0xff]
    %v1101 = vld [vmem:[#allocation12 + $0xd0] sm:$0xff]
    %v1102 = vld [vmem:[#allocation12 + $0xd8] sm:$0xff]
    %v1103 = vld [vmem:[#allocation12 + $0xe0] sm:$0xff]
    %v1104 = vld [vmem:[#allocation12 + $0xe8] sm:$0xff]
    %v1105 = vld [vmem:[#allocation12 + $0xf0] sm:$0xff]
    %v1106 = vld [vmem:[#allocation12 + $0xf8] sm:$0xff]
    %v1107 = vld [vmem:[%s17] sm:$0x1]
    %v1109 = vperm.slane %v1107, 0
    %1111 = vmatpush.msra.mxu0 %v1090
    %1112 = vmatpush.msra.mxu0 %v1089
    %1113 = vmatpush.msra.mxu0 %v1088
    %1114 = vmatpush.msra.mxu0 %v1087
    %1115 = vmatpush.msra.mxu0 %v1086
    %1116 = vmatpush.msra.mxu0 %v1085
    %1117 = vmatpush.msra.mxu0 %v1084
    %1118 = vmatpush.msra.mxu0 %v1083
    %1119 = vmatpush.msra.mxu0 %v1082
    %1120 = vmatpush.msra.mxu0 %v1081
    %1121 = vmatpush.msra.mxu0 %v1080
    %1122 = vmatpush.msra.mxu0 %v1079
    %1123 = vmatpush.msra.mxu0 %v1078
    %1124 = vmatpush.msra.mxu0 %v1077
    %1125 = vmatpush.msra.mxu0 %v1076
    %1126 = vmatpush.msra.mxu0 %v1075
    %1127 = vmatmul.f32.gmra.mxu0 %v1071
    %v1128 = vpop.f32.mrf.mxu0
    %v1129 = vadd.f32 %v1109, %v1128
    %1130 = vmatmul.f32.gmra.mxu0 %v1073
    %v1131 = vpop.f32.mrf.mxu0
    %v1132 = vadd.f32 %v1109, %v1131
    %1133 = vdwg.mxu0
    %1134 = vmatpush.msra.mxu0 %v1106
    %1135 = vmatpush.msra.mxu0 %v1105
    %1136 = vmatpush.msra.mxu0 %v1104
    %1137 = vmatpush.msra.mxu0 %v1103
    %1138 = vmatpush.msra.mxu0 %v1102
    %1139 = vmatpush.msra.mxu0 %v1101
    %1140 = vmatpush.msra.mxu0 %v1100
    %1141 = vmatpush.msra.mxu0 %v1099
    %1142 = vmatpush.msra.mxu0 %v1098
    %1143 = vmatpush.msra.mxu0 %v1097
    %1144 = vmatpush.msra.mxu0 %v1096
    %1145 = vmatpush.msra.mxu0 %v1095
    %1146 = vmatpush.msra.mxu0 %v1094
    %1147 = vmatpush.msra.mxu0 %v1093
    %1148 = vmatpush.msra.mxu0 %v1092
    %1149 = vmatpush.msra.mxu0 %v1091
    %1150 = vmatmul.f32.gmra.mxu0 %v1072
    %v1151 = vpop.f32.mrf.mxu0
    %v1152 = vadd.f32 %v1129, %v1151
    %1153 = vmatmul.f32.gmra.mxu0 %v1074
    %v1154 = vpop.f32.mrf.mxu0
    %v1155 = vadd.f32 %v1132, %v1154
    %1156 = vdwg.mxu0
    %v1157 = vadd.f32 %v953, %v1152
    %v1158 = vadd.f32 %v954, %v1155
    %v1159 = vld [vmem:[%s18] sm:$0x1]
    %v1160 = vld [vmem:[%s19] sm:$0x1]
    %1161 = vadd.xlane.f32.xlu0 %v1157
    %v1162 = vpop.xlane.xlu0 %1161
    %1163 = vadd.xlane.f32.xlu0 %v1158
    %v1164 = vpop.xlane.xlu0 %1163
    %v1165 = vmul.f32 %v1162, %v171
    %v1166 = vmul.f32 %v1164, %v171
    %v1167 = vsub.f32 %v1157, %v1165
    %v1168 = vsub.f32 %v1158, %v1166
    %v1169 = vmul.f32 %v1167, %v1167
    %v1170 = vmul.f32 %v1168, %v1168
    %1171 = vadd.xlane.f32.xlu0 %v1169
    %v1172 = vpop.xlane.xlu0 %1171
    %1173 = vadd.xlane.f32.xlu0 %v1170
    %v1174 = vpop.xlane.xlu0 %1173
    %v1175 = vmul.f32 %v1172, %v171
    %v1176 = vmul.f32 %v1174, %v171
    %v1177 = vadd.f32 %v1175, 1e-05
    %v1178 = vadd.f32 %v1176, 1e-05
    %v1179 = vrsqrt.pop %v1177
    %v1180 = vmul.f32 %v1179, %v1177
    %v1181 = vmul.f32 %v1180, %v1179
    %v1182 = vmul.f32 0.5, %v1181
    %v1183 = vsub.f32 1.5, %v1182
    %v1184 = vmul.f32 %v1179, %v1183
    %vm1185 = vweird.f32 %v1177
    %vm1186 = vweird.f32 %v1179
    %vm1187 = vmor %vm1185, %vm1186
    %v1188 = vsel %vm1187, %v1179, %v1184
    %v1189 = vrsqrt.pop %v1178
    %v1190 = vmul.f32 %v1189, %v1178
    %v1191 = vmul.f32 %v1190, %v1189
    %v1192 = vmul.f32 0.5, %v1191
    %v1193 = vsub.f32 1.5, %v1192
    %v1194 = vmul.f32 %v1189, %v1193
    %vm1195 = vweird.f32 %v1178
    %vm1196 = vweird.f32 %v1189
    %vm1197 = vmor %vm1195, %vm1196
    %v1198 = vsel %vm1197, %v1189, %v1194
    %v1199 = vmul.f32 %v1167, %v1188
    %v1200 = vmul.f32 %v1168, %v1198
    %v1202 = vperm.slane %v1159, 0
    %v1204 = vmul.f32 %v1199, %v1202
    %v1205 = vmul.f32 %v1200, %v1202
    %v1207 = vperm.slane %v1160, 0
    %v1209 = vadd.f32 %v1204, %v1207
    %v1210 = vadd.f32 %v1205, %v1207
    %s1211 = scalar_lea.vmem %s4, 128
    %v1212 = vld [vmem:[%s1211] sm:$0xff]
    %v1213 = vld [vmem:[%s1211 + $0x8] sm:$0xff]
    %v1214 = vld [vmem:[%s1211 + $0x10] sm:$0xff]
    %v1215 = vld [vmem:[%s1211 + $0x18] sm:$0xff]
    %v1216 = vld [vmem:[%s1211 + $0x20] sm:$0xff]
    %v1217 = vld [vmem:[%s1211 + $0x28] sm:$0xff]
    %v1218 = vld [vmem:[%s1211 + $0x30] sm:$0xff]
    %v1219 = vld [vmem:[%s1211 + $0x38] sm:$0xff]
    %v1220 = vld [vmem:[%s1211 + $0x40] sm:$0xff]
    %v1221 = vld [vmem:[%s1211 + $0x48] sm:$0xff]
    %v1222 = vld [vmem:[%s1211 + $0x50] sm:$0xff]
    %v1223 = vld [vmem:[%s1211 + $0x58] sm:$0xff]
    %v1224 = vld [vmem:[%s1211 + $0x60] sm:$0xff]
    %v1225 = vld [vmem:[%s1211 + $0x68] sm:$0xff]
    %v1226 = vld [vmem:[%s1211 + $0x70] sm:$0xff]
    %v1227 = vld [vmem:[%s1211 + $0x78] sm:$0xff]
    %s1228 = scalar_lea.vmem %s5, 1
    %v1229 = vld [vmem:[%s1228] sm:$0x1]
    %v1231 = vperm.slane %v1229, 0
    %1233 = vmatpush.msra.mxu0 %v1227
    %1234 = vmatpush.msra.mxu0 %v1226
    %1235 = vmatpush.msra.mxu0 %v1225
    %1236 = vmatpush.msra.mxu0 %v1224
    %1237 = vmatpush.msra.mxu0 %v1223
    %1238 = vmatpush.msra.mxu0 %v1222
    %1239 = vmatpush.msra.mxu0 %v1221
    %1240 = vmatpush.msra.mxu0 %v1220
    %1241 = vmatpush.msra.mxu0 %v1219
    %1242 = vmatpush.msra.mxu0 %v1218
    %1243 = vmatpush.msra.mxu0 %v1217
    %1244 = vmatpush.msra.mxu0 %v1216
    %1245 = vmatpush.msra.mxu0 %v1215
    %1246 = vmatpush.msra.mxu0 %v1214
    %1247 = vmatpush.msra.mxu0 %v1213
    %1248 = vmatpush.msra.mxu0 %v1212
    %1249 = vmatmul.f32.gmra.mxu0 %v1209
    %v1250 = vpop.f32.mrf.mxu0
    %v1251 = vadd.f32 %v1231, %v1250
    %1252 = vmatmul.f32.gmra.mxu0 %v1210
    %v1253 = vpop.f32.mrf.mxu0
    %v1254 = vadd.f32 %v1231, %v1253
    %1255 = vdwg.mxu0
    %s1256 = scalar_lea.vmem [#allocation5], 128
    %v1257 = vld [vmem:[%s1256] sm:$0xff]
    %v1258 = vld [vmem:[%s1256 + $0x8] sm:$0xff]
    %v1259 = vld [vmem:[%s1256 + $0x10] sm:$0xff]
    %v1260 = vld [vmem:[%s1256 + $0x18] sm:$0xff]
    %v1261 = vld [vmem:[%s1256 + $0x20] sm:$0xff]
    %v1262 = vld [vmem:[%s1256 + $0x28] sm:$0xff]
    %v1263 = vld [vmem:[%s1256 + $0x30] sm:$0xff]
    %v1264 = vld [vmem:[%s1256 + $0x38] sm:$0xff]
    %v1265 = vld [vmem:[%s1256 + $0x40] sm:$0xff]
    %v1266 = vld [vmem:[%s1256 + $0x48] sm:$0xff]
    %v1267 = vld [vmem:[%s1256 + $0x50] sm:$0xff]
    %v1268 = vld [vmem:[%s1256 + $0x58] sm:$0xff]
    %v1269 = vld [vmem:[%s1256 + $0x60] sm:$0xff]
    %v1270 = vld [vmem:[%s1256 + $0x68] sm:$0xff]
    %v1271 = vld [vmem:[%s1256 + $0x70] sm:$0xff]
    %v1272 = vld [vmem:[%s1256 + $0x78] sm:$0xff]
    %s1273 = scalar_lea.vmem %s7, 1
    %v1274 = vld [vmem:[%s1273] sm:$0x1]
    %v1276 = vperm.slane %v1274, 0
    %1278 = vmatpush.msra.mxu0 %v1272
    %1279 = vmatpush.msra.mxu0 %v1271
    %1280 = vmatpush.msra.mxu0 %v1270
    %1281 = vmatpush.msra.mxu0 %v1269
    %1282 = vmatpush.msra.mxu0 %v1268
    %1283 = vmatpush.msra.mxu0 %v1267
    %1284 = vmatpush.msra.mxu0 %v1266
    %1285 = vmatpush.msra.mxu0 %v1265
    %1286 = vmatpush.msra.mxu0 %v1264
    %1287 = vmatpush.msra.mxu0 %v1263
    %1288 = vmatpush.msra.mxu0 %v1262
    %1289 = vmatpush.msra.mxu0 %v1261
    %1290 = vmatpush.msra.mxu0 %v1260
    %1291 = vmatpush.msra.mxu0 %v1259
    %1292 = vmatpush.msra.mxu0 %v1258
    %1293 = vmatpush.msra.mxu0 %v1257
    %1294 = vmatmul.f32.gmra.mxu0 %v1209
    %v1295 = vpop.f32.mrf.mxu0
    %v1296 = vadd.f32 %v1276, %v1295
    %1297 = vmatmul.f32.gmra.mxu0 %v1210
    %v1298 = vpop.f32.mrf.mxu0
    %v1299 = vadd.f32 %v1276, %v1298
    %1300 = vdwg.mxu0
    %s1301 = scalar_lea.vmem [#allocation7], 128
    %v1302 = vld [vmem:[%s1301] sm:$0xff]
    %v1303 = vld [vmem:[%s1301 + $0x8] sm:$0xff]
    %v1304 = vld [vmem:[%s1301 + $0x10] sm:$0xff]
    %v1305 = vld [vmem:[%s1301 + $0x18] sm:$0xff]
    %v1306 = vld [vmem:[%s1301 + $0x20] sm:$0xff]
    %v1307 = vld [vmem:[%s1301 + $0x28] sm:$0xff]
    %v1308 = vld [vmem:[%s1301 + $0x30] sm:$0xff]
    %v1309 = vld [vmem:[%s1301 + $0x38] sm:$0xff]
    %v1310 = vld [vmem:[%s1301 + $0x40] sm:$0xff]
    %v1311 = vld [vmem:[%s1301 + $0x48] sm:$0xff]
    %v1312 = vld [vmem:[%s1301 + $0x50] sm:$0xff]
    %v1313 = vld [vmem:[%s1301 + $0x58] sm:$0xff]
    %v1314 = vld [vmem:[%s1301 + $0x60] sm:$0xff]
    %v1315 = vld [vmem:[%s1301 + $0x68] sm:$0xff]
    %v1316 = vld [vmem:[%s1301 + $0x70] sm:$0xff]
    %v1317 = vld [vmem:[%s1301 + $0x78] sm:$0xff]
    %s1318 = scalar_lea.vmem %s9, 1
    %v1319 = vld [vmem:[%s1318] sm:$0x1]
    %v1321 = vperm.slane %v1319, 0
    %1323 = vmatpush.msra.mxu0 %v1317
    %1324 = vmatpush.msra.mxu0 %v1316
    %1325 = vmatpush.msra.mxu0 %v1315
    %1326 = vmatpush.msra.mxu0 %v1314
    %1327 = vmatpush.msra.mxu0 %v1313
    %1328 = vmatpush.msra.mxu0 %v1312
    %1329 = vmatpush.msra.mxu0 %v1311
    %1330 = vmatpush.msra.mxu0 %v1310
    %1331 = vmatpush.msra.mxu0 %v1309
    %1332 = vmatpush.msra.mxu0 %v1308
    %1333 = vmatpush.msra.mxu0 %v1307
    %1334 = vmatpush.msra.mxu0 %v1306
    %1335 = vmatpush.msra.mxu0 %v1305
    %1336 = vmatpush.msra.mxu0 %v1304
    %1337 = vmatpush.msra.mxu0 %v1303
    %1338 = vmatpush.msra.mxu0 %v1302
    %1339 = vmatmul.f32.gmra.mxu0 %v1209
    %v1340 = vpop.f32.mrf.mxu0
    %v1341 = vadd.f32 %v1321, %v1340
    %1342 = vmatmul.f32.gmra.mxu0 %v1210
    %v1343 = vpop.f32.mrf.mxu0
    %v1344 = vadd.f32 %v1321, %v1343
    %1345 = vdwg.mxu0
    %1346 = vst.msk [vmem:[#allocation2] sm:$0xff] %vm347, %v1251
    %1347 = vst.msk [vmem:[#allocation2 + $0x8] sm:$0xff] %vm347, %v1254
    %1348 = vst.msk [vmem:[#allocation3] sm:$0xff] %vm347, %v1296
    %1349 = vst.msk [vmem:[#allocation3 + $0x8] sm:$0xff] %vm347, %v1299
    %1350 = vst.msk [vmem:[#allocation4] sm:$0xff] %vm347, %v1341
    %1351 = vst.msk [vmem:[#allocation4 + $0x8] sm:$0xff] %vm347, %v1344
    %1354 = vrot.lane.b32.xlu0 %v1251, 96
    %v1355 = vpop.permute.xlu0 %1354
    %1356 = vrot.lane.b32.xlu0 %v1254, 96
    %v1357 = vpop.permute.xlu0 %1356
    %1360 = vst.msk [vmem:[%s362] sm:$0xff] %vm347, %v1355
    %1361 = vst.msk [vmem:[%s362 + $0x8] sm:$0xff] %vm347, %v1357
    %1364 = vrot.lane.b32.xlu0 %v1296, 96
    %v1365 = vpop.permute.xlu0 %1364
    %1366 = vrot.lane.b32.xlu0 %v1299, 96
    %v1367 = vpop.permute.xlu0 %1366
    %1370 = vst.msk [vmem:[%s373] sm:$0xff] %vm347, %v1365
    %1371 = vst.msk [vmem:[%s373 + $0x8] sm:$0xff] %vm347, %v1367
    %1374 = vrot.lane.b32.xlu0 %v1341, 96
    %v1375 = vpop.permute.xlu0 %1374
    %1376 = vrot.lane.b32.xlu0 %v1344, 96
    %v1377 = vpop.permute.xlu0 %1376
    %1380 = vst.msk [vmem:[%s384] sm:$0xff] %vm347, %v1375
    %1381 = vst.msk [vmem:[%s384 + $0x8] sm:$0xff] %vm347, %v1377
    %1382 = vrot.lane.b32.xlu0 %v1251, 64
    %v1383 = vpop.permute.xlu0 %1382
    %1384 = vrot.lane.b32.xlu0 %v1254, 64
    %v1385 = vpop.permute.xlu0 %1384
    %1388 = vst.msk [vmem:[%s393] sm:$0xff] %vm347, %v1383
    %1389 = vst.msk [vmem:[%s393 + $0x8] sm:$0xff] %vm347, %v1385
    %1390 = vrot.lane.b32.xlu0 %v1296, 64
    %v1391 = vpop.permute.xlu0 %1390
    %1392 = vrot.lane.b32.xlu0 %v1299, 64
    %v1393 = vpop.permute.xlu0 %1392
    %1396 = vst.msk [vmem:[%s402] sm:$0xff] %vm347, %v1391
    %1397 = vst.msk [vmem:[%s402 + $0x8] sm:$0xff] %vm347, %v1393
    %1398 = vrot.lane.b32.xlu0 %v1341, 64
    %v1399 = vpop.permute.xlu0 %1398
    %1400 = vrot.lane.b32.xlu0 %v1344, 64
    %v1401 = vpop.permute.xlu0 %1400
    %1404 = vst.msk [vmem:[%s411] sm:$0xff] %vm347, %v1399
    %1405 = vst.msk [vmem:[%s411 + $0x8] sm:$0xff] %vm347, %v1401
    %1406 = vrot.lane.b32.xlu0 %v1251, 32
    %v1407 = vpop.permute.xlu0 %1406
    %1408 = vrot.lane.b32.xlu0 %v1254, 32
    %v1409 = vpop.permute.xlu0 %1408
    %1412 = vst.msk [vmem:[%s420] sm:$0xff] %vm347, %v1407
    %1413 = vst.msk [vmem:[%s420 + $0x8] sm:$0xff] %vm347, %v1409
    %1414 = vrot.lane.b32.xlu0 %v1296, 32
    %v1415 = vpop.permute.xlu0 %1414
    %1416 = vrot.lane.b32.xlu0 %v1299, 32
    %v1417 = vpop.permute.xlu0 %1416
    %1420 = vst.msk [vmem:[%s429] sm:$0xff] %vm347, %v1415
    %1421 = vst.msk [vmem:[%s429 + $0x8] sm:$0xff] %vm347, %v1417
    %1422 = vrot.lane.b32.xlu0 %v1341, 32
    %v1423 = vpop.permute.xlu0 %1422
    %1424 = vrot.lane.b32.xlu0 %v1344, 32
    %v1425 = vpop.permute.xlu0 %1424
    %1428 = vst.msk [vmem:[%s438] sm:$0xff] %vm347, %v1423
    %1429 = vst.msk [vmem:[%s438 + $0x8] sm:$0xff] %vm347, %v1425
    %v1430 = vld [vmem:[#allocation2] sm:$0xff]
    %v1431 = vld [vmem:[#allocation2 + $0x8] sm:$0xff]
    %v1432 = vld [vmem:[#allocation2 + $0x10] sm:$0xff]
    %v1433 = vld [vmem:[#allocation2 + $0x18] sm:$0xff]
    %v1434 = vld [vmem:[#allocation2 + $0x20] sm:$0xff]
    %v1435 = vld [vmem:[#allocation2 + $0x28] sm:$0xff]
    %v1436 = vld [vmem:[#allocation2 + $0x30] sm:$0xff]
    %v1437 = vld [vmem:[#allocation2 + $0x38] sm:$0xff]
    %v1438 = vld [vmem:[#allocation3] sm:$0xff]
    %v1439 = vld [vmem:[#allocation3 + $0x8] sm:$0xff]
    %v1440 = vld [vmem:[#allocation3 + $0x10] sm:$0xff]
    %v1441 = vld [vmem:[#allocation3 + $0x18] sm:$0xff]
    %v1442 = vld [vmem:[#allocation3 + $0x20] sm:$0xff]
    %v1443 = vld [vmem:[#allocation3 + $0x28] sm:$0xff]
    %v1444 = vld [vmem:[#allocation3 + $0x30] sm:$0xff]
    %v1445 = vld [vmem:[#allocation3 + $0x38] sm:$0xff]
    %v1446 = vld [vmem:[#allocation4] sm:$0xff]
    %v1447 = vld [vmem:[#allocation4 + $0x8] sm:$0xff]
    %v1448 = vld [vmem:[#allocation4 + $0x10] sm:$0xff]
    %v1449 = vld [vmem:[#allocation4 + $0x18] sm:$0xff]
    %v1450 = vld [vmem:[#allocation4 + $0x20] sm:$0xff]
    %v1451 = vld [vmem:[#allocation4 + $0x28] sm:$0xff]
    %v1452 = vld [vmem:[#allocation4 + $0x30] sm:$0xff]
    %v1453 = vld [vmem:[#allocation4 + $0x38] sm:$0xff]
    %v1455 = vsel %vm347, %v1430, 0
    %v1458 = vsel %vm347, %v1431, 0
    %v1461 = vsel %vm347, %v1438, 0
    %v1464 = vsel %vm347, %v1439, 0
    %1466 = vmatpush.xpose.msra.mxu0 0.0
    %1467 = vmatpush.xpose.msra.mxu0 0.0
    %1468 = vmatpush.xpose.msra.mxu0 0.0
    %1469 = vmatpush.xpose.msra.mxu0 0.0
    %1470 = vmatpush.xpose.msra.mxu0 0.0
    %1471 = vmatpush.xpose.msra.mxu0 0.0
    %1472 = vmatpush.xpose.msra.mxu0 0.0
    %1473 = vmatpush.xpose.msra.mxu0 0.0
    %1474 = vmatpush.xpose.msra.mxu0 0.0
    %1475 = vmatpush.xpose.msra.mxu0 0.0
    %1476 = vmatpush.xpose.msra.mxu0 0.0
    %1477 = vmatpush.xpose.msra.mxu0 0.0
    %1478 = vmatpush.xpose.msra.mxu0 0.0
    %1479 = vmatpush.xpose.msra.mxu0 0.0
    %1480 = vmatpush.xpose.msra.mxu0 %v1464
    %1481 = vmatpush.xpose.msra.mxu0 %v1461
    %1482 = vmatmul.f32.gmra.mxu0 %v1455
    %v1483 = vpop.f32.mrf.mxu0
    %v1484 = vadd.f32 0.0, %v1483
    %1485 = vmatmul.f32.gmra.mxu0 %v1458
    %v1486 = vpop.f32.mrf.mxu0
    %v1487 = vadd.f32 0.0, %v1486
    %1488 = vdwg.mxu0
    %v1490 = vsel %vm347, %v1432, 0
    %v1493 = vsel %vm347, %v1433, 0
    %v1496 = vsel %vm347, %v1440, 0
    %v1499 = vsel %vm347, %v1441, 0
    %1501 = vmatpush.xpose.msra.mxu0 0.0
    %1502 = vmatpush.xpose.msra.mxu0 0.0
    %1503 = vmatpush.xpose.msra.mxu0 0.0
    %1504 = vmatpush.xpose.msra.mxu0 0.0
    %1505 = vmatpush.xpose.msra.mxu0 0.0
    %1506 = vmatpush.xpose.msra.mxu0 0.0
    %1507 = vmatpush.xpose.msra.mxu0 0.0
    %1508 = vmatpush.xpose.msra.mxu0 0.0
    %1509 = vmatpush.xpose.msra.mxu0 0.0
    %1510 = vmatpush.xpose.msra.mxu0 0.0
    %1511 = vmatpush.xpose.msra.mxu0 0.0
    %1512 = vmatpush.xpose.msra.mxu0 0.0
    %1513 = vmatpush.xpose.msra.mxu0 0.0
    %1514 = vmatpush.xpose.msra.mxu0 0.0
    %1515 = vmatpush.xpose.msra.mxu0 %v1499
    %1516 = vmatpush.xpose.msra.mxu0 %v1496
    %1517 = vmatmul.f32.gmra.mxu0 %v1490
    %v1518 = vpop.f32.mrf.mxu0
    %v1519 = vadd.f32 0.0, %v1518
    %1520 = vmatmul.f32.gmra.mxu0 %v1493
    %v1521 = vpop.f32.mrf.mxu0
    %v1522 = vadd.f32 0.0, %v1521
    %1523 = vdwg.mxu0
    %v1525 = vsel %vm347, %v1434, 0
    %v1528 = vsel %vm347, %v1435, 0
    %v1531 = vsel %vm347, %v1442, 0
    %v1534 = vsel %vm347, %v1443, 0
    %1536 = vmatpush.xpose.msra.mxu0 0.0
    %1537 = vmatpush.xpose.msra.mxu0 0.0
    %1538 = vmatpush.xpose.msra.mxu0 0.0
    %1539 = vmatpush.xpose.msra.mxu0 0.0
    %1540 = vmatpush.xpose.msra.mxu0 0.0
    %1541 = vmatpush.xpose.msra.mxu0 0.0
    %1542 = vmatpush.xpose.msra.mxu0 0.0
    %1543 = vmatpush.xpose.msra.mxu0 0.0
    %1544 = vmatpush.xpose.msra.mxu0 0.0
    %1545 = vmatpush.xpose.msra.mxu0 0.0
    %1546 = vmatpush.xpose.msra.mxu0 0.0
    %1547 = vmatpush.xpose.msra.mxu0 0.0
    %1548 = vmatpush.xpose.msra.mxu0 0.0
    %1549 = vmatpush.xpose.msra.mxu0 0.0
    %1550 = vmatpush.xpose.msra.mxu0 %v1534
    %1551 = vmatpush.xpose.msra.mxu0 %v1531
    %1552 = vmatmul.f32.gmra.mxu0 %v1525
    %v1553 = vpop.f32.mrf.mxu0
    %v1554 = vadd.f32 0.0, %v1553
    %1555 = vmatmul.f32.gmra.mxu0 %v1528
    %v1556 = vpop.f32.mrf.mxu0
    %v1557 = vadd.f32 0.0, %v1556
    %1558 = vdwg.mxu0
    %v1560 = vsel %vm347, %v1436, 0
    %v1563 = vsel %vm347, %v1437, 0
    %v1566 = vsel %vm347, %v1444, 0
    %v1569 = vsel %vm347, %v1445, 0
    %1571 = vmatpush.xpose.msra.mxu0 0.0
    %1572 = vmatpush.xpose.msra.mxu0 0.0
    %1573 = vmatpush.xpose.msra.mxu0 0.0
    %1574 = vmatpush.xpose.msra.mxu0 0.0
    %1575 = vmatpush.xpose.msra.mxu0 0.0
    %1576 = vmatpush.xpose.msra.mxu0 0.0
    %1577 = vmatpush.xpose.msra.mxu0 0.0
    %1578 = vmatpush.xpose.msra.mxu0 0.0
    %1579 = vmatpush.xpose.msra.mxu0 0.0
    %1580 = vmatpush.xpose.msra.mxu0 0.0
    %1581 = vmatpush.xpose.msra.mxu0 0.0
    %1582 = vmatpush.xpose.msra.mxu0 0.0
    %1583 = vmatpush.xpose.msra.mxu0 0.0
    %1584 = vmatpush.xpose.msra.mxu0 0.0
    %1585 = vmatpush.xpose.msra.mxu0 %v1569
    %1586 = vmatpush.xpose.msra.mxu0 %v1566
    %1587 = vmatmul.f32.gmra.mxu0 %v1560
    %v1588 = vpop.f32.mrf.mxu0
    %v1589 = vadd.f32 0.0, %v1588
    %1590 = vmatmul.f32.gmra.mxu0 %v1563
    %v1591 = vpop.f32.mrf.mxu0
    %v1592 = vadd.f32 0.0, %v1591
    %1593 = vdwg.mxu0
    %v1594 = vmul.f32 %v1484, 0.17677669
    %v1595 = vmul.f32 %v1487, 0.17677669
    %v1596 = vmul.f32 %v1519, 0.17677669
    %v1597 = vmul.f32 %v1522, 0.17677669
    %v1598 = vmul.f32 %v1554, 0.17677669
    %v1599 = vmul.f32 %v1557, 0.17677669
    %v1600 = vmul.f32 %v1589, 0.17677669
    %v1601 = vmul.f32 %v1592, 0.17677669
    %v1602 = vadd.f32 %v1594, %v149
    %v1603 = vadd.f32 %v1595, %v150
    %v1604 = vadd.f32 %v1596, %v151
    %v1605 = vadd.f32 %v1597, %v152
    %v1606 = vadd.f32 %v1598, %v153
    %v1607 = vadd.f32 %v1599, %v154
    %v1608 = vadd.f32 %v1600, %v155
    %v1609 = vadd.f32 %v1601, %v156
    %v1610 = vsel %vm621, %v1602, -inf
    %1611 = vmax.xlane.f32.xlu0 %v1610
    %v1612 = vpop.xlane.xlu0 %1611
    %v1613 = vsel %vm621, %v1603, -inf
    %1614 = vmax.xlane.f32.xlu0 %v1613
    %v1615 = vpop.xlane.xlu0 %1614
    %v1616 = vsel %vm621, %v1604, -inf
    %1617 = vmax.xlane.f32.xlu0 %v1616
    %v1618 = vpop.xlane.xlu0 %1617
    %v1619 = vsel %vm621, %v1605, -inf
    %1620 = vmax.xlane.f32.xlu0 %v1619
    %v1621 = vpop.xlane.xlu0 %1620
    %v1622 = vsel %vm621, %v1606, -inf
    %1623 = vmax.xlane.f32.xlu0 %v1622
    %v1624 = vpop.xlane.xlu0 %1623
    %v1625 = vsel %vm621, %v1607, -inf
    %1626 = vmax.xlane.f32.xlu0 %v1625
    %v1627 = vpop.xlane.xlu0 %1626
    %v1628 = vsel %vm621, %v1608, -inf
    %1629 = vmax.xlane.f32.xlu0 %v1628
    %v1630 = vpop.xlane.xlu0 %1629
    %v1631 = vsel %vm621, %v1609, -inf
    %1632 = vmax.xlane.f32.xlu0 %v1631
    %v1633 = vpop.xlane.xlu0 %1632
    %v1634 = vsub.f32 %v1602, %v1612
    %v1635 = vsub.f32 %v1603, %v1615
    %v1636 = vsub.f32 %v1604, %v1618
    %v1637 = vsub.f32 %v1605, %v1621
    %v1638 = vsub.f32 %v1606, %v1624
    %v1639 = vsub.f32 %v1607, %v1627
    %v1640 = vsub.f32 %v1608, %v1630
    %v1641 = vsub.f32 %v1609, %v1633
    %v1642 = vmul.f32 %v1634, 1.442695
    %v1643 = vpow.pop %v1642
    %v1644 = vmul.f32 %v1635, 1.442695
    %v1645 = vpow.pop %v1644
    %v1646 = vmul.f32 %v1636, 1.442695
    %v1647 = vpow.pop %v1646
    %v1648 = vmul.f32 %v1637, 1.442695
    %v1649 = vpow.pop %v1648
    %v1650 = vmul.f32 %v1638, 1.442695
    %v1651 = vpow.pop %v1650
    %v1652 = vmul.f32 %v1639, 1.442695
    %v1653 = vpow.pop %v1652
    %v1654 = vmul.f32 %v1640, 1.442695
    %v1655 = vpow.pop %v1654
    %v1656 = vmul.f32 %v1641, 1.442695
    %v1657 = vpow.pop %v1656
    %v1658 = vsel %vm621, %v1643, 0.0
    %1659 = vadd.xlane.f32.xlu0 %v1658
    %v1660 = vpop.xlane.xlu0 %1659
    %v1661 = vsel %vm621, %v1645, 0.0
    %1662 = vadd.xlane.f32.xlu0 %v1661
    %v1663 = vpop.xlane.xlu0 %1662
    %v1664 = vsel %vm621, %v1647, 0.0
    %1665 = vadd.xlane.f32.xlu0 %v1664
    %v1666 = vpop.xlane.xlu0 %1665
    %v1667 = vsel %vm621, %v1649, 0.0
    %1668 = vadd.xlane.f32.xlu0 %v1667
    %v1669 = vpop.xlane.xlu0 %1668
    %v1670 = vsel %vm621, %v1651, 0.0
    %1671 = vadd.xlane.f32.xlu0 %v1670
    %v1672 = vpop.xlane.xlu0 %1671
    %v1673 = vsel %vm621, %v1653, 0.0
    %1674 = vadd.xlane.f32.xlu0 %v1673
    %v1675 = vpop.xlane.xlu0 %1674
    %v1676 = vsel %vm621, %v1655, 0.0
    %1677 = vadd.xlane.f32.xlu0 %v1676
    %v1678 = vpop.xlane.xlu0 %1677
    %v1679 = vsel %vm621, %v1657, 0.0
    %1680 = vadd.xlane.f32.xlu0 %v1679
    %v1681 = vpop.xlane.xlu0 %1680
    %v1682 = vrcp.pop %v1660
    %v1683 = vrcp.pop %v1663
    %v1684 = vrcp.pop %v1666
    %v1685 = vrcp.pop %v1669
    %v1686 = vrcp.pop %v1672
    %v1687 = vrcp.pop %v1675
    %v1688 = vrcp.pop %v1678
    %v1689 = vrcp.pop %v1681
    %v1690 = vmul.f32 %v1643, %v1682
    %v1691 = vmul.f32 %v1645, %v1683
    %v1692 = vmul.f32 %v1647, %v1684
    %v1693 = vmul.f32 %v1649, %v1685
    %v1694 = vmul.f32 %v1651, %v1686
    %v1695 = vmul.f32 %v1653, %v1687
    %v1696 = vmul.f32 %v1655, %v1688
    %v1697 = vmul.f32 %v1657, %v1689
    %v1699 = vsel %vm621, %v1690, 0
    %v1702 = vsel %vm621, %v1691, 0
    %1704 = vmatpush.msra.mxu0 0.0
    %1705 = vmatpush.msra.mxu0 0.0
    %1706 = vmatpush.msra.mxu0 0.0
    %1707 = vmatpush.msra.mxu0 0.0
    %1708 = vmatpush.msra.mxu0 0.0
    %1709 = vmatpush.msra.mxu0 0.0
    %1710 = vmatpush.msra.mxu0 0.0
    %1711 = vmatpush.msra.mxu0 0.0
    %1712 = vmatpush.msra.mxu0 0.0
    %1713 = vmatpush.msra.mxu0 0.0
    %1714 = vmatpush.msra.mxu0 0.0
    %1715 = vmatpush.msra.mxu0 0.0
    %1716 = vmatpush.msra.mxu0 0.0
    %1717 = vmatpush.msra.mxu0 0.0
    %1718 = vmatpush.msra.mxu0 %v1447
    %1719 = vmatpush.msra.mxu0 %v1446
    %1720 = vmatmul.f32.gmra.mxu0 %v1699
    %v1721 = vpop.f32.mrf.mxu0
    %v1722 = vadd.f32 0.0, %v1721
    %1723 = vmatmul.f32.gmra.mxu0 %v1702
    %v1724 = vpop.f32.mrf.mxu0
    %v1725 = vadd.f32 0.0, %v1724
    %1726 = vdwg.mxu0
    %v1728 = vsel %vm621, %v1692, 0
    %v1731 = vsel %vm621, %v1693, 0
    %1733 = vmatpush.msra.mxu0 0.0
    %1734 = vmatpush.msra.mxu0 0.0
    %1735 = vmatpush.msra.mxu0 0.0
    %1736 = vmatpush.msra.mxu0 0.0
    %1737 = vmatpush.msra.mxu0 0.0
    %1738 = vmatpush.msra.mxu0 0.0
    %1739 = vmatpush.msra.mxu0 0.0
    %1740 = vmatpush.msra.mxu0 0.0
    %1741 = vmatpush.msra.mxu0 0.0
    %1742 = vmatpush.msra.mxu0 0.0
    %1743 = vmatpush.msra.mxu0 0.0
    %1744 = vmatpush.msra.mxu0 0.0
    %1745 = vmatpush.msra.mxu0 0.0
    %1746 = vmatpush.msra.mxu0 0.0
    %1747 = vmatpush.msra.mxu0 %v1449
    %1748 = vmatpush.msra.mxu0 %v1448
    %1749 = vmatmul.f32.gmra.mxu0 %v1728
    %v1750 = vpop.f32.mrf.mxu0
    %v1751 = vadd.f32 0.0, %v1750
    %1752 = vmatmul.f32.gmra.mxu0 %v1731
    %v1753 = vpop.f32.mrf.mxu0
    %v1754 = vadd.f32 0.0, %v1753
    %1755 = vdwg.mxu0
    %v1757 = vsel %vm621, %v1694, 0
    %v1760 = vsel %vm621, %v1695, 0
    %1762 = vmatpush.msra.mxu0 0.0
    %1763 = vmatpush.msra.mxu0 0.0
    %1764 = vmatpush.msra.mxu0 0.0
    %1765 = vmatpush.msra.mxu0 0.0
    %1766 = vmatpush.msra.mxu0 0.0
    %1767 = vmatpush.msra.mxu0 0.0
    %1768 = vmatpush.msra.mxu0 0.0
    %1769 = vmatpush.msra.mxu0 0.0
    %1770 = vmatpush.msra.mxu0 0.0
    %1771 = vmatpush.msra.mxu0 0.0
    %1772 = vmatpush.msra.mxu0 0.0
    %1773 = vmatpush.msra.mxu0 0.0
    %1774 = vmatpush.msra.mxu0 0.0
    %1775 = vmatpush.msra.mxu0 0.0
    %1776 = vmatpush.msra.mxu0 %v1451
    %1777 = vmatpush.msra.mxu0 %v1450
    %1778 = vmatmul.f32.gmra.mxu0 %v1757
    %v1779 = vpop.f32.mrf.mxu0
    %v1780 = vadd.f32 0.0, %v1779
    %1781 = vmatmul.f32.gmra.mxu0 %v1760
    %v1782 = vpop.f32.mrf.mxu0
    %v1783 = vadd.f32 0.0, %v1782
    %1784 = vdwg.mxu0
    %v1786 = vsel %vm621, %v1696, 0
    %v1789 = vsel %vm621, %v1697, 0
    %1791 = vmatpush.msra.mxu0 0.0
    %1792 = vmatpush.msra.mxu0 0.0
    %1793 = vmatpush.msra.mxu0 0.0
    %1794 = vmatpush.msra.mxu0 0.0
    %1795 = vmatpush.msra.mxu0 0.0
    %1796 = vmatpush.msra.mxu0 0.0
    %1797 = vmatpush.msra.mxu0 0.0
    %1798 = vmatpush.msra.mxu0 0.0
    %1799 = vmatpush.msra.mxu0 0.0
    %1800 = vmatpush.msra.mxu0 0.0
    %1801 = vmatpush.msra.mxu0 0.0
    %1802 = vmatpush.msra.mxu0 0.0
    %1803 = vmatpush.msra.mxu0 0.0
    %1804 = vmatpush.msra.mxu0 0.0
    %1805 = vmatpush.msra.mxu0 %v1453
    %1806 = vmatpush.msra.mxu0 %v1452
    %1807 = vmatmul.f32.gmra.mxu0 %v1786
    %v1808 = vpop.f32.mrf.mxu0
    %v1809 = vadd.f32 0.0, %v1808
    %1810 = vmatmul.f32.gmra.mxu0 %v1789
    %v1811 = vpop.f32.mrf.mxu0
    %v1812 = vadd.f32 0.0, %v1811
    %1813 = vdwg.mxu0
    %1816 = vrot.lane.b32.xlu0 %v1751, 32
    %v1817 = vpop.permute.xlu0 %1816
    %1818 = vrot.lane.b32.xlu0 %v1754, 32
    %v1819 = vpop.permute.xlu0 %1818
    %1824 = vrot.lane.b32.xlu0 %v1780, 64
    %v1825 = vpop.permute.xlu0 %1824
    %1826 = vrot.lane.b32.xlu0 %v1783, 64
    %v1827 = vpop.permute.xlu0 %1826
    %1832 = vrot.lane.b32.xlu0 %v1809, 96
    %v1833 = vpop.permute.xlu0 %1832
    %1834 = vrot.lane.b32.xlu0 %v1812, 96
    %v1835 = vpop.permute.xlu0 %1834
    %v1838 = vsel %vm347, %v1722, %v1817
    %v1839 = vsel %vm347, %v1725, %v1819
    %v1840 = vsel %vm852, %v1838, %v1825
    %v1841 = vsel %vm852, %v1839, %v1827
    %v1842 = vsel %vm855, %v1840, %v1833
    %v1843 = vsel %vm855, %v1841, %v1835
    %s1844 = scalar_lea.vmem [#allocation9], 128
    %v1845 = vld [vmem:[%s1844] sm:$0xff]
    %v1846 = vld [vmem:[%s1844 + $0x8] sm:$0xff]
    %v1847 = vld [vmem:[%s1844 + $0x10] sm:$0xff]
    %v1848 = vld [vmem:[%s1844 + $0x18] sm:$0xff]
    %v1849 = vld [vmem:[%s1844 + $0x20] sm:$0xff]
    %v1850 = vld [vmem:[%s1844 + $0x28] sm:$0xff]
    %v1851 = vld [vmem:[%s1844 + $0x30] sm:$0xff]
    %v1852 = vld [vmem:[%s1844 + $0x38] sm:$0xff]
    %v1853 = vld [vmem:[%s1844 + $0x40] sm:$0xff]
    %v1854 = vld [vmem:[%s1844 + $0x48] sm:$0xff]
    %v1855 = vld [vmem:[%s1844 + $0x50] sm:$0xff]
    %v1856 = vld [vmem:[%s1844 + $0x58] sm:$0xff]
    %v1857 = vld [vmem:[%s1844 + $0x60] sm:$0xff]
    %v1858 = vld [vmem:[%s1844 + $0x68] sm:$0xff]
    %v1859 = vld [vmem:[%s1844 + $0x70] sm:$0xff]
    %v1860 = vld [vmem:[%s1844 + $0x78] sm:$0xff]
    %s1861 = scalar_lea.vmem %s11, 1
    %v1862 = vld [vmem:[%s1861] sm:$0x1]
    %v1864 = vperm.slane %v1862, 0
    %1866 = vmatpush.msra.mxu0 %v1860
    %1867 = vmatpush.msra.mxu0 %v1859
    %1868 = vmatpush.msra.mxu0 %v1858
    %1869 = vmatpush.msra.mxu0 %v1857
    %1870 = vmatpush.msra.mxu0 %v1856
    %1871 = vmatpush.msra.mxu0 %v1855
    %1872 = vmatpush.msra.mxu0 %v1854
    %1873 = vmatpush.msra.mxu0 %v1853
    %1874 = vmatpush.msra.mxu0 %v1852
    %1875 = vmatpush.msra.mxu0 %v1851
    %1876 = vmatpush.msra.mxu0 %v1850
    %1877 = vmatpush.msra.mxu0 %v1849
    %1878 = vmatpush.msra.mxu0 %v1848
    %1879 = vmatpush.msra.mxu0 %v1847
    %1880 = vmatpush.msra.mxu0 %v1846
    %1881 = vmatpush.msra.mxu0 %v1845
    %1882 = vmatmul.f32.gmra.mxu0 %v1842
    %v1883 = vpop.f32.mrf.mxu0
    %v1884 = vadd.f32 %v1864, %v1883
    %1885 = vmatmul.f32.gmra.mxu0 %v1843
    %v1886 = vpop.f32.mrf.mxu0
    %v1887 = vadd.f32 %v1864, %v1886
    %1888 = vdwg.mxu0
    %v1889 = vadd.f32 %v1209, %v1884
    %v1890 = vadd.f32 %v1210, %v1887
    %s1891 = scalar_lea.vmem %s12, 1
    %v1892 = vld [vmem:[%s1891] sm:$0x1]
    %s1893 = scalar_lea.vmem %s13, 1
    %v1894 = vld [vmem:[%s1893] sm:$0x1]
    %1895 = vadd.xlane.f32.xlu0 %v1889
    %v1896 = vpop.xlane.xlu0 %1895
    %1897 = vadd.xlane.f32.xlu0 %v1890
    %v1898 = vpop.xlane.xlu0 %1897
    %v1899 = vmul.f32 %v1896, %v171
    %v1900 = vmul.f32 %v1898, %v171
    %v1901 = vsub.f32 %v1889, %v1899
    %v1902 = vsub.f32 %v1890, %v1900
    %v1903 = vmul.f32 %v1901, %v1901
    %v1904 = vmul.f32 %v1902, %v1902
    %1905 = vadd.xlane.f32.xlu0 %v1903
    %v1906 = vpop.xlane.xlu0 %1905
    %1907 = vadd.xlane.f32.xlu0 %v1904
    %v1908 = vpop.xlane.xlu0 %1907
    %v1909 = vmul.f32 %v1906, %v171
    %v1910 = vmul.f32 %v1908, %v171
    %v1911 = vadd.f32 %v1909, 1e-05
    %v1912 = vadd.f32 %v1910, 1e-05
    %v1913 = vrsqrt.pop %v1911
    %v1914 = vmul.f32 %v1913, %v1911
    %v1915 = vmul.f32 %v1914, %v1913
    %v1916 = vmul.f32 0.5, %v1915
    %v1917 = vsub.f32 1.5, %v1916
    %v1918 = vmul.f32 %v1913, %v1917
    %vm1919 = vweird.f32 %v1911
    %vm1920 = vweird.f32 %v1913
    %vm1921 = vmor %vm1919, %vm1920
    %v1922 = vsel %vm1921, %v1913, %v1918
    %v1923 = vrsqrt.pop %v1912
    %v1924 = vmul.f32 %v1923, %v1912
    %v1925 = vmul.f32 %v1924, %v1923
    %v1926 = vmul.f32 0.5, %v1925
    %v1927 = vsub.f32 1.5, %v1926
    %v1928 = vmul.f32 %v1923, %v1927
    %vm1929 = vweird.f32 %v1912
    %vm1930 = vweird.f32 %v1923
    %vm1931 = vmor %vm1929, %vm1930
    %v1932 = vsel %vm1931, %v1923, %v1928
    %v1933 = vmul.f32 %v1901, %v1922
    %v1934 = vmul.f32 %v1902, %v1932
    %v1936 = vperm.slane %v1892, 0
    %v1938 = vmul.f32 %v1933, %v1936
    %v1939 = vmul.f32 %v1934, %v1936
    %v1941 = vperm.slane %v1894, 0
    %v1943 = vadd.f32 %v1938, %v1941
    %v1944 = vadd.f32 %v1939, %v1941
    %s1945 = scalar_lea.vmem [#allocation10], 256
    %v1946 = vld [vmem:[%s1945] sm:$0xff]
    %v1947 = vld [vmem:[%s1945 + $0x8] sm:$0xff]
    %v1948 = vld [vmem:[%s1945 + $0x10] sm:$0xff]
    %v1949 = vld [vmem:[%s1945 + $0x18] sm:$0xff]
    %v1950 = vld [vmem:[%s1945 + $0x20] sm:$0xff]
    %v1951 = vld [vmem:[%s1945 + $0x28] sm:$0xff]
    %v1952 = vld [vmem:[%s1945 + $0x30] sm:$0xff]
    %v1953 = vld [vmem:[%s1945 + $0x38] sm:$0xff]
    %v1954 = vld [vmem:[%s1945 + $0x40] sm:$0xff]
    %v1955 = vld [vmem:[%s1945 + $0x48] sm:$0xff]
    %v1956 = vld [vmem:[%s1945 + $0x50] sm:$0xff]
    %v1957 = vld [vmem:[%s1945 + $0x58] sm:$0xff]
    %v1958 = vld [vmem:[%s1945 + $0x60] sm:$0xff]
    %v1959 = vld [vmem:[%s1945 + $0x68] sm:$0xff]
    %v1960 = vld [vmem:[%s1945 + $0x70] sm:$0xff]
    %v1961 = vld [vmem:[%s1945 + $0x78] sm:$0xff]
    %v1962 = vld [vmem:[%s1945 + $0x80] sm:$0xff]
    %v1963 = vld [vmem:[%s1945 + $0x88] sm:$0xff]
    %v1964 = vld [vmem:[%s1945 + $0x90] sm:$0xff]
    %v1965 = vld [vmem:[%s1945 + $0x98] sm:$0xff]
    %v1966 = vld [vmem:[%s1945 + $0xa0] sm:$0xff]
    %v1967 = vld [vmem:[%s1945 + $0xa8] sm:$0xff]
    %v1968 = vld [vmem:[%s1945 + $0xb0] sm:$0xff]
    %v1969 = vld [vmem:[%s1945 + $0xb8] sm:$0xff]
    %v1970 = vld [vmem:[%s1945 + $0xc0] sm:$0xff]
    %v1971 = vld [vmem:[%s1945 + $0xc8] sm:$0xff]
    %v1972 = vld [vmem:[%s1945 + $0xd0] sm:$0xff]
    %v1973 = vld [vmem:[%s1945 + $0xd8] sm:$0xff]
    %v1974 = vld [vmem:[%s1945 + $0xe0] sm:$0xff]
    %v1975 = vld [vmem:[%s1945 + $0xe8] sm:$0xff]
    %v1976 = vld [vmem:[%s1945 + $0xf0] sm:$0xff]
    %v1977 = vld [vmem:[%s1945 + $0xf8] sm:$0xff]
    %s1978 = scalar_lea.vmem %s15, 2
    %v1979 = vld [vmem:[%s1978] sm:$0x3]
    %v1981 = vperm.slane %v1979, 0
    %v1982 = vperm.slane %v1979, 1
    %1985 = vmatpush.msra.mxu0 %v1976
    %1986 = vmatpush.msra.mxu0 %v1974
    %1987 = vmatpush.msra.mxu0 %v1972
    %1988 = vmatpush.msra.mxu0 %v1970
    %1989 = vmatpush.msra.mxu0 %v1968
    %1990 = vmatpush.msra.mxu0 %v1966
    %1991 = vmatpush.msra.mxu0 %v1964
    %1992 = vmatpush.msra.mxu0 %v1962
    %1993 = vmatpush.msra.mxu0 %v1960
    %1994 = vmatpush.msra.mxu0 %v1958
    %1995 = vmatpush.msra.mxu0 %v1956
    %1996 = vmatpush.msra.mxu0 %v1954
    %1997 = vmatpush.msra.mxu0 %v1952
    %1998 = vmatpush.msra.mxu0 %v1950
    %1999 = vmatpush.msra.mxu0 %v1948
    %2000 = vmatpush.msra.mxu0 %v1946
    %2001 = vmatmul.f32.gmra.mxu0 %v1943
    %v2002 = vpop.f32.mrf.mxu0
    %v2003 = vadd.f32 %v1981, %v2002
    %2004 = vmatmul.f32.gmra.mxu0 %v1944
    %v2005 = vpop.f32.mrf.mxu0
    %v2006 = vadd.f32 %v1981, %v2005
    %2007 = vdwg.mxu0
    %2008 = vmatpush.msra.mxu0 %v1977
    %2009 = vmatpush.msra.mxu0 %v1975
    %2010 = vmatpush.msra.mxu0 %v1973
    %2011 = vmatpush.msra.mxu0 %v1971
    %2012 = vmatpush.msra.mxu0 %v1969
    %2013 = vmatpush.msra.mxu0 %v1967
    %2014 = vmatpush.msra.mxu0 %v1965
    %2015 = vmatpush.msra.mxu0 %v1963
    %2016 = vmatpush.msra.mxu0 %v1961
    %2017 = vmatpush.msra.mxu0 %v1959
    %2018 = vmatpush.msra.mxu0 %v1957
    %2019 = vmatpush.msra.mxu0 %v1955
    %2020 = vmatpush.msra.mxu0 %v1953
    %2021 = vmatpush.msra.mxu0 %v1951
    %2022 = vmatpush.msra.mxu0 %v1949
    %2023 = vmatpush.msra.mxu0 %v1947
    %2024 = vmatmul.f32.gmra.mxu0 %v1943
    %v2025 = vpop.f32.mrf.mxu0
    %v2026 = vadd.f32 %v1982, %v2025
    %2027 = vmatmul.f32.gmra.mxu0 %v1944
    %v2028 = vpop.f32.mrf.mxu0
    %v2029 = vadd.f32 %v1982, %v2028
    %2030 = vdwg.mxu0
    %v2031 = vmul.f32 %v2003, 0.5
    %v2032 = vmul.f32 %v2026, 0.5
    %v2033 = vmul.f32 %v2006, 0.5
    %v2034 = vmul.f32 %v2029, 0.5
    %v2035 = vmul.f32 %v2003, 0.044715
    %v2036 = vmul.f32 %v2026, 0.044715
    %v2037 = vmul.f32 %v2006, 0.044715
    %v2038 = vmul.f32 %v2029, 0.044715
    %v2039 = vmul.f32 %v2035, %v2003
    %v2040 = vmul.f32 %v2036, %v2026
    %v2041 = vmul.f32 %v2037, %v2006
    %v2042 = vmul.f32 %v2038, %v2029
    %v2043 = vmul.f32 %v2039, %v2003
    %v2044 = vmul.f32 %v2040, %v2026
    %v2045 = vmul.f32 %v2041, %v2006
    %v2046 = vmul.f32 %v2042, %v2029
    %v2047 = vadd.f32 %v2003, %v2043
    %v2048 = vadd.f32 %v2026, %v2044
    %v2049 = vadd.f32 %v2006, %v2045
    %v2050 = vadd.f32 %v2029, %v2046
    %v2051 = vmul.f32 %v2047, 0.7978846
    %v2052 = vmul.f32 %v2048, 0.7978846
    %v2053 = vmul.f32 %v2049, 0.7978846
    %v2054 = vmul.f32 %v2050, 0.7978846
    %v2055 = vtanh.pop %v2051
    %v2056 = vtanh.pop %v2052
    %v2057 = vtanh.pop %v2053
    %v2058 = vtanh.pop %v2054
    %v2059 = vadd.f32 %v2055, 1.0
    %v2060 = vadd.f32 %v2056, 1.0
    %v2061 = vadd.f32 %v2057, 1.0
    %v2062 = vadd.f32 %v2058, 1.0
    %v2063 = vmul.f32 %v2031, %v2059
    %v2064 = vmul.f32 %v2032, %v2060
    %v2065 = vmul.f32 %v2033, %v2061
    %v2066 = vmul.f32 %v2034, %v2062
    %s2067 = scalar_lea.vmem [#allocation12], 256
    %v2068 = vld [vmem:[%s2067] sm:$0xff]
    %v2069 = vld [vmem:[%s2067 + $0x8] sm:$0xff]
    %v2070 = vld [vmem:[%s2067 + $0x10] sm:$0xff]
    %v2071 = vld [vmem:[%s2067 + $0x18] sm:$0xff]
    %v2072 = vld [vmem:[%s2067 + $0x20] sm:$0xff]
    %v2073 = vld [vmem:[%s2067 + $0x28] sm:$0xff]
    %v2074 = vld [vmem:[%s2067 + $0x30] sm:$0xff]
    %v2075 = vld [vmem:[%s2067 + $0x38] sm:$0xff]
    %v2076 = vld [vmem:[%s2067 + $0x40] sm:$0xff]
    %v2077 = vld [vmem:[%s2067 + $0x48] sm:$0xff]
    %v2078 = vld [vmem:[%s2067 + $0x50] sm:$0xff]
    %v2079 = vld [vmem:[%s2067 + $0x58] sm:$0xff]
    %v2080 = vld [vmem:[%s2067 + $0x60] sm:$0xff]
    %v2081 = vld [vmem:[%s2067 + $0x68] sm:$0xff]
    %v2082 = vld [vmem:[%s2067 + $0x70] sm:$0xff]
    %v2083 = vld [vmem:[%s2067 + $0x78] sm:$0xff]
    %v2084 = vld [vmem:[%s2067 + $0x80] sm:$0xff]
    %v2085 = vld [vmem:[%s2067 + $0x88] sm:$0xff]
    %v2086 = vld [vmem:[%s2067 + $0x90] sm:$0xff]
    %v2087 = vld [vmem:[%s2067 + $0x98] sm:$0xff]
    %v2088 = vld [vmem:[%s2067 + $0xa0] sm:$0xff]
    %v2089 = vld [vmem:[%s2067 + $0xa8] sm:$0xff]
    %v2090 = vld [vmem:[%s2067 + $0xb0] sm:$0xff]
    %v2091 = vld [vmem:[%s2067 + $0xb8] sm:$0xff]
    %v2092 = vld [vmem:[%s2067 + $0xc0] sm:$0xff]
    %v2093 = vld [vmem:[%s2067 + $0xc8] sm:$0xff]
    %v2094 = vld [vmem:[%s2067 + $0xd0] sm:$0xff]
    %v2095 = vld [vmem:[%s2067 + $0xd8] sm:$0xff]
    %v2096 = vld [vmem:[%s2067 + $0xe0] sm:$0xff]
    %v2097 = vld [vmem:[%s2067 + $0xe8] sm:$0xff]
    %v2098 = vld [vmem:[%s2067 + $0xf0] sm:$0xff]
    %v2099 = vld [vmem:[%s2067 + $0xf8] sm:$0xff]
    %s2100 = scalar_lea.vmem %s17, 1
    %v2101 = vld [vmem:[%s2100] sm:$0x1]
    %v2103 = vperm.slane %v2101, 0
    %2105 = vmatpush.msra.mxu0 %v2083
    %2106 = vmatpush.msra.mxu0 %v2082
    %2107 = vmatpush.msra.mxu0 %v2081
    %2108 = vmatpush.msra.mxu0 %v2080
    %2109 = vmatpush.msra.mxu0 %v2079
    %2110 = vmatpush.msra.mxu0 %v2078
    %2111 = vmatpush.msra.mxu0 %v2077
    %2112 = vmatpush.msra.mxu0 %v2076
    %2113 = vmatpush.msra.mxu0 %v2075
    %2114 = vmatpush.msra.mxu0 %v2074
    %2115 = vmatpush.msra.mxu0 %v2073
    %2116 = vmatpush.msra.mxu0 %v2072
    %2117 = vmatpush.msra.mxu0 %v2071
    %2118 = vmatpush.msra.mxu0 %v2070
    %2119 = vmatpush.msra.mxu0 %v2069
    %2120 = vmatpush.msra.mxu0 %v2068
    %2121 = vmatmul.f32.gmra.mxu0 %v2063
    %v2122 = vpop.f32.mrf.mxu0
    %v2123 = vadd.f32 %v2103, %v2122
    %2124 = vmatmul.f32.gmra.mxu0 %v2065
    %v2125 = vpop.f32.mrf.mxu0
    %v2126 = vadd.f32 %v2103, %v2125
    %2127 = vdwg.mxu0
    %2128 = vmatpush.msra.mxu0 %v2099
    %2129 = vmatpush.msra.mxu0 %v2098
    %2130 = vmatpush.msra.mxu0 %v2097
    %2131 = vmatpush.msra.mxu0 %v2096
    %2132 = vmatpush.msra.mxu0 %v2095
    %2133 = vmatpush.msra.mxu0 %v2094
    %2134 = vmatpush.msra.mxu0 %v2093
    %2135 = vmatpush.msra.mxu0 %v2092
    %2136 = vmatpush.msra.mxu0 %v2091
    %2137 = vmatpush.msra.mxu0 %v2090
    %2138 = vmatpush.msra.mxu0 %v2089
    %2139 = vmatpush.msra.mxu0 %v2088
    %2140 = vmatpush.msra.mxu0 %v2087
    %2141 = vmatpush.msra.mxu0 %v2086
    %2142 = vmatpush.msra.mxu0 %v2085
    %2143 = vmatpush.msra.mxu0 %v2084
    %2144 = vmatmul.f32.gmra.mxu0 %v2064
    %v2145 = vpop.f32.mrf.mxu0
    %v2146 = vadd.f32 %v2123, %v2145
    %2147 = vmatmul.f32.gmra.mxu0 %v2066
    %v2148 = vpop.f32.mrf.mxu0
    %v2149 = vadd.f32 %v2126, %v2148
    %2150 = vdwg.mxu0
    %v2151 = vadd.f32 %v1943, %v2146
    %v2152 = vadd.f32 %v1944, %v2149
    %s2153 = scalar_lea.vmem %s18, 1
    %v2154 = vld [vmem:[%s2153] sm:$0x1]
    %s2155 = scalar_lea.vmem %s19, 1
    %v2156 = vld [vmem:[%s2155] sm:$0x1]
    %2157 = vadd.xlane.f32.xlu0 %v2151
    %v2158 = vpop.xlane.xlu0 %2157
    %2159 = vadd.xlane.f32.xlu0 %v2152
    %v2160 = vpop.xlane.xlu0 %2159
    %v2161 = vmul.f32 %v2158, %v171
    %v2162 = vmul.f32 %v2160, %v171
    %v2163 = vsub.f32 %v2151, %v2161
    %v2164 = vsub.f32 %v2152, %v2162
    %v2165 = vmul.f32 %v2163, %v2163
    %v2166 = vmul.f32 %v2164, %v2164
    %2167 = vadd.xlane.f32.xlu0 %v2165
    %v2168 = vpop.xlane.xlu0 %2167
    %2169 = vadd.xlane.f32.xlu0 %v2166
    %v2170 = vpop.xlane.xlu0 %2169
    %v2171 = vmul.f32 %v2168, %v171
    %v2172 = vmul.f32 %v2170, %v171
    %v2173 = vadd.f32 %v2171, 1e-05
    %v2174 = vadd.f32 %v2172, 1e-05
    %v2175 = vrsqrt.pop %v2173
    %v2176 = vmul.f32 %v2175, %v2173
    %v2177 = vmul.f32 %v2176, %v2175
    %v2178 = vmul.f32 0.5, %v2177
    %v2179 = vsub.f32 1.5, %v2178
    %v2180 = vmul.f32 %v2175, %v2179
    %vm2181 = vweird.f32 %v2173
    %vm2182 = vweird.f32 %v2175
    %vm2183 = vmor %vm2181, %vm2182
    %v2184 = vsel %vm2183, %v2175, %v2180
    %v2185 = vrsqrt.pop %v2174
    %v2186 = vmul.f32 %v2185, %v2174
    %v2187 = vmul.f32 %v2186, %v2185
    %v2188 = vmul.f32 0.5, %v2187
    %v2189 = vsub.f32 1.5, %v2188
    %v2190 = vmul.f32 %v2185, %v2189
    %vm2191 = vweird.f32 %v2174
    %vm2192 = vweird.f32 %v2185
    %vm2193 = vmor %vm2191, %vm2192
    %v2194 = vsel %vm2193, %v2185, %v2190
    %v2195 = vmul.f32 %v2163, %v2184
    %v2196 = vmul.f32 %v2164, %v2194
    %v2198 = vperm.slane %v2154, 0
    %v2200 = vmul.f32 %v2195, %v2198
    %v2201 = vmul.f32 %v2196, %v2198
    %v2203 = vperm.slane %v2156, 0
    %v2205 = vadd.f32 %v2200, %v2203
    %v2206 = vadd.f32 %v2201, %v2203
    %v2207 = vld [vmem:[%s20] sm:$0xff]
    %v2208 = vld [vmem:[%s20 + $0x8] sm:$0xff]
    %v2209 = vld [vmem:[%s20 + $0x10] sm:$0xff]
    %v2210 = vld [vmem:[%s20 + $0x18] sm:$0xff]
    %v2211 = vld [vmem:[%s20 + $0x20] sm:$0xff]
    %v2212 = vld [vmem:[%s20 + $0x28] sm:$0xff]
    %v2213 = vld [vmem:[%s20 + $0x30] sm:$0xff]
    %v2214 = vld [vmem:[%s20 + $0x38] sm:$0xff]
    %v2215 = vld [vmem:[%s20 + $0x40] sm:$0xff]
    %v2216 = vld [vmem:[%s20 + $0x48] sm:$0xff]
    %v2217 = vld [vmem:[%s20 + $0x50] sm:$0xff]
    %v2218 = vld [vmem:[%s20 + $0x58] sm:$0xff]
    %v2219 = vld [vmem:[%s20 + $0x60] sm:$0xff]
    %v2220 = vld [vmem:[%s20 + $0x68] sm:$0xff]
    %v2221 = vld [vmem:[%s20 + $0x70] sm:$0xff]
    %v2222 = vld [vmem:[%s20 + $0x78] sm:$0xff]
    %v2223 = vld [vmem:[%s21] sm:$0x1]
    %v2225 = vperm.slane %v2223, 0
    %2227 = vmatpush.msra.mxu0 %v2222
    %2228 = vmatpush.msra.mxu0 %v2221
    %2229 = vmatpush.msra.mxu0 %v2220
    %2230 = vmatpush.msra.mxu0 %v2219
    %2231 = vmatpush.msra.mxu0 %v2218
    %2232 = vmatpush.msra.mxu0 %v2217
    %2233 = vmatpush.msra.mxu0 %v2216
    %2234 = vmatpush.msra.mxu0 %v2215
    %2235 = vmatpush.msra.mxu0 %v2214
    %2236 = vmatpush.msra.mxu0 %v2213
    %2237 = vmatpush.msra.mxu0 %v2212
    %2238 = vmatpush.msra.mxu0 %v2211
    %2239 = vmatpush.msra.mxu0 %v2210
    %2240 = vmatpush.msra.mxu0 %v2209
    %2241 = vmatpush.msra.mxu0 %v2208
    %2242 = vmatpush.msra.mxu0 %v2207
    %2243 = vmatmul.f32.gmra.mxu0 %v2205
    %v2244 = vpop.f32.mrf.mxu0
    %v2245 = vadd.f32 %v2225, %v2244
    %2246 = vmatmul.f32.gmra.mxu0 %v2206
    %v2247 = vpop.f32.mrf.mxu0
    %v2248 = vadd.f32 %v2225, %v2247
    %2249 = vdwg.mxu0
    %2250 = vst [vmem:[%s22] sm:$0xff] %v2245
    %2251 = vst [vmem:[%s22 + $0x8] sm:$0xff] %v2248
    // Predicated region
    $region110: #{bert_regressor_forward.1} parent=1 // pred_check
      _
    $region111: #{bert_regressor_forward.1} parent=1 // pred_check_branch
      %2253 = sbr.rel (0) target = $region113
    $region112: #{bert_regressor_forward.1} parent=1 // pred_region
      _
    $region113: #{bert_regressor_forward.1} parent=1 // pred_fallthru
      _
    // Predicated region
    $region114: #{bert_regressor_forward.1} parent=1 // pred_check
      _
    $region115: #{bert_regressor_forward.1} parent=1 // pred_check_branch
      %2255 = sbr.rel (0) target = $region117
    $region116: #{bert_regressor_forward.1} parent=1 // pred_region
      _
    $region117: #{bert_regressor_forward.1} parent=1 // pred_fallthru
      _
    %2256 = vsyncpa [#allocation6], 1
    %2257 = vsyncpa [#allocation8], 1
    %2258 = vsyncpa [#allocation11], 1

</llo_original>
